<compile_context>
chip_gen: v6e
topology: v6e:2x2x1
jax: 0.10.0
libtpu: 0.0.40
codegen_flags: <defaults>
</compile_context>

<pallas_src>
import functools

import jax
import jax.numpy as jnp
from jax import lax
from jax.experimental import pallas as pl
from jax.experimental.pallas import tpu as pltpu

LN_EPS = 1e-5


def _round_up(x, m):
    return ((x + m - 1) // m) * m


def _tpu_topology():
    """Best-effort (num TensorCores per device, physical VMEM bytes per core)."""
    num_tc = 1
    vmem_cap = 64 << 20          # conservative default == v7x per-TC VMEM
    try:
        kind = jax.devices()[0].device_kind.lower()
        if ("v7" in kind) or ("v4" in kind) or ("v5p" in kind):
            num_tc = 2           # dual-TensorCore / megacore parts
    except Exception:            # capability probe only
        pass
    try:
        vmem_cap = int(pltpu.get_tpu_info().vmem_capacity_bytes)
    except Exception:            # capability probe only
        pass
    return num_tc, vmem_cap


def _probe_pipeline_mode():
    """True iff this jax exposes BlockSpec(..., pipeline_mode=pl.Buffered(1))."""
    try:
        pl.BlockSpec((8, 128), lambda i: (0, 0), pipeline_mode=pl.Buffered(1))
        return True
    except (AttributeError, TypeError, ValueError):
        return False


_PIPELINE_MODE_OK = _probe_pipeline_mode()


def _switch_expert_kernel(*refs, num_sublayers, expert_id, use_alpha):
    """alpha-gated MoESublayer stack on a (TM, D) token tile.

    refs (use_alpha=True):  x(TM,D), cent_t(D,E), g(L,1,D), beta(L,1,D),
                            w1(L,D,F) bf16, b1(L,1,F), w2(L,F,D) bf16, b2(L,1,D), o(TM,D)
    refs (use_alpha=False): same without cent_t.
    """
    if use_alpha:
        (x_ref, cent_t_ref, g_ref, be_ref,
         w1_ref, b1_ref, w2_ref, b2_ref, o_ref) = refs
    else:
        (x_ref, g_ref, be_ref,
         w1_ref, b1_ref, w2_ref, b2_ref, o_ref) = refs

    x0 = x_ref[...].astype(jnp.float32)

    x = x0
    # L is small & static -> unrolled.  (If L grows large, switch to a
    # per-layer grid axis / streamed weights; see TODO above.)
    for l in range(num_sublayers):
        g = g_ref[l]        # (1, D)
        be = be_ref[l]      # (1, D)
        w1 = w1_ref[l]      # (D, F) bf16
        b1 = b1_ref[l]      # (1, F)
        w2 = w2_ref[l]      # (F, D) bf16
        b2 = b2_ref[l]      # (1, D)

        # LayerNorm over the embedding dim (biased variance, eps=1e-5), f32.
        mu = jnp.mean(x, axis=-1, keepdims=True)
        xc = x - mu
        var = jnp.mean(xc * xc, axis=-1, keepdims=True)
        xn = xc * lax.rsqrt(var + LN_EPS) * g + be

        # ff1 -> relu -> ff2, residual add.  bf16 MXU operands, f32 accumulate.
        h = jnp.dot(xn.astype(jnp.bfloat16), w1,
                    preferred_element_type=jnp.float32) + b1
        h = jnp.maximum(h, 0.0)
        x = x + jnp.dot(h.astype(jnp.bfloat16), w2,
                        preferred_element_type=jnp.float32) + b2

    if not use_alpha:
        # E == 1: softmax over a single expert is identically 1.0 -> the gate
        # is the identity; skip logits/softmax/blend entirely.
        o_ref[...] = x.astype(o_ref.dtype)
    else:
        # alpha = softmax(x0 @ centroids^T)[:, expert_id]; centroids arrive
        # pre-transposed (D, E) so there is no in-kernel relayout.
        cent_t = cent_t_ref[...].astype(jnp.float32)
        logits = jnp.dot(x0, cent_t, preferred_element_type=jnp.float32)
        logits = logits - jnp.max(logits, axis=-1, keepdims=True)
        p = jnp.exp(logits)
        denom = jnp.sum(p, axis=-1, keepdims=True)
        alpha = p[:, expert_id:expert_id + 1] * pl.reciprocal(denom, approx=True)
        # Gate folded as x0 + alpha*(x - x0): one fewer VPU multiply/broadcast.
        o_ref[...] = (x0 + alpha * (x - x0)).astype(o_ref.dtype)


def _const_spec(shape, single_buffer):
    """BlockSpec for a whole-array operand fetched identically every grid step."""
    idx = lambda i, _n=len(shape): (0,) * _n
    if single_buffer and _PIPELINE_MODE_OK:
        # Constant index map -> no re-DMA; Buffered(1) also drops the second
        # (useless) VMEM copy default double-buffering would allocate.
        return pl.BlockSpec(shape, idx, pipeline_mode=pl.Buffered(1))
    return pl.BlockSpec(shape, idx)


def switch_expert_pallas(tokens, centroids, params, *, expert_id=0,
                         token_tile=None):
    """Runs the alpha-gated MoESublayer stack on routed tokens [T, D]."""
    T, D = tokens.shape
    if T == 0:
        return tokens
    ln_g, ln_b, w1, b1, w2, b2 = params
    L, _, F = w1.shape
    E = centroids.shape[0]
    use_alpha = E > 1

    num_tc, vmem_cap = _tpu_topology()

    # Per-generation token tile: large tiles amortize the ~0.35us per-step
    # pipeline overhead on single-TC chips; dual-TC parts need >= num_tc
    # parallel grid steps so every TensorCore gets work.
    if token_tile is None:
        token_tile = 512
    t8 = _round_up(T, 8)
    tile = min(token_tile, t8)
    if num_tc > 1:
        tile = min(tile, _round_up(pl.cdiv(t8, num_tc), 8))
    tile = max(tile, 8)
    Tp = _round_up(T, tile)
    x = tokens if Tp == T else jnp.pad(tokens, ((0, Tp - T), (0, 0)))

    weight_bytes = sum(int(a.size) * a.dtype.itemsize
                       for a in (ln_g, ln_b, w1, b1, w2, b2))
    if use_alpha:
        weight_bytes += int(centroids.size) * centroids.dtype.itemsize
    tile_bytes = tile * D * tokens.dtype.itemsize

    def _vmem_limit(weights_single_buffered):
        wfac = 1 if weights_single_buffered else 2
        # in/out token tiles double-buffered + weights + compiler scratch slack,
        # never exceeding the physical per-core VMEM minus 8 MiB headroom.
        need = 4 * tile_bytes + wfac * weight_bytes + (8 << 20)
        phys_cap = max(16 << 20, vmem_cap - (8 << 20))
        return int(min(phys_cap, max(need, 32 << 20)))

    kernel = functools.partial(_switch_expert_kernel, num_sublayers=L,
                               expert_id=expert_id, use_alpha=use_alpha)

    def _build(single_buffer):
        effective_sb = single_buffer and _PIPELINE_MODE_OK
        in_specs = [pl.BlockSpec((tile, D), lambda i: (i, 0))]        # tokens
        if use_alpha:
            in_specs.append(_const_spec((D, E), single_buffer))       # centroids^T
        in_specs += [
            _const_spec((L, 1, D), single_buffer),                    # ln gamma
            _const_spec((L, 1, D), single_buffer),                    # ln beta
            _const_spec((L, D, F), single_buffer),                    # w1 (bf16)
            _const_spec((L, 1, F), single_buffer),                    # b1
            _const_spec((L, F, D), single_buffer),                    # w2 (bf16)
            _const_spec((L, 1, D), single_buffer),                    # b2
        ]
        return pl.pallas_call(
            kernel,
            out_shape=jax.ShapeDtypeStruct((Tp, D), tokens.dtype),
            grid_spec=pltpu.PrefetchScalarGridSpec(
                num_scalar_prefetch=0,
                grid=(Tp // tile,),
                in_specs=in_specs,
                out_specs=pl.BlockSpec((tile, D), lambda i: (i, 0)),
            ),
            compiler_params=pltpu.CompilerParams(
                dimension_semantics=("parallel",),
                vmem_limit_bytes=_vmem_limit(effective_sb)),
        )

    args = [x]
    if use_alpha:
        # Wrapper-side transpose (free layout plumbing): kernel does x0 @ (D,E)
        # without an in-kernel .T.
        args.append(jnp.transpose(centroids))
    args += [ln_g, ln_b, w1, b1, w2, b2]

    if _PIPELINE_MODE_OK:
        try:
            out = _build(True)(*args)
        except (TypeError, pltpu.LoweringException):
            # Buffered(1) rejected by this jax/Mosaic combination only; any
            # other error propagates.
            out = _build(False)(*args)
    else:
        out = _build(False)(*args)
    return out[:T]


def switch_layer_forward(input_features, expert_centroids, params, *,
                         expert_id=0, capacity_factor=1.0, num_workers=1):
    """SwitchLayer.forward for world_size == 1 (All2All/AllGather == identity)."""
    # TODO(synk): multi-worker routing needs cross-device all_to_all (RDMA).
    assert num_workers == 1, "only the single-worker configuration is runnable"
    D = input_features.shape[-1]
    features = input_features.reshape(-1, D)
    tpe = features.shape[0]

    # greedy_assignment with a single worker: all tokens map to worker 0, the
    # stable sort and its inverse compose to the identity, and All2AllDDM is
    # the identity -> skip argsort / gather / scatter entirely.
    routed = features

    # Capacity clipping (torch: capacity = int(tpe * capacity_factor)); tokens
    # past capacity pass through unprocessed and ungated, as in the reference.
    capacity = int(tpe * capacity_factor)
    n_expert = min(tpe, capacity)
    processed = switch_expert_pallas(routed[:n_expert], expert_centroids,
                                     params, expert_id=expert_id)
    if n_expert < tpe:
        processed = jnp.concatenate([processed, routed[n_expert:]], axis=0)

    balance_loss = 0.0  # inference forward (is_training == False)
    return (processed.reshape(input_features.shape), None, None,
            balance_loss, None)


def switch_expert_ref(tokens, centroids, params, *, expert_id=0):
    """Pure-JAX reference (same bf16 matmul operands, f32 accumulation)."""
    ln_g, ln_b, w1, b1, w2, b2 = params
    x0 = tokens.astype(jnp.float32)
    logits = x0 @ centroids.astype(jnp.float32).T
    alpha = jax.nn.softmax(logits, axis=-1)[:, expert_id:expert_id + 1]
    x = x0
    for l in range(w1.shape[0]):
        mu = jnp.mean(x, axis=-1, keepdims=True)
        xc = x - mu
        var = jnp.mean(xc * xc, axis=-1, keepdims=True)
        xn = xc * lax.rsqrt(var + LN_EPS) * ln_g[l] + ln_b[l]
        h = jnp.maximum(
            jnp.dot(xn.astype(jnp.bfloat16), w1[l],
                    preferred_element_type=jnp.float32) + b1[l], 0.0)
        x = x + jnp.dot(h.astype(jnp.bfloat16), w2[l],
                        preferred_element_type=jnp.float32) + b2[l]
    return alpha * x + (1.0 - alpha) * x0


if __name__ == "__main__":
    # Lane-dense config (D multiple of 128). T=512 -> one 512-token tile on
    # single-TC chips, two 256-token parallel steps on dual-TC parts.
    B, S, D, F, L = 4, 128, 128, 256, 2
    NUM_WORKERS = 1          # single-device / single data-parallel worker
    EXPERT_ID = 0
    CAPACITY_FACTOR = 1.0

    key = jax.random.PRNGKey(0)
    (k_feat, k_cent, k_w1, k_b1, k_w2, k_b2,
     k_cent2, k_tok2) = jax.random.split(key, 8)

    input_features = jax.random.normal(k_feat, (B, S, D), dtype=jnp.float32)
    # Torch uses orthogonal_(gain=0.1); a scaled normal row is equivalent for
    # the single-worker case (softmax over one expert is identically 1).
    expert_centroids = 0.1 * jax.random.normal(
        k_cent, (NUM_WORKERS, D), dtype=jnp.float32)

    # Parameters. Torch __init__: LayerNorm gamma=1, beta=0.  NOTE(synk): torch
    # zeroes ff2.weight at init; a small random init is used here so the second
    # matmul is actually exercised.  w1/w2 are stored bf16 to feed the MXU
    # (intentional numerics change vs. the f32 torch reference).
    ln_g = jnp.ones((L, 1, D), jnp.float32)
    ln_b = jnp.zeros((L, 1, D), jnp.float32)
    w1 = (0.05 * jax.random.normal(k_w1, (L, D, F))).astype(jnp.bfloat16)
    b1 = 0.05 * jax.random.normal(k_b1, (L, 1, F), dtype=jnp.float32)
    w2 = (0.05 * jax.random.normal(k_w2, (L, F, D))).astype(jnp.bfloat16)
    b2 = 0.05 * jax.random.normal(k_b2, (L, 1, D), dtype=jnp.float32)
    params = (ln_g, ln_b, w1, b1, w2, b2)

    # --- Full SwitchLayer forward (single worker -> E == 1 fast path). -------
    out = switch_layer_forward(input_features, expert_centroids, params,
                               expert_id=EXPERT_ID,
                               capacity_factor=CAPACITY_FACTOR,
                               num_workers=NUM_WORKERS)
    result = jax.block_until_ready(out[0])
    assert result.shape == input_features.shape

    ref = switch_expert_ref(input_features.reshape(-1, D), expert_centroids,
                            params, expert_id=EXPERT_ID)
    ref = ref.reshape(input_features.shape).astype(result.dtype)
    err1 = float(jnp.max(jnp.abs(result - ref)))
    assert jnp.allclose(result, ref, atol=2e-3, rtol=2e-3), err1

    # --- Multi-expert (E > 1) gated path of the expert kernel. ---------------
    E2, T2 = 4, 384
    cent2 = 0.1 * jax.random.normal(k_cent2, (E2, D), dtype=jnp.float32)
    tok2 = jax.random.normal(k_tok2, (T2, D), dtype=jnp.float32)
    out2 = jax.block_until_ready(
        switch_expert_pallas(tok2, cent2, params, expert_id=1))
    ref2 = switch_expert_ref(tok2, cent2, params, expert_id=1).astype(out2.dtype)
    err2 = float(jnp.max(jnp.abs(out2 - ref2)))
    # Slightly looser: kernel uses the EUP approximate reciprocal for the
    # softmax denominator.
    assert jnp.allclose(out2, ref2, atol=5e-3, rtol=5e-3), err2

    print("KERNEL_OK")
</pallas_src>

<mosaic_0001>
module attributes {stable_mosaic.version = 11 : i64} {
  func.func @_switch_expert_kernel(%arg0: i32, %arg1: memref<512x128xf32, #tpu.memory_space<vmem>>, %arg2: memref<2x1x128xf32, #tpu.memory_space<vmem>>, %arg3: memref<2x1x128xf32, #tpu.memory_space<vmem>>, %arg4: memref<2x128x256xbf16, #tpu.memory_space<vmem>>, %arg5: memref<2x1x256xf32, #tpu.memory_space<vmem>>, %arg6: memref<2x256x128xbf16, #tpu.memory_space<vmem>>, %arg7: memref<2x1x128xf32, #tpu.memory_space<vmem>>, %arg8: memref<512x128xf32, #tpu.memory_space<vmem>>) attributes {dimension_semantics = [#tpu.dimension_semantics<parallel>], iteration_bounds = array<i64: 1>, scalar_prefetch = 0 : i64, scratch_operands = 0 : i64, tpu.core_type = #tpu.core_type<tc>, window_params = [{transform_indices = @transform_0, window_bounds = array<i64: 512, 128>}, {pipeline_mode = #tpu.pipeline_mode<synchronous>, transform_indices = @transform_1, window_bounds = array<i64: 2, 1, 128>}, {pipeline_mode = #tpu.pipeline_mode<synchronous>, transform_indices = @transform_2, window_bounds = array<i64: 2, 1, 128>}, {pipeline_mode = #tpu.pipeline_mode<synchronous>, transform_indices = @transform_3, window_bounds = array<i64: 2, 128, 256>}, {pipeline_mode = #tpu.pipeline_mode<synchronous>, transform_indices = @transform_4, window_bounds = array<i64: 2, 1, 256>}, {pipeline_mode = #tpu.pipeline_mode<synchronous>, transform_indices = @transform_5, window_bounds = array<i64: 2, 256, 128>}, {pipeline_mode = #tpu.pipeline_mode<synchronous>, transform_indices = @transform_6, window_bounds = array<i64: 2, 1, 128>}, {transform_indices = @transform_7, window_bounds = array<i64: 512, 128>}]} {
    %c0 = arith.constant 0 : index
    %c0_0 = arith.constant 0 : index
    %0 = vector.load %arg1[%c0, %c0_0] : memref<512x128xf32, #tpu.memory_space<vmem>>, vector<512x128xf32>
    %c0_1 = arith.constant 0 : index
    %c0_2 = arith.constant 0 : index
    %c0_3 = arith.constant 0 : index
    %1 = vector.load %arg2[%c0_1, %c0_2, %c0_3] : memref<2x1x128xf32, #tpu.memory_space<vmem>>, vector<1x1x128xf32>
    %2 = vector.shape_cast %1 : vector<1x1x128xf32> to vector<1x128xf32>
    %c0_4 = arith.constant 0 : index
    %c0_5 = arith.constant 0 : index
    %c0_6 = arith.constant 0 : index
    %3 = vector.load %arg3[%c0_4, %c0_5, %c0_6] : memref<2x1x128xf32, #tpu.memory_space<vmem>>, vector<1x1x128xf32>
    %4 = vector.shape_cast %3 : vector<1x1x128xf32> to vector<1x128xf32>
    %c0_7 = arith.constant 0 : index
    %c0_8 = arith.constant 0 : index
    %c0_9 = arith.constant 0 : index
    %5 = vector.load %arg4[%c0_7, %c0_8, %c0_9] : memref<2x128x256xbf16, #tpu.memory_space<vmem>>, vector<1x128x256xbf16>
    %6 = vector.shape_cast %5 : vector<1x128x256xbf16> to vector<128x256xbf16>
    %c0_10 = arith.constant 0 : index
    %c0_11 = arith.constant 0 : index
    %c0_12 = arith.constant 0 : index
    %7 = vector.load %arg5[%c0_10, %c0_11, %c0_12] : memref<2x1x256xf32, #tpu.memory_space<vmem>>, vector<1x1x256xf32>
    %8 = vector.shape_cast %7 : vector<1x1x256xf32> to vector<1x256xf32>
    %c0_13 = arith.constant 0 : index
    %c0_14 = arith.constant 0 : index
    %c0_15 = arith.constant 0 : index
    %9 = vector.load %arg6[%c0_13, %c0_14, %c0_15] : memref<2x256x128xbf16, #tpu.memory_space<vmem>>, vector<1x256x128xbf16>
    %10 = vector.shape_cast %9 : vector<1x256x128xbf16> to vector<256x128xbf16>
    %c0_16 = arith.constant 0 : index
    %c0_17 = arith.constant 0 : index
    %c0_18 = arith.constant 0 : index
    %11 = vector.load %arg7[%c0_16, %c0_17, %c0_18] : memref<2x1x128xf32, #tpu.memory_space<vmem>>, vector<1x1x128xf32>
    %12 = vector.shape_cast %11 : vector<1x1x128xf32> to vector<1x128xf32>
    %cst = arith.constant dense<0.000000e+00> : vector<512xf32>
    %13 = vector.multi_reduction <add>, %0, %cst [1] : vector<512x128xf32> to vector<512xf32>
    %14 = vector.shape_cast %13 : vector<512xf32> to vector<512x1xf32>
    %cst_19 = arith.constant 1.280000e+02 : f32
    %15 = vector.broadcast %cst_19 : f32 to vector<512x1xf32>
    %16 = arith.divf %14, %15 : vector<512x1xf32>
    %17 = vector.broadcast %16 : vector<512x1xf32> to vector<512x128xf32>
    %18 = arith.subf %0, %17 : vector<512x128xf32>
    %19 = arith.mulf %18, %18 : vector<512x128xf32>
    %cst_20 = arith.constant dense<0.000000e+00> : vector<512xf32>
    %20 = vector.multi_reduction <add>, %19, %cst_20 [1] : vector<512x128xf32> to vector<512xf32>
    %21 = vector.shape_cast %20 : vector<512xf32> to vector<512x1xf32>
    %cst_21 = arith.constant 1.280000e+02 : f32
    %22 = vector.broadcast %cst_21 : f32 to vector<512x1xf32>
    %23 = arith.divf %21, %22 : vector<512x1xf32>
    %cst_22 = arith.constant 9.99999974E-6 : f32
    %24 = vector.broadcast %cst_22 : f32 to vector<512x1xf32>
    %25 = arith.addf %23, %24 : vector<512x1xf32>
    %26 = math.rsqrt %25 : vector<512x1xf32>
    %27 = vector.broadcast %26 : vector<512x1xf32> to vector<512x128xf32>
    %28 = arith.mulf %18, %27 : vector<512x128xf32>
    %29 = vector.broadcast %2 : vector<1x128xf32> to vector<512x128xf32>
    %30 = arith.mulf %28, %29 : vector<512x128xf32>
    %31 = vector.broadcast %4 : vector<1x128xf32> to vector<512x128xf32>
    %32 = arith.addf %30, %31 : vector<512x128xf32>
    %33 = arith.truncf %32 : vector<512x128xf32> to vector<512x128xbf16>
    %cst_23 = arith.constant dense<0.000000e+00> : vector<512x256xf32>
    %34 = tpu.matmul %33, %6, %cst_23 {dimension_numbers = #tpu.dot_dimension_numbers<[1], [0], [0], [1], [0, 0, 1, 1], [], []>} : vector<512x128xbf16>, vector<128x256xbf16>, vector<512x256xf32> -> vector<512x256xf32>
    %35 = vector.broadcast %8 : vector<1x256xf32> to vector<512x256xf32>
    %36 = arith.addf %34, %35 : vector<512x256xf32>
    %cst_24 = arith.constant 0.000000e+00 : f32
    %37 = vector.broadcast %cst_24 : f32 to vector<512x256xf32>
    %38 = arith.maximumf %36, %37 : vector<512x256xf32>
    %39 = arith.truncf %38 : vector<512x256xf32> to vector<512x256xbf16>
    %cst_25 = arith.constant dense<0.000000e+00> : vector<512x128xf32>
    %40 = tpu.matmul %39, %10, %cst_25 {dimension_numbers = #tpu.dot_dimension_numbers<[1], [0], [0], [1], [0, 0, 1, 1], [], []>} : vector<512x256xbf16>, vector<256x128xbf16>, vector<512x128xf32> -> vector<512x128xf32>
    %41 = arith.addf %0, %40 : vector<512x128xf32>
    %42 = vector.broadcast %12 : vector<1x128xf32> to vector<512x128xf32>
    %43 = arith.addf %41, %42 : vector<512x128xf32>
    %c1 = arith.constant 1 : index
    %c0_26 = arith.constant 0 : index
    %c0_27 = arith.constant 0 : index
    %44 = vector.load %arg2[%c1, %c0_26, %c0_27] : memref<2x1x128xf32, #tpu.memory_space<vmem>>, vector<1x1x128xf32>
    %45 = vector.shape_cast %44 : vector<1x1x128xf32> to vector<1x128xf32>
    %c1_28 = arith.constant 1 : index
    %c0_29 = arith.constant 0 : index
    %c0_30 = arith.constant 0 : index
    %46 = vector.load %arg3[%c1_28, %c0_29, %c0_30] : memref<2x1x128xf32, #tpu.memory_space<vmem>>, vector<1x1x128xf32>
    %47 = vector.shape_cast %46 : vector<1x1x128xf32> to vector<1x128xf32>
    %c1_31 = arith.constant 1 : index
    %c0_32 = arith.constant 0 : index
    %c0_33 = arith.constant 0 : index
    %48 = vector.load %arg4[%c1_31, %c0_32, %c0_33] : memref<2x128x256xbf16, #tpu.memory_space<vmem>>, vector<1x128x256xbf16>
    %49 = vector.shape_cast %48 : vector<1x128x256xbf16> to vector<128x256xbf16>
    %c1_34 = arith.constant 1 : index
    %c0_35 = arith.constant 0 : index
    %c0_36 = arith.constant 0 : index
    %50 = vector.load %arg5[%c1_34, %c0_35, %c0_36] : memref<2x1x256xf32, #tpu.memory_space<vmem>>, vector<1x1x256xf32>
    %51 = vector.shape_cast %50 : vector<1x1x256xf32> to vector<1x256xf32>
    %c1_37 = arith.constant 1 : index
    %c0_38 = arith.constant 0 : index
    %c0_39 = arith.constant 0 : index
    %52 = vector.load %arg6[%c1_37, %c0_38, %c0_39] : memref<2x256x128xbf16, #tpu.memory_space<vmem>>, vector<1x256x128xbf16>
    %53 = vector.shape_cast %52 : vector<1x256x128xbf16> to vector<256x128xbf16>
    %c1_40 = arith.constant 1 : index
    %c0_41 = arith.constant 0 : index
    %c0_42 = arith.constant 0 : index
    %54 = vector.load %arg7[%c1_40, %c0_41, %c0_42] : memref<2x1x128xf32, #tpu.memory_space<vmem>>, vector<1x1x128xf32>
    %55 = vector.shape_cast %54 : vector<1x1x128xf32> to vector<1x128xf32>
    %cst_43 = arith.constant dense<0.000000e+00> : vector<512xf32>
    %56 = vector.multi_reduction <add>, %43, %cst_43 [1] : vector<512x128xf32> to vector<512xf32>
    %57 = vector.shape_cast %56 : vector<512xf32> to vector<512x1xf32>
    %cst_44 = arith.constant 1.280000e+02 : f32
    %58 = vector.broadcast %cst_44 : f32 to vector<512x1xf32>
    %59 = arith.divf %57, %58 : vector<512x1xf32>
    %60 = vector.broadcast %59 : vector<512x1xf32> to vector<512x128xf32>
    %61 = arith.subf %43, %60 : vector<512x128xf32>
    %62 = arith.mulf %61, %61 : vector<512x128xf32>
    %cst_45 = arith.constant dense<0.000000e+00> : vector<512xf32>
    %63 = vector.multi_reduction <add>, %62, %cst_45 [1] : vector<512x128xf32> to vector<512xf32>
    %64 = vector.shape_cast %63 : vector<512xf32> to vector<512x1xf32>
    %cst_46 = arith.constant 1.280000e+02 : f32
    %65 = vector.broadcast %cst_46 : f32 to vector<512x1xf32>
    %66 = arith.divf %64, %65 : vector<512x1xf32>
    %cst_47 = arith.constant 9.99999974E-6 : f32
    %67 = vector.broadcast %cst_47 : f32 to vector<512x1xf32>
    %68 = arith.addf %66, %67 : vector<512x1xf32>
    %69 = math.rsqrt %68 : vector<512x1xf32>
    %70 = vector.broadcast %69 : vector<512x1xf32> to vector<512x128xf32>
    %71 = arith.mulf %61, %70 : vector<512x128xf32>
    %72 = vector.broadcast %45 : vector<1x128xf32> to vector<512x128xf32>
    %73 = arith.mulf %71, %72 : vector<512x128xf32>
    %74 = vector.broadcast %47 : vector<1x128xf32> to vector<512x128xf32>
    %75 = arith.addf %73, %74 : vector<512x128xf32>
    %76 = arith.truncf %75 : vector<512x128xf32> to vector<512x128xbf16>
    %cst_48 = arith.constant dense<0.000000e+00> : vector<512x256xf32>
    %77 = tpu.matmul %76, %49, %cst_48 {dimension_numbers = #tpu.dot_dimension_numbers<[1], [0], [0], [1], [0, 0, 1, 1], [], []>} : vector<512x128xbf16>, vector<128x256xbf16>, vector<512x256xf32> -> vector<512x256xf32>
    %78 = vector.broadcast %51 : vector<1x256xf32> to vector<512x256xf32>
    %79 = arith.addf %77, %78 : vector<512x256xf32>
    %cst_49 = arith.constant 0.000000e+00 : f32
    %80 = vector.broadcast %cst_49 : f32 to vector<512x256xf32>
    %81 = arith.maximumf %79, %80 : vector<512x256xf32>
    %82 = arith.truncf %81 : vector<512x256xf32> to vector<512x256xbf16>
    %cst_50 = arith.constant dense<0.000000e+00> : vector<512x128xf32>
    %83 = tpu.matmul %82, %53, %cst_50 {dimension_numbers = #tpu.dot_dimension_numbers<[1], [0], [0], [1], [0, 0, 1, 1], [], []>} : vector<512x256xbf16>, vector<256x128xbf16>, vector<512x128xf32> -> vector<512x128xf32>
    %84 = arith.addf %43, %83 : vector<512x128xf32>
    %85 = vector.broadcast %55 : vector<1x128xf32> to vector<512x128xf32>
    %86 = arith.addf %84, %85 : vector<512x128xf32>
    %c0_51 = arith.constant 0 : index
    %c0_52 = arith.constant 0 : index
    %87 = vector.load %arg8[%c0_51, %c0_52] : memref<512x128xf32, #tpu.memory_space<vmem>>, vector<512x128xf32>
    tpu.vector_store %arg8[%c0_51, %c0_52], %86 {strides = array<i32>} : memref<512x128xf32, #tpu.memory_space<vmem>>, vector<512x128xf32>,
    return
  }
  func.func @transform_0(%arg0: i32) -> (i32, i32) {
    %c0_i32 = arith.constant 0 : i32
    %c0_i32_0 = arith.constant 0 : i32
    return %arg0, %c0_i32 : i32, i32
  }
  func.func @transform_1(%arg0: i32) -> (i32, i32, i32) {
    %c0_i32 = arith.constant 0 : i32
    %c0_i32_0 = arith.constant 0 : i32
    %c0_i32_1 = arith.constant 0 : i32
    %c0_i32_2 = arith.constant 0 : i32
    return %c0_i32, %c0_i32_0, %c0_i32_1 : i32, i32, i32
  }
  func.func @transform_2(%arg0: i32) -> (i32, i32, i32) {
    %c0_i32 = arith.constant 0 : i32
    %c0_i32_0 = arith.constant 0 : i32
    %c0_i32_1 = arith.constant 0 : i32
    %c0_i32_2 = arith.constant 0 : i32
    return %c0_i32, %c0_i32_0, %c0_i32_1 : i32, i32, i32
  }
  func.func @transform_3(%arg0: i32) -> (i32, i32, i32) {
    %c0_i32 = arith.constant 0 : i32
    %c0_i32_0 = arith.constant 0 : i32
    %c0_i32_1 = arith.constant 0 : i32
    %c0_i32_2 = arith.constant 0 : i32
    return %c0_i32, %c0_i32_0, %c0_i32_1 : i32, i32, i32
  }
  func.func @transform_4(%arg0: i32) -> (i32, i32, i32) {
    %c0_i32 = arith.constant 0 : i32
    %c0_i32_0 = arith.constant 0 : i32
    %c0_i32_1 = arith.constant 0 : i32
    %c0_i32_2 = arith.constant 0 : i32
    return %c0_i32, %c0_i32_0, %c0_i32_1 : i32, i32, i32
  }
  func.func @transform_5(%arg0: i32) -> (i32, i32, i32) {
    %c0_i32 = arith.constant 0 : i32
    %c0_i32_0 = arith.constant 0 : i32
    %c0_i32_1 = arith.constant 0 : i32
    %c0_i32_2 = arith.constant 0 : i32
    return %c0_i32, %c0_i32_0, %c0_i32_1 : i32, i32, i32
  }
  func.func @transform_6(%arg0: i32) -> (i32, i32, i32) {
    %c0_i32 = arith.constant 0 : i32
    %c0_i32_0 = arith.constant 0 : i32
    %c0_i32_1 = arith.constant 0 : i32
    %c0_i32_2 = arith.constant 0 : i32
    return %c0_i32, %c0_i32_0, %c0_i32_1 : i32, i32, i32
  }
  func.func @transform_7(%arg0: i32) -> (i32, i32) {
    %c0_i32 = arith.constant 0 : i32
    %c0_i32_0 = arith.constant 0 : i32
    return %arg0, %c0_i32 : i32, i32
  }
}

</mosaic_0001>

<llo_original>
// kernel: tpu_custom_call.1
$region0: #{tpu_custom_call.1}
  #allocation0 [shape = 'u32[]', space=smem, size = 0x4, offset = 0x4, fixed_abs, tag = 'smem constant byte address 0x4 - core index']
  #allocation1 [shape = 'u32[144,128]{1,0:T(1,128)}', space=vmem, size = 0x12000, scoped, tag = 'internal scratch']
  %s0 = inlined_call_operand.hbm [shape: f32[512,128], index: 0, kind: input, shape index: {}]
  %s1 = inlined_call_operand.hbm [shape: f32[2,1,128], index: 1, kind: input, shape index: {}]
  %s2 = inlined_call_operand.vmem [shape: f32[2,1,128], index: 2, kind: input, shape index: {}]
  %s3 = inlined_call_operand.hbm [shape: bf16[2,128,256], index: 3, kind: input, shape index: {}]
  %s4 = inlined_call_operand.vmem [shape: f32[2,1,256], index: 4, kind: input, shape index: {}]
  %s5 = inlined_call_operand.hbm [shape: bf16[2,256,128], index: 5, kind: input, shape index: {}]
  %s6 = inlined_call_operand.vmem [shape: f32[2,1,128], index: 6, kind: input, shape index: {}]
  %s7 = inlined_call_operand.hbm [shape: f32[512,128], index: 7, kind: output, shape index: {}]
  %s8 = sld [smem:[#allocation0]]
  $region54: #{tpu_custom_call.1} parent=0
    _
  %s10 = ssub.s32 1, %s8
  %s11 = scalar_select 0, %s10, %s8
  $region1: #{tpu_custom_call.1} parent=0
    #allocation2 [shape = 'u8[262144]{0}', space=vmem, size = 0x40000, scoped, tag = 'input window, operand 0, single buffered']
    #allocation3 [shape = 's32[1]{0}', space=sflag, size = 0x4, scoped, tag = 'scoped memory for tpu_custom_call.1']
    #allocation4 [shape = 's32[1]{0}', space=sflag, size = 0x4, scoped, tag = 'scoped memory for tpu_custom_call.1']
    #allocation5 [shape = 'u8[1024]{0}', space=vmem, size = 0x400, scoped, tag = 'input window, operand 1, single buffered']
    #allocation6 [shape = 's32[1]{0}', space=sflag, size = 0x4, scoped, tag = 'scoped memory for tpu_custom_call.1']
    #allocation7 [shape = 'u8[131072]{0}', space=vmem, size = 0x20000, scoped, tag = 'input window, operand 3, single buffered']
    #allocation8 [shape = 'u8[131072]{0}', space=vmem, size = 0x20000, scoped, tag = 'input window, operand 5, single buffered']
    #allocation9 [shape = 's32[1]{0}', space=sflag, size = 0x4, scoped, tag = 'scoped memory for tpu_custom_call.1']
    #allocation10 [shape = 'u8[262144]{0}', space=vmem, size = 0x40000, scoped, tag = 'output window, operand 0, single buffered']
    %12 = vsyncpa [#allocation3], 0
    %13 = vsyncpa [#allocation6], 0
    %14 = vsyncpa [#allocation9], 0
    %15 = vsyncpa [#allocation4], 0
    // Predicated region
    $region2: #{tpu_custom_call.1} parent=1 // pred_check
      _
    $region3: #{tpu_custom_call.1} parent=1 // pred_check_branch
      %17 = sbr.rel (0) target = $region5
    $region4: #{tpu_custom_call.1} parent=1 // pred_region
      %s19 = ssub.s32 8192, 8192
      %20 = vsyncadd [#allocation3], %s19
      %s21 = sshll.u32 [#allocation2], 4
      %s22 = int_to_ptr.vmem [resolvable:$true] %s21
      %27 = dma.hbm_to_vmem [thread:$0]  %s0, 8192, %s22, [#allocation3], 128, 128, 8
    $region5: #{tpu_custom_call.1} parent=1 // pred_fallthru
      _
    // Predicated region
    $region6: #{tpu_custom_call.1} parent=1 // pred_check
      _
    $region7: #{tpu_custom_call.1} parent=1 // pred_check_branch
      %29 = sbr.rel (0) target = $region9
    $region8: #{tpu_custom_call.1} parent=1 // pred_region
      %s31 = ssub.s32 32, 32
      %32 = vsyncadd [#allocation6], %s31
      %s33 = sshll.u32 [#allocation5], 4
      %s34 = int_to_ptr.vmem [resolvable:$true] %s33
      %39 = dma.hbm_to_vmem [thread:$0]  %s1, 32, %s34, [#allocation6], 16, 16, 1
    $region9: #{tpu_custom_call.1} parent=1 // pred_fallthru
      _
    // Predicated region
    $region10: #{tpu_custom_call.1} parent=1 // pred_check
      _
    $region11: #{tpu_custom_call.1} parent=1 // pred_check_branch
      %41 = sbr.rel (0) target = $region13
    $region12: #{tpu_custom_call.1} parent=1 // pred_region
      _
    $region13: #{tpu_custom_call.1} parent=1 // pred_fallthru
      _
    // Predicated region
    $region14: #{tpu_custom_call.1} parent=1 // pred_check
      _
    $region15: #{tpu_custom_call.1} parent=1 // pred_check_branch
      %43 = sbr.rel (0) target = $region17
    $region16: #{tpu_custom_call.1} parent=1 // pred_region
      %s45 = ssub.s32 4096, 4096
      %46 = vsyncadd [#allocation6], %s45
      %s47 = sshll.u32 [#allocation7], 4
      %s48 = int_to_ptr.vmem [resolvable:$true] %s47
      %53 = dma.hbm_to_vmem [thread:$0]  %s3, 4096, %s48, [#allocation6], 128, 128, 8
    $region17: #{tpu_custom_call.1} parent=1 // pred_fallthru
      _
    // Predicated region
    $region18: #{tpu_custom_call.1} parent=1 // pred_check
      _
    $region19: #{tpu_custom_call.1} parent=1 // pred_check_branch
      %55 = sbr.rel (0) target = $region21
    $region20: #{tpu_custom_call.1} parent=1 // pred_region
      _
    $region21: #{tpu_custom_call.1} parent=1 // pred_fallthru
      _
    // Predicated region
    $region22: #{tpu_custom_call.1} parent=1 // pred_check
      _
    $region23: #{tpu_custom_call.1} parent=1 // pred_check_branch
      %57 = sbr.rel (0) target = $region25
    $region24: #{tpu_custom_call.1} parent=1 // pred_region
      %s59 = ssub.s32 4096, 4096
      %60 = vsyncadd [#allocation9], %s59
      %s61 = sshll.u32 [#allocation8], 4
      %s62 = int_to_ptr.vmem [resolvable:$true] %s61
      %67 = dma.hbm_to_vmem [thread:$0]  %s5, 4096, %s62, [#allocation9], 64, 64, 4
    $region25: #{tpu_custom_call.1} parent=1 // pred_fallthru
      _
    // Predicated region
    $region26: #{tpu_custom_call.1} parent=1 // pred_check
      _
    $region27: #{tpu_custom_call.1} parent=1 // pred_check_branch
      %69 = sbr.rel (0) target = $region29
    $region28: #{tpu_custom_call.1} parent=1 // pred_region
      _
    $region29: #{tpu_custom_call.1} parent=1 // pred_fallthru
      _
    // Predicated region
    $region30: #{tpu_custom_call.1} parent=1 // pred_check
      _
    $region31: #{tpu_custom_call.1} parent=1 // pred_check_branch
      %71 = sbr.rel (0) target = $region33
    $region32: #{tpu_custom_call.1} parent=1 // pred_region
      %72 = dma.done [#allocation3], 8192
    $region33: #{tpu_custom_call.1} parent=1 // pred_fallthru
      _
    // Predicated region
    $region34: #{tpu_custom_call.1} parent=1 // pred_check
      _
    $region35: #{tpu_custom_call.1} parent=1 // pred_check_branch
      %74 = sbr.rel (0) target = $region37
    $region36: #{tpu_custom_call.1} parent=1 // pred_region
      %75 = dma.done [#allocation6], 32
    $region37: #{tpu_custom_call.1} parent=1 // pred_fallthru
      _
    // Predicated region
    $region38: #{tpu_custom_call.1} parent=1 // pred_check
      _
    $region39: #{tpu_custom_call.1} parent=1 // pred_check_branch
      %77 = sbr.rel (0) target = $region41
    $region40: #{tpu_custom_call.1} parent=1 // pred_region
      %78 = dma.done [#allocation6], 4096
    $region41: #{tpu_custom_call.1} parent=1 // pred_fallthru
      _
    // Predicated region
    $region42: #{tpu_custom_call.1} parent=1 // pred_check
      _
    $region43: #{tpu_custom_call.1} parent=1 // pred_check_branch
      %80 = sbr.rel (0) target = $region45
    $region44: #{tpu_custom_call.1} parent=1 // pred_region
      %81 = dma.done [#allocation9], 4096
    $region45: #{tpu_custom_call.1} parent=1 // pred_fallthru
      _
    %v83 = vld [vmem:[#allocation2] sm:$0xff]
    %v84 = vld [vmem:[#allocation2 + $0x8] sm:$0xff]
    %v85 = vld [vmem:[#allocation2 + $0x10] sm:$0xff]
    %v86 = vld [vmem:[#allocation2 + $0x18] sm:$0xff]
    %v87 = vld [vmem:[#allocation2 + $0x20] sm:$0xff]
    %v88 = vld [vmem:[#allocation2 + $0x28] sm:$0xff]
    %v89 = vld [vmem:[#allocation2 + $0x30] sm:$0xff]
    %v90 = vld [vmem:[#allocation2 + $0x38] sm:$0xff]
    %v91 = vld [vmem:[#allocation2 + $0x40] sm:$0xff]
    %v92 = vld [vmem:[#allocation2 + $0x48] sm:$0xff]
    %v93 = vld [vmem:[#allocation2 + $0x50] sm:$0xff]
    %v94 = vld [vmem:[#allocation2 + $0x58] sm:$0xff]
    %v95 = vld [vmem:[#allocation2 + $0x60] sm:$0xff]
    %v96 = vld [vmem:[#allocation2 + $0x68] sm:$0xff]
    %v97 = vld [vmem:[#allocation2 + $0x70] sm:$0xff]
    %v98 = vld [vmem:[#allocation2 + $0x78] sm:$0xff]
    %v99 = vld [vmem:[#allocation2 + $0x80] sm:$0xff]
    %v100 = vld [vmem:[#allocation2 + $0x88] sm:$0xff]
    %v101 = vld [vmem:[#allocation2 + $0x90] sm:$0xff]
    %v102 = vld [vmem:[#allocation2 + $0x98] sm:$0xff]
    %v103 = vld [vmem:[#allocation2 + $0xa0] sm:$0xff]
    %v104 = vld [vmem:[#allocation2 + $0xa8] sm:$0xff]
    %v105 = vld [vmem:[#allocation2 + $0xb0] sm:$0xff]
    %v106 = vld [vmem:[#allocation2 + $0xb8] sm:$0xff]
    %v107 = vld [vmem:[#allocation2 + $0xc0] sm:$0xff]
    %v108 = vld [vmem:[#allocation2 + $0xc8] sm:$0xff]
    %v109 = vld [vmem:[#allocation2 + $0xd0] sm:$0xff]
    %v110 = vld [vmem:[#allocation2 + $0xd8] sm:$0xff]
    %v111 = vld [vmem:[#allocation2 + $0xe0] sm:$0xff]
    %v112 = vld [vmem:[#allocation2 + $0xe8] sm:$0xff]
    %v113 = vld [vmem:[#allocation2 + $0xf0] sm:$0xff]
    %v114 = vld [vmem:[#allocation2 + $0xf8] sm:$0xff]
    %v115 = vld [vmem:[#allocation2 + $0x100] sm:$0xff]
    %v116 = vld [vmem:[#allocation2 + $0x108] sm:$0xff]
    %v117 = vld [vmem:[#allocation2 + $0x110] sm:$0xff]
    %v118 = vld [vmem:[#allocation2 + $0x118] sm:$0xff]
    %v119 = vld [vmem:[#allocation2 + $0x120] sm:$0xff]
    %v120 = vld [vmem:[#allocation2 + $0x128] sm:$0xff]
    %v121 = vld [vmem:[#allocation2 + $0x130] sm:$0xff]
    %v122 = vld [vmem:[#allocation2 + $0x138] sm:$0xff]
    %v123 = vld [vmem:[#allocation2 + $0x140] sm:$0xff]
    %v124 = vld [vmem:[#allocation2 + $0x148] sm:$0xff]
    %v125 = vld [vmem:[#allocation2 + $0x150] sm:$0xff]
    %v126 = vld [vmem:[#allocation2 + $0x158] sm:$0xff]
    %v127 = vld [vmem:[#allocation2 + $0x160] sm:$0xff]
    %v128 = vld [vmem:[#allocation2 + $0x168] sm:$0xff]
    %v129 = vld [vmem:[#allocation2 + $0x170] sm:$0xff]
    %v130 = vld [vmem:[#allocation2 + $0x178] sm:$0xff]
    %v131 = vld [vmem:[#allocation2 + $0x180] sm:$0xff]
    %v132 = vld [vmem:[#allocation2 + $0x188] sm:$0xff]
    %v133 = vld [vmem:[#allocation2 + $0x190] sm:$0xff]
    %v134 = vld [vmem:[#allocation2 + $0x198] sm:$0xff]
    %v135 = vld [vmem:[#allocation2 + $0x1a0] sm:$0xff]
    %v136 = vld [vmem:[#allocation2 + $0x1a8] sm:$0xff]
    %v137 = vld [vmem:[#allocation2 + $0x1b0] sm:$0xff]
    %v138 = vld [vmem:[#allocation2 + $0x1b8] sm:$0xff]
    %v139 = vld [vmem:[#allocation2 + $0x1c0] sm:$0xff]
    %v140 = vld [vmem:[#allocation2 + $0x1c8] sm:$0xff]
    %v141 = vld [vmem:[#allocation2 + $0x1d0] sm:$0xff]
    %v142 = vld [vmem:[#allocation2 + $0x1d8] sm:$0xff]
    %v143 = vld [vmem:[#allocation2 + $0x1e0] sm:$0xff]
    %v144 = vld [vmem:[#allocation2 + $0x1e8] sm:$0xff]
    %v145 = vld [vmem:[#allocation2 + $0x1f0] sm:$0xff]
    %v146 = vld [vmem:[#allocation2 + $0x1f8] sm:$0xff]
    %v147 = vld [vmem:[#allocation5] sm:$0x1]
    %v148 = vld [vmem:[%s2] sm:$0x1]
    %v149 = vld [vmem:[#allocation7] sm:$0xff]
    %v150 = vld [vmem:[#allocation7 + $0x8] sm:$0xff]
    %v151 = vld [vmem:[#allocation7 + $0x10] sm:$0xff]
    %v152 = vld [vmem:[#allocation7 + $0x18] sm:$0xff]
    %v153 = vld [vmem:[#allocation7 + $0x20] sm:$0xff]
    %v154 = vld [vmem:[#allocation7 + $0x28] sm:$0xff]
    %v155 = vld [vmem:[#allocation7 + $0x30] sm:$0xff]
    %v156 = vld [vmem:[#allocation7 + $0x38] sm:$0xff]
    %v157 = vld [vmem:[#allocation7 + $0x40] sm:$0xff]
    %v158 = vld [vmem:[#allocation7 + $0x48] sm:$0xff]
    %v159 = vld [vmem:[#allocation7 + $0x50] sm:$0xff]
    %v160 = vld [vmem:[#allocation7 + $0x58] sm:$0xff]
    %v161 = vld [vmem:[#allocation7 + $0x60] sm:$0xff]
    %v162 = vld [vmem:[#allocation7 + $0x68] sm:$0xff]
    %v163 = vld [vmem:[#allocation7 + $0x70] sm:$0xff]
    %v164 = vld [vmem:[#allocation7 + $0x78] sm:$0xff]
    %v165 = vld [vmem:[%s4] sm:$0x3]
    %v166 = vld [vmem:[#allocation8] sm:$0xf]
    %v167 = vld [vmem:[#allocation8 + $0x4] sm:$0xf]
    %v168 = vld [vmem:[#allocation8 + $0x8] sm:$0xf]
    %v169 = vld [vmem:[#allocation8 + $0xc] sm:$0xf]
    %v170 = vld [vmem:[#allocation8 + $0x10] sm:$0xf]
    %v171 = vld [vmem:[#allocation8 + $0x14] sm:$0xf]
    %v172 = vld [vmem:[#allocation8 + $0x18] sm:$0xf]
    %v173 = vld [vmem:[#allocation8 + $0x1c] sm:$0xf]
    %v174 = vld [vmem:[#allocation8 + $0x20] sm:$0xf]
    %v175 = vld [vmem:[#allocation8 + $0x24] sm:$0xf]
    %v176 = vld [vmem:[#allocation8 + $0x28] sm:$0xf]
    %v177 = vld [vmem:[#allocation8 + $0x2c] sm:$0xf]
    %v178 = vld [vmem:[#allocation8 + $0x30] sm:$0xf]
    %v179 = vld [vmem:[#allocation8 + $0x34] sm:$0xf]
    %v180 = vld [vmem:[#allocation8 + $0x38] sm:$0xf]
    %v181 = vld [vmem:[#allocation8 + $0x3c] sm:$0xf]
    %v182 = vld [vmem:[#allocation8 + $0x40] sm:$0xf]
    %v183 = vld [vmem:[#allocation8 + $0x44] sm:$0xf]
    %v184 = vld [vmem:[#allocation8 + $0x48] sm:$0xf]
    %v185 = vld [vmem:[#allocation8 + $0x4c] sm:$0xf]
    %v186 = vld [vmem:[#allocation8 + $0x50] sm:$0xf]
    %v187 = vld [vmem:[#allocation8 + $0x54] sm:$0xf]
    %v188 = vld [vmem:[#allocation8 + $0x58] sm:$0xf]
    %v189 = vld [vmem:[#allocation8 + $0x5c] sm:$0xf]
    %v190 = vld [vmem:[#allocation8 + $0x60] sm:$0xf]
    %v191 = vld [vmem:[#allocation8 + $0x64] sm:$0xf]
    %v192 = vld [vmem:[#allocation8 + $0x68] sm:$0xf]
    %v193 = vld [vmem:[#allocation8 + $0x6c] sm:$0xf]
    %v194 = vld [vmem:[#allocation8 + $0x70] sm:$0xf]
    %v195 = vld [vmem:[#allocation8 + $0x74] sm:$0xf]
    %v196 = vld [vmem:[#allocation8 + $0x78] sm:$0xf]
    %v197 = vld [vmem:[#allocation8 + $0x7c] sm:$0xf]
    %v198 = vld [vmem:[%s6] sm:$0x1]
    %199 = vadd.xlane.f32.xlu0 %v83
    %v200 = vpop.xlane.xlu0 %199
    %201 = vadd.xlane.f32.xlu0 %v84
    %v202 = vpop.xlane.xlu0 %201
    %203 = vadd.xlane.f32.xlu0 %v85
    %v204 = vpop.xlane.xlu0 %203
    %205 = vadd.xlane.f32.xlu0 %v86
    %v206 = vpop.xlane.xlu0 %205
    %207 = vadd.xlane.f32.xlu0 %v87
    %v208 = vpop.xlane.xlu0 %207
    %209 = vadd.xlane.f32.xlu0 %v88
    %v210 = vpop.xlane.xlu0 %209
    %211 = vadd.xlane.f32.xlu0 %v89
    %v212 = vpop.xlane.xlu0 %211
    %213 = vadd.xlane.f32.xlu0 %v90
    %v214 = vpop.xlane.xlu0 %213
    %215 = vadd.xlane.f32.xlu0 %v91
    %v216 = vpop.xlane.xlu0 %215
    %217 = vadd.xlane.f32.xlu0 %v92
    %v218 = vpop.xlane.xlu0 %217
    %219 = vadd.xlane.f32.xlu0 %v93
    %v220 = vpop.xlane.xlu0 %219
    %221 = vadd.xlane.f32.xlu0 %v94
    %v222 = vpop.xlane.xlu0 %221
    %223 = vadd.xlane.f32.xlu0 %v95
    %v224 = vpop.xlane.xlu0 %223
    %225 = vadd.xlane.f32.xlu0 %v96
    %v226 = vpop.xlane.xlu0 %225
    %227 = vadd.xlane.f32.xlu0 %v97
    %v228 = vpop.xlane.xlu0 %227
    %229 = vadd.xlane.f32.xlu0 %v98
    %v230 = vpop.xlane.xlu0 %229
    %231 = vadd.xlane.f32.xlu0 %v99
    %v232 = vpop.xlane.xlu0 %231
    %233 = vadd.xlane.f32.xlu0 %v100
    %v234 = vpop.xlane.xlu0 %233
    %235 = vadd.xlane.f32.xlu0 %v101
    %v236 = vpop.xlane.xlu0 %235
    %237 = vadd.xlane.f32.xlu0 %v102
    %v238 = vpop.xlane.xlu0 %237
    %239 = vadd.xlane.f32.xlu0 %v103
    %v240 = vpop.xlane.xlu0 %239
    %241 = vadd.xlane.f32.xlu0 %v104
    %v242 = vpop.xlane.xlu0 %241
    %243 = vadd.xlane.f32.xlu0 %v105
    %v244 = vpop.xlane.xlu0 %243
    %245 = vadd.xlane.f32.xlu0 %v106
    %v246 = vpop.xlane.xlu0 %245
    %247 = vadd.xlane.f32.xlu0 %v107
    %v248 = vpop.xlane.xlu0 %247
    %249 = vadd.xlane.f32.xlu0 %v108
    %v250 = vpop.xlane.xlu0 %249
    %251 = vadd.xlane.f32.xlu0 %v109
    %v252 = vpop.xlane.xlu0 %251
    %253 = vadd.xlane.f32.xlu0 %v110
    %v254 = vpop.xlane.xlu0 %253
    %255 = vadd.xlane.f32.xlu0 %v111
    %v256 = vpop.xlane.xlu0 %255
    %257 = vadd.xlane.f32.xlu0 %v112
    %v258 = vpop.xlane.xlu0 %257
    %259 = vadd.xlane.f32.xlu0 %v113
    %v260 = vpop.xlane.xlu0 %259
    %261 = vadd.xlane.f32.xlu0 %v114
    %v262 = vpop.xlane.xlu0 %261
    %263 = vadd.xlane.f32.xlu0 %v115
    %v264 = vpop.xlane.xlu0 %263
    %265 = vadd.xlane.f32.xlu0 %v116
    %v266 = vpop.xlane.xlu0 %265
    %267 = vadd.xlane.f32.xlu0 %v117
    %v268 = vpop.xlane.xlu0 %267
    %269 = vadd.xlane.f32.xlu0 %v118
    %v270 = vpop.xlane.xlu0 %269
    %271 = vadd.xlane.f32.xlu0 %v119
    %v272 = vpop.xlane.xlu0 %271
    %273 = vadd.xlane.f32.xlu0 %v120
    %v274 = vpop.xlane.xlu0 %273
    %275 = vadd.xlane.f32.xlu0 %v121
    %v276 = vpop.xlane.xlu0 %275
    %277 = vadd.xlane.f32.xlu0 %v122
    %v278 = vpop.xlane.xlu0 %277
    %279 = vadd.xlane.f32.xlu0 %v123
    %v280 = vpop.xlane.xlu0 %279
    %281 = vadd.xlane.f32.xlu0 %v124
    %v282 = vpop.xlane.xlu0 %281
    %283 = vadd.xlane.f32.xlu0 %v125
    %v284 = vpop.xlane.xlu0 %283
    %285 = vadd.xlane.f32.xlu0 %v126
    %v286 = vpop.xlane.xlu0 %285
    %287 = vadd.xlane.f32.xlu0 %v127
    %v288 = vpop.xlane.xlu0 %287
    %289 = vadd.xlane.f32.xlu0 %v128
    %v290 = vpop.xlane.xlu0 %289
    %291 = vadd.xlane.f32.xlu0 %v129
    %v292 = vpop.xlane.xlu0 %291
    %293 = vadd.xlane.f32.xlu0 %v130
    %v294 = vpop.xlane.xlu0 %293
    %295 = vadd.xlane.f32.xlu0 %v131
    %v296 = vpop.xlane.xlu0 %295
    %297 = vadd.xlane.f32.xlu0 %v132
    %v298 = vpop.xlane.xlu0 %297
    %299 = vadd.xlane.f32.xlu0 %v133
    %v300 = vpop.xlane.xlu0 %299
    %301 = vadd.xlane.f32.xlu0 %v134
    %v302 = vpop.xlane.xlu0 %301
    %303 = vadd.xlane.f32.xlu0 %v135
    %v304 = vpop.xlane.xlu0 %303
    %305 = vadd.xlane.f32.xlu0 %v136
    %v306 = vpop.xlane.xlu0 %305
    %307 = vadd.xlane.f32.xlu0 %v137
    %v308 = vpop.xlane.xlu0 %307
    %309 = vadd.xlane.f32.xlu0 %v138
    %v310 = vpop.xlane.xlu0 %309
    %311 = vadd.xlane.f32.xlu0 %v139
    %v312 = vpop.xlane.xlu0 %311
    %313 = vadd.xlane.f32.xlu0 %v140
    %v314 = vpop.xlane.xlu0 %313
    %315 = vadd.xlane.f32.xlu0 %v141
    %v316 = vpop.xlane.xlu0 %315
    %317 = vadd.xlane.f32.xlu0 %v142
    %v318 = vpop.xlane.xlu0 %317
    %319 = vadd.xlane.f32.xlu0 %v143
    %v320 = vpop.xlane.xlu0 %319
    %321 = vadd.xlane.f32.xlu0 %v144
    %v322 = vpop.xlane.xlu0 %321
    %323 = vadd.xlane.f32.xlu0 %v145
    %v324 = vpop.xlane.xlu0 %323
    %325 = vadd.xlane.f32.xlu0 %v146
    %v326 = vpop.xlane.xlu0 %325
    %v327 = vrcp.pop 128.0
    %v328 = vmul.f32 %v200, %v327
    %v329 = vmul.f32 %v202, %v327
    %v330 = vmul.f32 %v204, %v327
    %v331 = vmul.f32 %v206, %v327
    %v332 = vmul.f32 %v208, %v327
    %v333 = vmul.f32 %v210, %v327
    %v334 = vmul.f32 %v212, %v327
    %v335 = vmul.f32 %v214, %v327
    %v336 = vmul.f32 %v216, %v327
    %v337 = vmul.f32 %v218, %v327
    %v338 = vmul.f32 %v220, %v327
    %v339 = vmul.f32 %v222, %v327
    %v340 = vmul.f32 %v224, %v327
    %v341 = vmul.f32 %v226, %v327
    %v342 = vmul.f32 %v228, %v327
    %v343 = vmul.f32 %v230, %v327
    %v344 = vmul.f32 %v232, %v327
    %v345 = vmul.f32 %v234, %v327
    %v346 = vmul.f32 %v236, %v327
    %v347 = vmul.f32 %v238, %v327
    %v348 = vmul.f32 %v240, %v327
    %v349 = vmul.f32 %v242, %v327
    %v350 = vmul.f32 %v244, %v327
    %v351 = vmul.f32 %v246, %v327
    %v352 = vmul.f32 %v248, %v327
    %v353 = vmul.f32 %v250, %v327
    %v354 = vmul.f32 %v252, %v327
    %v355 = vmul.f32 %v254, %v327
    %v356 = vmul.f32 %v256, %v327
    %v357 = vmul.f32 %v258, %v327
    %v358 = vmul.f32 %v260, %v327
    %v359 = vmul.f32 %v262, %v327
    %v360 = vmul.f32 %v264, %v327
    %v361 = vmul.f32 %v266, %v327
    %v362 = vmul.f32 %v268, %v327
    %v363 = vmul.f32 %v270, %v327
    %v364 = vmul.f32 %v272, %v327
    %v365 = vmul.f32 %v274, %v327
    %v366 = vmul.f32 %v276, %v327
    %v367 = vmul.f32 %v278, %v327
    %v368 = vmul.f32 %v280, %v327
    %v369 = vmul.f32 %v282, %v327
    %v370 = vmul.f32 %v284, %v327
    %v371 = vmul.f32 %v286, %v327
    %v372 = vmul.f32 %v288, %v327
    %v373 = vmul.f32 %v290, %v327
    %v374 = vmul.f32 %v292, %v327
    %v375 = vmul.f32 %v294, %v327
    %v376 = vmul.f32 %v296, %v327
    %v377 = vmul.f32 %v298, %v327
    %v378 = vmul.f32 %v300, %v327
    %v379 = vmul.f32 %v302, %v327
    %v380 = vmul.f32 %v304, %v327
    %v381 = vmul.f32 %v306, %v327
    %v382 = vmul.f32 %v308, %v327
    %v383 = vmul.f32 %v310, %v327
    %v384 = vmul.f32 %v312, %v327
    %v385 = vmul.f32 %v314, %v327
    %v386 = vmul.f32 %v316, %v327
    %v387 = vmul.f32 %v318, %v327
    %v388 = vmul.f32 %v320, %v327
    %v389 = vmul.f32 %v322, %v327
    %v390 = vmul.f32 %v324, %v327
    %v391 = vmul.f32 %v326, %v327
    %v392 = vsub.f32 %v83, %v328
    %v393 = vsub.f32 %v84, %v329
    %v394 = vsub.f32 %v85, %v330
    %v395 = vsub.f32 %v86, %v331
    %v396 = vsub.f32 %v87, %v332
    %v397 = vsub.f32 %v88, %v333
    %v398 = vsub.f32 %v89, %v334
    %v399 = vsub.f32 %v90, %v335
    %v400 = vsub.f32 %v91, %v336
    %v401 = vsub.f32 %v92, %v337
    %v402 = vsub.f32 %v93, %v338
    %v403 = vsub.f32 %v94, %v339
    %v404 = vsub.f32 %v95, %v340
    %v405 = vsub.f32 %v96, %v341
    %v406 = vsub.f32 %v97, %v342
    %v407 = vsub.f32 %v98, %v343
    %v408 = vsub.f32 %v99, %v344
    %v409 = vsub.f32 %v100, %v345
    %v410 = vsub.f32 %v101, %v346
    %v411 = vsub.f32 %v102, %v347
    %v412 = vsub.f32 %v103, %v348
    %v413 = vsub.f32 %v104, %v349
    %v414 = vsub.f32 %v105, %v350
    %v415 = vsub.f32 %v106, %v351
    %v416 = vsub.f32 %v107, %v352
    %v417 = vsub.f32 %v108, %v353
    %v418 = vsub.f32 %v109, %v354
    %v419 = vsub.f32 %v110, %v355
    %v420 = vsub.f32 %v111, %v356
    %v421 = vsub.f32 %v112, %v357
    %v422 = vsub.f32 %v113, %v358
    %v423 = vsub.f32 %v114, %v359
    %v424 = vsub.f32 %v115, %v360
    %v425 = vsub.f32 %v116, %v361
    %v426 = vsub.f32 %v117, %v362
    %v427 = vsub.f32 %v118, %v363
    %v428 = vsub.f32 %v119, %v364
    %v429 = vsub.f32 %v120, %v365
    %v430 = vsub.f32 %v121, %v366
    %v431 = vsub.f32 %v122, %v367
    %v432 = vsub.f32 %v123, %v368
    %v433 = vsub.f32 %v124, %v369
    %v434 = vsub.f32 %v125, %v370
    %v435 = vsub.f32 %v126, %v371
    %v436 = vsub.f32 %v127, %v372
    %v437 = vsub.f32 %v128, %v373
    %v438 = vsub.f32 %v129, %v374
    %v439 = vsub.f32 %v130, %v375
    %v440 = vsub.f32 %v131, %v376
    %v441 = vsub.f32 %v132, %v377
    %v442 = vsub.f32 %v133, %v378
    %v443 = vsub.f32 %v134, %v379
    %v444 = vsub.f32 %v135, %v380
    %v445 = vsub.f32 %v136, %v381
    %v446 = vsub.f32 %v137, %v382
    %v447 = vsub.f32 %v138, %v383
    %v448 = vsub.f32 %v139, %v384
    %v449 = vsub.f32 %v140, %v385
    %v450 = vsub.f32 %v141, %v386
    %v451 = vsub.f32 %v142, %v387
    %v452 = vsub.f32 %v143, %v388
    %v453 = vsub.f32 %v144, %v389
    %v454 = vsub.f32 %v145, %v390
    %v455 = vsub.f32 %v146, %v391
    %v456 = vmul.f32 %v392, %v392
    %v457 = vmul.f32 %v393, %v393
    %v458 = vmul.f32 %v394, %v394
    %v459 = vmul.f32 %v395, %v395
    %v460 = vmul.f32 %v396, %v396
    %v461 = vmul.f32 %v397, %v397
    %v462 = vmul.f32 %v398, %v398
    %v463 = vmul.f32 %v399, %v399
    %v464 = vmul.f32 %v400, %v400
    %v465 = vmul.f32 %v401, %v401
    %v466 = vmul.f32 %v402, %v402
    %v467 = vmul.f32 %v403, %v403
    %v468 = vmul.f32 %v404, %v404
    %v469 = vmul.f32 %v405, %v405
    %v470 = vmul.f32 %v406, %v406
    %v471 = vmul.f32 %v407, %v407
    %v472 = vmul.f32 %v408, %v408
    %v473 = vmul.f32 %v409, %v409
    %v474 = vmul.f32 %v410, %v410
    %v475 = vmul.f32 %v411, %v411
    %v476 = vmul.f32 %v412, %v412
    %v477 = vmul.f32 %v413, %v413
    %v478 = vmul.f32 %v414, %v414
    %v479 = vmul.f32 %v415, %v415
    %v480 = vmul.f32 %v416, %v416
    %v481 = vmul.f32 %v417, %v417
    %v482 = vmul.f32 %v418, %v418
    %v483 = vmul.f32 %v419, %v419
    %v484 = vmul.f32 %v420, %v420
    %v485 = vmul.f32 %v421, %v421
    %v486 = vmul.f32 %v422, %v422
    %v487 = vmul.f32 %v423, %v423
    %v488 = vmul.f32 %v424, %v424
    %v489 = vmul.f32 %v425, %v425
    %v490 = vmul.f32 %v426, %v426
    %v491 = vmul.f32 %v427, %v427
    %v492 = vmul.f32 %v428, %v428
    %v493 = vmul.f32 %v429, %v429
    %v494 = vmul.f32 %v430, %v430
    %v495 = vmul.f32 %v431, %v431
    %v496 = vmul.f32 %v432, %v432
    %v497 = vmul.f32 %v433, %v433
    %v498 = vmul.f32 %v434, %v434
    %v499 = vmul.f32 %v435, %v435
    %v500 = vmul.f32 %v436, %v436
    %v501 = vmul.f32 %v437, %v437
    %v502 = vmul.f32 %v438, %v438
    %v503 = vmul.f32 %v439, %v439
    %v504 = vmul.f32 %v440, %v440
    %v505 = vmul.f32 %v441, %v441
    %v506 = vmul.f32 %v442, %v442
    %v507 = vmul.f32 %v443, %v443
    %v508 = vmul.f32 %v444, %v444
    %v509 = vmul.f32 %v445, %v445
    %v510 = vmul.f32 %v446, %v446
    %v511 = vmul.f32 %v447, %v447
    %v512 = vmul.f32 %v448, %v448
    %v513 = vmul.f32 %v449, %v449
    %v514 = vmul.f32 %v450, %v450
    %v515 = vmul.f32 %v451, %v451
    %v516 = vmul.f32 %v452, %v452
    %v517 = vmul.f32 %v453, %v453
    %v518 = vmul.f32 %v454, %v454
    %v519 = vmul.f32 %v455, %v455
    %520 = vadd.xlane.f32.xlu0 %v456
    %v521 = vpop.xlane.xlu0 %520
    %522 = vadd.xlane.f32.xlu0 %v457
    %v523 = vpop.xlane.xlu0 %522
    %524 = vadd.xlane.f32.xlu0 %v458
    %v525 = vpop.xlane.xlu0 %524
    %526 = vadd.xlane.f32.xlu0 %v459
    %v527 = vpop.xlane.xlu0 %526
    %528 = vadd.xlane.f32.xlu0 %v460
    %v529 = vpop.xlane.xlu0 %528
    %530 = vadd.xlane.f32.xlu0 %v461
    %v531 = vpop.xlane.xlu0 %530
    %532 = vadd.xlane.f32.xlu0 %v462
    %v533 = vpop.xlane.xlu0 %532
    %534 = vadd.xlane.f32.xlu0 %v463
    %v535 = vpop.xlane.xlu0 %534
    %536 = vadd.xlane.f32.xlu0 %v464
    %v537 = vpop.xlane.xlu0 %536
    %538 = vadd.xlane.f32.xlu0 %v465
    %v539 = vpop.xlane.xlu0 %538
    %540 = vadd.xlane.f32.xlu0 %v466
    %v541 = vpop.xlane.xlu0 %540
    %542 = vadd.xlane.f32.xlu0 %v467
    %v543 = vpop.xlane.xlu0 %542
    %544 = vadd.xlane.f32.xlu0 %v468
    %v545 = vpop.xlane.xlu0 %544
    %546 = vadd.xlane.f32.xlu0 %v469
    %v547 = vpop.xlane.xlu0 %546
    %548 = vadd.xlane.f32.xlu0 %v470
    %v549 = vpop.xlane.xlu0 %548
    %550 = vadd.xlane.f32.xlu0 %v471
    %v551 = vpop.xlane.xlu0 %550
    %552 = vadd.xlane.f32.xlu0 %v472
    %v553 = vpop.xlane.xlu0 %552
    %554 = vadd.xlane.f32.xlu0 %v473
    %v555 = vpop.xlane.xlu0 %554
    %556 = vadd.xlane.f32.xlu0 %v474
    %v557 = vpop.xlane.xlu0 %556
    %558 = vadd.xlane.f32.xlu0 %v475
    %v559 = vpop.xlane.xlu0 %558
    %560 = vadd.xlane.f32.xlu0 %v476
    %v561 = vpop.xlane.xlu0 %560
    %562 = vadd.xlane.f32.xlu0 %v477
    %v563 = vpop.xlane.xlu0 %562
    %564 = vadd.xlane.f32.xlu0 %v478
    %v565 = vpop.xlane.xlu0 %564
    %566 = vadd.xlane.f32.xlu0 %v479
    %v567 = vpop.xlane.xlu0 %566
    %568 = vadd.xlane.f32.xlu0 %v480
    %v569 = vpop.xlane.xlu0 %568
    %570 = vadd.xlane.f32.xlu0 %v481
    %v571 = vpop.xlane.xlu0 %570
    %572 = vadd.xlane.f32.xlu0 %v482
    %v573 = vpop.xlane.xlu0 %572
    %574 = vadd.xlane.f32.xlu0 %v483
    %v575 = vpop.xlane.xlu0 %574
    %576 = vadd.xlane.f32.xlu0 %v484
    %v577 = vpop.xlane.xlu0 %576
    %578 = vadd.xlane.f32.xlu0 %v485
    %v579 = vpop.xlane.xlu0 %578
    %580 = vadd.xlane.f32.xlu0 %v486
    %v581 = vpop.xlane.xlu0 %580
    %582 = vadd.xlane.f32.xlu0 %v487
    %v583 = vpop.xlane.xlu0 %582
    %584 = vadd.xlane.f32.xlu0 %v488
    %v585 = vpop.xlane.xlu0 %584
    %586 = vadd.xlane.f32.xlu0 %v489
    %v587 = vpop.xlane.xlu0 %586
    %588 = vadd.xlane.f32.xlu0 %v490
    %v589 = vpop.xlane.xlu0 %588
    %590 = vadd.xlane.f32.xlu0 %v491
    %v591 = vpop.xlane.xlu0 %590
    %592 = vadd.xlane.f32.xlu0 %v492
    %v593 = vpop.xlane.xlu0 %592
    %594 = vadd.xlane.f32.xlu0 %v493
    %v595 = vpop.xlane.xlu0 %594
    %596 = vadd.xlane.f32.xlu0 %v494
    %v597 = vpop.xlane.xlu0 %596
    %598 = vadd.xlane.f32.xlu0 %v495
    %v599 = vpop.xlane.xlu0 %598
    %600 = vadd.xlane.f32.xlu0 %v496
    %v601 = vpop.xlane.xlu0 %600
    %602 = vadd.xlane.f32.xlu0 %v497
    %v603 = vpop.xlane.xlu0 %602
    %604 = vadd.xlane.f32.xlu0 %v498
    %v605 = vpop.xlane.xlu0 %604
    %606 = vadd.xlane.f32.xlu0 %v499
    %v607 = vpop.xlane.xlu0 %606
    %608 = vadd.xlane.f32.xlu0 %v500
    %v609 = vpop.xlane.xlu0 %608
    %610 = vadd.xlane.f32.xlu0 %v501
    %v611 = vpop.xlane.xlu0 %610
    %612 = vadd.xlane.f32.xlu0 %v502
    %v613 = vpop.xlane.xlu0 %612
    %614 = vadd.xlane.f32.xlu0 %v503
    %v615 = vpop.xlane.xlu0 %614
    %616 = vadd.xlane.f32.xlu0 %v504
    %v617 = vpop.xlane.xlu0 %616
    %618 = vadd.xlane.f32.xlu0 %v505
    %v619 = vpop.xlane.xlu0 %618
    %620 = vadd.xlane.f32.xlu0 %v506
    %v621 = vpop.xlane.xlu0 %620
    %622 = vadd.xlane.f32.xlu0 %v507
    %v623 = vpop.xlane.xlu0 %622
    %624 = vadd.xlane.f32.xlu0 %v508
    %v625 = vpop.xlane.xlu0 %624
    %626 = vadd.xlane.f32.xlu0 %v509
    %v627 = vpop.xlane.xlu0 %626
    %628 = vadd.xlane.f32.xlu0 %v510
    %v629 = vpop.xlane.xlu0 %628
    %630 = vadd.xlane.f32.xlu0 %v511
    %v631 = vpop.xlane.xlu0 %630
    %632 = vadd.xlane.f32.xlu0 %v512
    %v633 = vpop.xlane.xlu0 %632
    %634 = vadd.xlane.f32.xlu0 %v513
    %v635 = vpop.xlane.xlu0 %634
    %636 = vadd.xlane.f32.xlu0 %v514
    %v637 = vpop.xlane.xlu0 %636
    %638 = vadd.xlane.f32.xlu0 %v515
    %v639 = vpop.xlane.xlu0 %638
    %640 = vadd.xlane.f32.xlu0 %v516
    %v641 = vpop.xlane.xlu0 %640
    %642 = vadd.xlane.f32.xlu0 %v517
    %v643 = vpop.xlane.xlu0 %642
    %644 = vadd.xlane.f32.xlu0 %v518
    %v645 = vpop.xlane.xlu0 %644
    %646 = vadd.xlane.f32.xlu0 %v519
    %v647 = vpop.xlane.xlu0 %646
    %v648 = vmul.f32 %v521, %v327
    %v649 = vmul.f32 %v523, %v327
    %v650 = vmul.f32 %v525, %v327
    %v651 = vmul.f32 %v527, %v327
    %v652 = vmul.f32 %v529, %v327
    %v653 = vmul.f32 %v531, %v327
    %v654 = vmul.f32 %v533, %v327
    %v655 = vmul.f32 %v535, %v327
    %v656 = vmul.f32 %v537, %v327
    %v657 = vmul.f32 %v539, %v327
    %v658 = vmul.f32 %v541, %v327
    %v659 = vmul.f32 %v543, %v327
    %v660 = vmul.f32 %v545, %v327
    %v661 = vmul.f32 %v547, %v327
    %v662 = vmul.f32 %v549, %v327
    %v663 = vmul.f32 %v551, %v327
    %v664 = vmul.f32 %v553, %v327
    %v665 = vmul.f32 %v555, %v327
    %v666 = vmul.f32 %v557, %v327
    %v667 = vmul.f32 %v559, %v327
    %v668 = vmul.f32 %v561, %v327
    %v669 = vmul.f32 %v563, %v327
    %v670 = vmul.f32 %v565, %v327
    %v671 = vmul.f32 %v567, %v327
    %v672 = vmul.f32 %v569, %v327
    %v673 = vmul.f32 %v571, %v327
    %v674 = vmul.f32 %v573, %v327
    %v675 = vmul.f32 %v575, %v327
    %v676 = vmul.f32 %v577, %v327
    %v677 = vmul.f32 %v579, %v327
    %v678 = vmul.f32 %v581, %v327
    %v679 = vmul.f32 %v583, %v327
    %v680 = vmul.f32 %v585, %v327
    %v681 = vmul.f32 %v587, %v327
    %v682 = vmul.f32 %v589, %v327
    %v683 = vmul.f32 %v591, %v327
    %v684 = vmul.f32 %v593, %v327
    %v685 = vmul.f32 %v595, %v327
    %v686 = vmul.f32 %v597, %v327
    %v687 = vmul.f32 %v599, %v327
    %v688 = vmul.f32 %v601, %v327
    %v689 = vmul.f32 %v603, %v327
    %v690 = vmul.f32 %v605, %v327
    %v691 = vmul.f32 %v607, %v327
    %v692 = vmul.f32 %v609, %v327
    %v693 = vmul.f32 %v611, %v327
    %v694 = vmul.f32 %v613, %v327
    %v695 = vmul.f32 %v615, %v327
    %v696 = vmul.f32 %v617, %v327
    %v697 = vmul.f32 %v619, %v327
    %v698 = vmul.f32 %v621, %v327
    %v699 = vmul.f32 %v623, %v327
    %v700 = vmul.f32 %v625, %v327
    %v701 = vmul.f32 %v627, %v327
    %v702 = vmul.f32 %v629, %v327
    %v703 = vmul.f32 %v631, %v327
    %v704 = vmul.f32 %v633, %v327
    %v705 = vmul.f32 %v635, %v327
    %v706 = vmul.f32 %v637, %v327
    %v707 = vmul.f32 %v639, %v327
    %v708 = vmul.f32 %v641, %v327
    %v709 = vmul.f32 %v643, %v327
    %v710 = vmul.f32 %v645, %v327
    %v711 = vmul.f32 %v647, %v327
    %v712 = vadd.f32 %v648, 1e-05
    %v713 = vadd.f32 %v649, 1e-05
    %v714 = vadd.f32 %v650, 1e-05
    %v715 = vadd.f32 %v651, 1e-05
    %v716 = vadd.f32 %v652, 1e-05
    %v717 = vadd.f32 %v653, 1e-05
    %v718 = vadd.f32 %v654, 1e-05
    %v719 = vadd.f32 %v655, 1e-05
    %v720 = vadd.f32 %v656, 1e-05
    %v721 = vadd.f32 %v657, 1e-05
    %v722 = vadd.f32 %v658, 1e-05
    %v723 = vadd.f32 %v659, 1e-05
    %v724 = vadd.f32 %v660, 1e-05
    %v725 = vadd.f32 %v661, 1e-05
    %v726 = vadd.f32 %v662, 1e-05
    %v727 = vadd.f32 %v663, 1e-05
    %v728 = vadd.f32 %v664, 1e-05
    %v729 = vadd.f32 %v665, 1e-05
    %v730 = vadd.f32 %v666, 1e-05
    %v731 = vadd.f32 %v667, 1e-05
    %v732 = vadd.f32 %v668, 1e-05
    %v733 = vadd.f32 %v669, 1e-05
    %v734 = vadd.f32 %v670, 1e-05
    %v735 = vadd.f32 %v671, 1e-05
    %v736 = vadd.f32 %v672, 1e-05
    %v737 = vadd.f32 %v673, 1e-05
    %v738 = vadd.f32 %v674, 1e-05
    %v739 = vadd.f32 %v675, 1e-05
    %v740 = vadd.f32 %v676, 1e-05
    %v741 = vadd.f32 %v677, 1e-05
    %v742 = vadd.f32 %v678, 1e-05
    %v743 = vadd.f32 %v679, 1e-05
    %v744 = vadd.f32 %v680, 1e-05
    %v745 = vadd.f32 %v681, 1e-05
    %v746 = vadd.f32 %v682, 1e-05
    %v747 = vadd.f32 %v683, 1e-05
    %v748 = vadd.f32 %v684, 1e-05
    %v749 = vadd.f32 %v685, 1e-05
    %v750 = vadd.f32 %v686, 1e-05
    %v751 = vadd.f32 %v687, 1e-05
    %v752 = vadd.f32 %v688, 1e-05
    %v753 = vadd.f32 %v689, 1e-05
    %v754 = vadd.f32 %v690, 1e-05
    %v755 = vadd.f32 %v691, 1e-05
    %v756 = vadd.f32 %v692, 1e-05
    %v757 = vadd.f32 %v693, 1e-05
    %v758 = vadd.f32 %v694, 1e-05
    %v759 = vadd.f32 %v695, 1e-05
    %v760 = vadd.f32 %v696, 1e-05
    %v761 = vadd.f32 %v697, 1e-05
    %v762 = vadd.f32 %v698, 1e-05
    %v763 = vadd.f32 %v699, 1e-05
    %v764 = vadd.f32 %v700, 1e-05
    %v765 = vadd.f32 %v701, 1e-05
    %v766 = vadd.f32 %v702, 1e-05
    %v767 = vadd.f32 %v703, 1e-05
    %v768 = vadd.f32 %v704, 1e-05
    %v769 = vadd.f32 %v705, 1e-05
    %v770 = vadd.f32 %v706, 1e-05
    %v771 = vadd.f32 %v707, 1e-05
    %v772 = vadd.f32 %v708, 1e-05
    %v773 = vadd.f32 %v709, 1e-05
    %v774 = vadd.f32 %v710, 1e-05
    %v775 = vadd.f32 %v711, 1e-05
    %v776 = vrsqrt.pop %v712
    %v777 = vrsqrt.pop %v713
    %v778 = vrsqrt.pop %v714
    %v779 = vrsqrt.pop %v715
    %v780 = vrsqrt.pop %v716
    %v781 = vrsqrt.pop %v717
    %v782 = vrsqrt.pop %v718
    %v783 = vrsqrt.pop %v719
    %v784 = vrsqrt.pop %v720
    %v785 = vrsqrt.pop %v721
    %v786 = vrsqrt.pop %v722
    %v787 = vrsqrt.pop %v723
    %v788 = vrsqrt.pop %v724
    %v789 = vrsqrt.pop %v725
    %v790 = vrsqrt.pop %v726
    %v791 = vrsqrt.pop %v727
    %v792 = vrsqrt.pop %v728
    %v793 = vrsqrt.pop %v729
    %v794 = vrsqrt.pop %v730
    %v795 = vrsqrt.pop %v731
    %v796 = vrsqrt.pop %v732
    %v797 = vrsqrt.pop %v733
    %v798 = vrsqrt.pop %v734
    %v799 = vrsqrt.pop %v735
    %v800 = vrsqrt.pop %v736
    %v801 = vrsqrt.pop %v737
    %v802 = vrsqrt.pop %v738
    %v803 = vrsqrt.pop %v739
    %v804 = vrsqrt.pop %v740
    %v805 = vrsqrt.pop %v741
    %v806 = vrsqrt.pop %v742
    %v807 = vrsqrt.pop %v743
    %v808 = vrsqrt.pop %v744
    %v809 = vrsqrt.pop %v745
    %v810 = vrsqrt.pop %v746
    %v811 = vrsqrt.pop %v747
    %v812 = vrsqrt.pop %v748
    %v813 = vrsqrt.pop %v749
    %v814 = vrsqrt.pop %v750
    %v815 = vrsqrt.pop %v751
    %v816 = vrsqrt.pop %v752
    %v817 = vrsqrt.pop %v753
    %v818 = vrsqrt.pop %v754
    %v819 = vrsqrt.pop %v755
    %v820 = vrsqrt.pop %v756
    %v821 = vrsqrt.pop %v757
    %v822 = vrsqrt.pop %v758
    %v823 = vrsqrt.pop %v759
    %v824 = vrsqrt.pop %v760
    %v825 = vrsqrt.pop %v761
    %v826 = vrsqrt.pop %v762
    %v827 = vrsqrt.pop %v763
    %v828 = vrsqrt.pop %v764
    %v829 = vrsqrt.pop %v765
    %v830 = vrsqrt.pop %v766
    %v831 = vrsqrt.pop %v767
    %v832 = vrsqrt.pop %v768
    %v833 = vrsqrt.pop %v769
    %v834 = vrsqrt.pop %v770
    %v835 = vrsqrt.pop %v771
    %v836 = vrsqrt.pop %v772
    %v837 = vrsqrt.pop %v773
    %v838 = vrsqrt.pop %v774
    %v839 = vrsqrt.pop %v775
    %v840 = vmul.f32 %v392, %v776
    %v841 = vmul.f32 %v393, %v777
    %v842 = vmul.f32 %v394, %v778
    %v843 = vmul.f32 %v395, %v779
    %v844 = vmul.f32 %v396, %v780
    %v845 = vmul.f32 %v397, %v781
    %v846 = vmul.f32 %v398, %v782
    %v847 = vmul.f32 %v399, %v783
    %v848 = vmul.f32 %v400, %v784
    %v849 = vmul.f32 %v401, %v785
    %v850 = vmul.f32 %v402, %v786
    %v851 = vmul.f32 %v403, %v787
    %v852 = vmul.f32 %v404, %v788
    %v853 = vmul.f32 %v405, %v789
    %v854 = vmul.f32 %v406, %v790
    %v855 = vmul.f32 %v407, %v791
    %v856 = vmul.f32 %v408, %v792
    %v857 = vmul.f32 %v409, %v793
    %v858 = vmul.f32 %v410, %v794
    %v859 = vmul.f32 %v411, %v795
    %v860 = vmul.f32 %v412, %v796
    %v861 = vmul.f32 %v413, %v797
    %v862 = vmul.f32 %v414, %v798
    %v863 = vmul.f32 %v415, %v799
    %v864 = vmul.f32 %v416, %v800
    %v865 = vmul.f32 %v417, %v801
    %v866 = vmul.f32 %v418, %v802
    %v867 = vmul.f32 %v419, %v803
    %v868 = vmul.f32 %v420, %v804
    %v869 = vmul.f32 %v421, %v805
    %v870 = vmul.f32 %v422, %v806
    %v871 = vmul.f32 %v423, %v807
    %v872 = vmul.f32 %v424, %v808
    %v873 = vmul.f32 %v425, %v809
    %v874 = vmul.f32 %v426, %v810
    %v875 = vmul.f32 %v427, %v811
    %v876 = vmul.f32 %v428, %v812
    %v877 = vmul.f32 %v429, %v813
    %v878 = vmul.f32 %v430, %v814
    %v879 = vmul.f32 %v431, %v815
    %v880 = vmul.f32 %v432, %v816
    %v881 = vmul.f32 %v433, %v817
    %v882 = vmul.f32 %v434, %v818
    %v883 = vmul.f32 %v435, %v819
    %v884 = vmul.f32 %v436, %v820
    %v885 = vmul.f32 %v437, %v821
    %v886 = vmul.f32 %v438, %v822
    %v887 = vmul.f32 %v439, %v823
    %v888 = vmul.f32 %v440, %v824
    %v889 = vmul.f32 %v441, %v825
    %v890 = vmul.f32 %v442, %v826
    %v891 = vmul.f32 %v443, %v827
    %v892 = vmul.f32 %v444, %v828
    %v893 = vmul.f32 %v445, %v829
    %v894 = vmul.f32 %v446, %v830
    %v895 = vmul.f32 %v447, %v831
    %v896 = vmul.f32 %v448, %v832
    %v897 = vmul.f32 %v449, %v833
    %v898 = vmul.f32 %v450, %v834
    %v899 = vmul.f32 %v451, %v835
    %v900 = vmul.f32 %v452, %v836
    %v901 = vmul.f32 %v453, %v837
    %v902 = vmul.f32 %v454, %v838
    %v903 = vmul.f32 %v455, %v839
    %v905 = vlaneseq
    %v906 = vshrl.u32 %v905, 7
    %v907 = vsub.s32 0, %v906
    %v908 = vrot.slane %v147, %v907
    %v910 = vmul.f32 %v840, %v908
    %v911 = vmul.f32 %v841, %v908
    %v912 = vmul.f32 %v842, %v908
    %v913 = vmul.f32 %v843, %v908
    %v914 = vmul.f32 %v844, %v908
    %v915 = vmul.f32 %v845, %v908
    %v916 = vmul.f32 %v846, %v908
    %v917 = vmul.f32 %v847, %v908
    %v918 = vmul.f32 %v848, %v908
    %v919 = vmul.f32 %v849, %v908
    %v920 = vmul.f32 %v850, %v908
    %v921 = vmul.f32 %v851, %v908
    %v922 = vmul.f32 %v852, %v908
    %v923 = vmul.f32 %v853, %v908
    %v924 = vmul.f32 %v854, %v908
    %v925 = vmul.f32 %v855, %v908
    %v926 = vmul.f32 %v856, %v908
    %v927 = vmul.f32 %v857, %v908
    %v928 = vmul.f32 %v858, %v908
    %v929 = vmul.f32 %v859, %v908
    %v930 = vmul.f32 %v860, %v908
    %v931 = vmul.f32 %v861, %v908
    %v932 = vmul.f32 %v862, %v908
    %v933 = vmul.f32 %v863, %v908
    %v934 = vmul.f32 %v864, %v908
    %v935 = vmul.f32 %v865, %v908
    %v936 = vmul.f32 %v866, %v908
    %v937 = vmul.f32 %v867, %v908
    %v938 = vmul.f32 %v868, %v908
    %v939 = vmul.f32 %v869, %v908
    %v940 = vmul.f32 %v870, %v908
    %v941 = vmul.f32 %v871, %v908
    %v942 = vmul.f32 %v872, %v908
    %v943 = vmul.f32 %v873, %v908
    %v944 = vmul.f32 %v874, %v908
    %v945 = vmul.f32 %v875, %v908
    %v946 = vmul.f32 %v876, %v908
    %v947 = vmul.f32 %v877, %v908
    %v948 = vmul.f32 %v878, %v908
    %v949 = vmul.f32 %v879, %v908
    %v950 = vmul.f32 %v880, %v908
    %v951 = vmul.f32 %v881, %v908
    %v952 = vmul.f32 %v882, %v908
    %v953 = vmul.f32 %v883, %v908
    %v954 = vmul.f32 %v884, %v908
    %v955 = vmul.f32 %v885, %v908
    %v956 = vmul.f32 %v886, %v908
    %v957 = vmul.f32 %v887, %v908
    %v958 = vmul.f32 %v888, %v908
    %v959 = vmul.f32 %v889, %v908
    %v960 = vmul.f32 %v890, %v908
    %v961 = vmul.f32 %v891, %v908
    %v962 = vmul.f32 %v892, %v908
    %v963 = vmul.f32 %v893, %v908
    %v964 = vmul.f32 %v894, %v908
    %v965 = vmul.f32 %v895, %v908
    %v966 = vmul.f32 %v896, %v908
    %v967 = vmul.f32 %v897, %v908
    %v968 = vmul.f32 %v898, %v908
    %v969 = vmul.f32 %v899, %v908
    %v970 = vmul.f32 %v900, %v908
    %v971 = vmul.f32 %v901, %v908
    %v972 = vmul.f32 %v902, %v908
    %v973 = vmul.f32 %v903, %v908
    %v975 = vlaneseq
    %v976 = vshrl.u32 %v975, 7
    %v977 = vsub.s32 0, %v976
    %v978 = vrot.slane %v148, %v977
    %v980 = vadd.f32 %v910, %v978
    %v981 = vadd.f32 %v911, %v978
    %v982 = vadd.f32 %v912, %v978
    %v983 = vadd.f32 %v913, %v978
    %v984 = vadd.f32 %v914, %v978
    %v985 = vadd.f32 %v915, %v978
    %v986 = vadd.f32 %v916, %v978
    %v987 = vadd.f32 %v917, %v978
    %v988 = vadd.f32 %v918, %v978
    %v989 = vadd.f32 %v919, %v978
    %v990 = vadd.f32 %v920, %v978
    %v991 = vadd.f32 %v921, %v978
    %v992 = vadd.f32 %v922, %v978
    %v993 = vadd.f32 %v923, %v978
    %v994 = vadd.f32 %v924, %v978
    %v995 = vadd.f32 %v925, %v978
    %v996 = vadd.f32 %v926, %v978
    %v997 = vadd.f32 %v927, %v978
    %v998 = vadd.f32 %v928, %v978
    %v999 = vadd.f32 %v929, %v978
    %v1000 = vadd.f32 %v930, %v978
    %v1001 = vadd.f32 %v931, %v978
    %v1002 = vadd.f32 %v932, %v978
    %v1003 = vadd.f32 %v933, %v978
    %v1004 = vadd.f32 %v934, %v978
    %v1005 = vadd.f32 %v935, %v978
    %v1006 = vadd.f32 %v936, %v978
    %v1007 = vadd.f32 %v937, %v978
    %v1008 = vadd.f32 %v938, %v978
    %v1009 = vadd.f32 %v939, %v978
    %v1010 = vadd.f32 %v940, %v978
    %v1011 = vadd.f32 %v941, %v978
    %v1012 = vadd.f32 %v942, %v978
    %v1013 = vadd.f32 %v943, %v978
    %v1014 = vadd.f32 %v944, %v978
    %v1015 = vadd.f32 %v945, %v978
    %v1016 = vadd.f32 %v946, %v978
    %v1017 = vadd.f32 %v947, %v978
    %v1018 = vadd.f32 %v948, %v978
    %v1019 = vadd.f32 %v949, %v978
    %v1020 = vadd.f32 %v950, %v978
    %v1021 = vadd.f32 %v951, %v978
    %v1022 = vadd.f32 %v952, %v978
    %v1023 = vadd.f32 %v953, %v978
    %v1024 = vadd.f32 %v954, %v978
    %v1025 = vadd.f32 %v955, %v978
    %v1026 = vadd.f32 %v956, %v978
    %v1027 = vadd.f32 %v957, %v978
    %v1028 = vadd.f32 %v958, %v978
    %v1029 = vadd.f32 %v959, %v978
    %v1030 = vadd.f32 %v960, %v978
    %v1031 = vadd.f32 %v961, %v978
    %v1032 = vadd.f32 %v962, %v978
    %v1033 = vadd.f32 %v963, %v978
    %v1034 = vadd.f32 %v964, %v978
    %v1035 = vadd.f32 %v965, %v978
    %v1036 = vadd.f32 %v966, %v978
    %v1037 = vadd.f32 %v967, %v978
    %v1038 = vadd.f32 %v968, %v978
    %v1039 = vadd.f32 %v969, %v978
    %v1040 = vadd.f32 %v970, %v978
    %v1041 = vadd.f32 %v971, %v978
    %v1042 = vadd.f32 %v972, %v978
    %v1043 = vadd.f32 %v973, %v978
    %v1044 = vpack.c.bf16 %v981, %v980
    %v1045 = vpack.c.bf16 %v983, %v982
    %v1046 = vpack.c.bf16 %v985, %v984
    %v1047 = vpack.c.bf16 %v987, %v986
    %v1048 = vpack.c.bf16 %v989, %v988
    %v1049 = vpack.c.bf16 %v991, %v990
    %v1050 = vpack.c.bf16 %v993, %v992
    %v1051 = vpack.c.bf16 %v995, %v994
    %v1052 = vpack.c.bf16 %v997, %v996
    %v1053 = vpack.c.bf16 %v999, %v998
    %v1054 = vpack.c.bf16 %v1001, %v1000
    %v1055 = vpack.c.bf16 %v1003, %v1002
    %v1056 = vpack.c.bf16 %v1005, %v1004
    %v1057 = vpack.c.bf16 %v1007, %v1006
    %v1058 = vpack.c.bf16 %v1009, %v1008
    %v1059 = vpack.c.bf16 %v1011, %v1010
    %v1060 = vpack.c.bf16 %v1013, %v1012
    %v1061 = vpack.c.bf16 %v1015, %v1014
    %v1062 = vpack.c.bf16 %v1017, %v1016
    %v1063 = vpack.c.bf16 %v1019, %v1018
    %v1064 = vpack.c.bf16 %v1021, %v1020
    %v1065 = vpack.c.bf16 %v1023, %v1022
    %v1066 = vpack.c.bf16 %v1025, %v1024
    %v1067 = vpack.c.bf16 %v1027, %v1026
    %v1068 = vpack.c.bf16 %v1029, %v1028
    %v1069 = vpack.c.bf16 %v1031, %v1030
    %v1070 = vpack.c.bf16 %v1033, %v1032
    %v1071 = vpack.c.bf16 %v1035, %v1034
    %v1072 = vpack.c.bf16 %v1037, %v1036
    %v1073 = vpack.c.bf16 %v1039, %v1038
    %v1074 = vpack.c.bf16 %v1041, %v1040
    %v1075 = vpack.c.bf16 %v1043, %v1042
    %v1077 = vlaneseq
    %v1078 = vshrl.u32 %v1077, 7
    %v1079 = vsub.s32 0, %v1078
    %v1080 = vrot.slane %v165, %v1079
    %v1081 = vlaneseq
    %v1082 = vshrl.u32 %v1081, 7
    %v1083 = vsub.s32 1, %v1082
    %v1084 = vrot.slane %v165, %v1083
    %v1103 = vunpack.c.l.b16 %v149
    %v1104 = vunpack.c.h.b16 %v149
    %v1105 = vunpack.c.l.b16 %v150
    %v1106 = vunpack.c.h.b16 %v150
    %v1107 = vunpack.c.l.b16 %v151
    %v1108 = vunpack.c.h.b16 %v151
    %v1109 = vunpack.c.l.b16 %v152
    %v1110 = vunpack.c.h.b16 %v152
    %v1111 = vunpack.c.l.b16 %v153
    %v1112 = vunpack.c.h.b16 %v153
    %v1113 = vunpack.c.l.b16 %v154
    %v1114 = vunpack.c.h.b16 %v154
    %v1115 = vunpack.c.l.b16 %v155
    %v1116 = vunpack.c.h.b16 %v155
    %v1117 = vunpack.c.l.b16 %v156
    %v1118 = vunpack.c.h.b16 %v156
    %v1119 = vunpack.c.l.b16 %v157
    %v1120 = vunpack.c.h.b16 %v157
    %v1121 = vunpack.c.l.b16 %v158
    %v1122 = vunpack.c.h.b16 %v158
    %v1123 = vunpack.c.l.b16 %v159
    %v1124 = vunpack.c.h.b16 %v159
    %v1125 = vunpack.c.l.b16 %v160
    %v1126 = vunpack.c.h.b16 %v160
    %v1127 = vunpack.c.l.b16 %v161
    %v1128 = vunpack.c.h.b16 %v161
    %v1129 = vunpack.c.l.b16 %v162
    %v1130 = vunpack.c.h.b16 %v162
    %v1131 = vunpack.c.l.b16 %v163
    %v1132 = vunpack.c.h.b16 %v163
    %v1133 = vunpack.c.l.b16 %v164
    %v1134 = vunpack.c.h.b16 %v164
    %v1135 = vpack.c.b16 %v1105, %v1103
    %v1136 = vpack.c.b16 %v1106, %v1104
    %v1137 = vpack.c.b16 %v1109, %v1107
    %v1138 = vpack.c.b16 %v1110, %v1108
    %v1139 = vpack.c.b16 %v1113, %v1111
    %v1140 = vpack.c.b16 %v1114, %v1112
    %v1141 = vpack.c.b16 %v1117, %v1115
    %v1142 = vpack.c.b16 %v1118, %v1116
    %v1143 = vpack.c.b16 %v1121, %v1119
    %v1144 = vpack.c.b16 %v1122, %v1120
    %v1145 = vpack.c.b16 %v1125, %v1123
    %v1146 = vpack.c.b16 %v1126, %v1124
    %v1147 = vpack.c.b16 %v1129, %v1127
    %v1148 = vpack.c.b16 %v1130, %v1128
    %v1149 = vpack.c.b16 %v1133, %v1131
    %v1150 = vpack.c.b16 %v1134, %v1132
    %1167 = vmatprep.subr.bf16.mxu0 %v1150
    %1168 = vmatpush1.bf16.msra.mxu0 %v1149
    %1169 = vmatprep.subr.bf16.mxu0 %v1148
    %1170 = vmatpush1.bf16.msra.mxu0 %v1147
    %1171 = vmatprep.subr.bf16.mxu0 %v1146
    %1172 = vmatpush1.bf16.msra.mxu0 %v1145
    %1173 = vmatprep.subr.bf16.mxu0 %v1144
    %1174 = vmatpush1.bf16.msra.mxu0 %v1143
    %1175 = vmatprep.subr.bf16.mxu0 %v1142
    %1176 = vmatpush1.bf16.msra.mxu0 %v1141
    %1177 = vmatprep.subr.bf16.mxu0 %v1140
    %1178 = vmatpush1.bf16.msra.mxu0 %v1139
    %1179 = vmatprep.subr.bf16.mxu0 %v1138
    %1180 = vmatpush1.bf16.msra.mxu0 %v1137
    %1181 = vmatprep.subr.bf16.mxu0 %v1136
    %1182 = vmatpush1.bf16.msra.mxu0 %v1135
    %1183 = vmatprep.subr.bf16.mxu0 0
    %1184 = vmatpush2.bf16.msra.mxu0 0
    %1185 = vmatprep.subr.bf16.mxu0 0
    %1186 = vmatpush2.bf16.msra.mxu0 0
    %1187 = vmatprep.subr.bf16.mxu0 0
    %1188 = vmatpush2.bf16.msra.mxu0 0
    %1189 = vmatprep.subr.bf16.mxu0 0
    %1190 = vmatpush2.bf16.msra.mxu0 0
    %1191 = vmatprep.subr.bf16.mxu0 0
    %1192 = vmatpush2.bf16.msra.mxu0 0
    %1193 = vmatprep.subr.bf16.mxu0 0
    %1194 = vmatpush2.bf16.msra.mxu0 0
    %1195 = vmatprep.subr.bf16.mxu0 0
    %1196 = vmatpush2.bf16.msra.mxu0 0
    %1197 = vmatprep.subr.bf16.mxu0 0
    %1198 = vmatpush2.bf16.msra.mxu0 0
    %1199 = vmatprep.mubr.bf16.mxu0 0
    %1200 = vmatmul.mubr.bf16.gmra.mxu0 %v1044
    %v1201 = vpop.f32.mrf.mxu0
    %v1202 = vadd.f32 %v1080, %v1201
    %v1203 = vpop.f32.mrf.mxu0
    %v1204 = vadd.f32 %v1084, %v1203
    %v1205 = vpop.f32.mrf.mxu0
    %v1206 = vadd.f32 %v1080, %v1205
    %v1207 = vpop.f32.mrf.mxu0
    %v1208 = vadd.f32 %v1084, %v1207
    %1209 = vmatprep.mubr.bf16.mxu0 0
    %1210 = vmatmul.mubr.bf16.gmra.mxu0 %v1045
    %v1211 = vpop.f32.mrf.mxu0
    %v1212 = vadd.f32 %v1080, %v1211
    %v1213 = vpop.f32.mrf.mxu0
    %v1214 = vadd.f32 %v1084, %v1213
    %v1215 = vpop.f32.mrf.mxu0
    %v1216 = vadd.f32 %v1080, %v1215
    %v1217 = vpop.f32.mrf.mxu0
    %v1218 = vadd.f32 %v1084, %v1217
    %1219 = vmatprep.mubr.bf16.mxu0 0
    %1220 = vmatmul.mubr.bf16.gmra.mxu0 %v1046
    %v1221 = vpop.f32.mrf.mxu0
    %v1222 = vadd.f32 %v1080, %v1221
    %v1223 = vpop.f32.mrf.mxu0
    %v1224 = vadd.f32 %v1084, %v1223
    %v1225 = vpop.f32.mrf.mxu0
    %v1226 = vadd.f32 %v1080, %v1225
    %v1227 = vpop.f32.mrf.mxu0
    %v1228 = vadd.f32 %v1084, %v1227
    %1229 = vmatprep.mubr.bf16.mxu0 0
    %1230 = vmatmul.mubr.bf16.gmra.mxu0 %v1047
    %v1231 = vpop.f32.mrf.mxu0
    %v1232 = vadd.f32 %v1080, %v1231
    %v1233 = vpop.f32.mrf.mxu0
    %v1234 = vadd.f32 %v1084, %v1233
    %v1235 = vpop.f32.mrf.mxu0
    %v1236 = vadd.f32 %v1080, %v1235
    %v1237 = vpop.f32.mrf.mxu0
    %v1238 = vadd.f32 %v1084, %v1237
    %1239 = vmatprep.mubr.bf16.mxu0 0
    %1240 = vmatmul.mubr.bf16.gmra.mxu0 %v1048
    %v1241 = vpop.f32.mrf.mxu0
    %v1242 = vadd.f32 %v1080, %v1241
    %v1243 = vpop.f32.mrf.mxu0
    %v1244 = vadd.f32 %v1084, %v1243
    %v1245 = vpop.f32.mrf.mxu0
    %v1246 = vadd.f32 %v1080, %v1245
    %v1247 = vpop.f32.mrf.mxu0
    %v1248 = vadd.f32 %v1084, %v1247
    %1249 = vmatprep.mubr.bf16.mxu0 0
    %1250 = vmatmul.mubr.bf16.gmra.mxu0 %v1049
    %v1251 = vpop.f32.mrf.mxu0
    %v1252 = vadd.f32 %v1080, %v1251
    %v1253 = vpop.f32.mrf.mxu0
    %v1254 = vadd.f32 %v1084, %v1253
    %v1255 = vpop.f32.mrf.mxu0
    %v1256 = vadd.f32 %v1080, %v1255
    %v1257 = vpop.f32.mrf.mxu0
    %v1258 = vadd.f32 %v1084, %v1257
    %1259 = vmatprep.mubr.bf16.mxu0 0
    %1260 = vmatmul.mubr.bf16.gmra.mxu0 %v1050
    %v1261 = vpop.f32.mrf.mxu0
    %v1262 = vadd.f32 %v1080, %v1261
    %v1263 = vpop.f32.mrf.mxu0
    %v1264 = vadd.f32 %v1084, %v1263
    %v1265 = vpop.f32.mrf.mxu0
    %v1266 = vadd.f32 %v1080, %v1265
    %v1267 = vpop.f32.mrf.mxu0
    %v1268 = vadd.f32 %v1084, %v1267
    %1269 = vmatprep.mubr.bf16.mxu0 0
    %1270 = vmatmul.mubr.bf16.gmra.mxu0 %v1051
    %v1271 = vpop.f32.mrf.mxu0
    %v1272 = vadd.f32 %v1080, %v1271
    %v1273 = vpop.f32.mrf.mxu0
    %v1274 = vadd.f32 %v1084, %v1273
    %v1275 = vpop.f32.mrf.mxu0
    %v1276 = vadd.f32 %v1080, %v1275
    %v1277 = vpop.f32.mrf.mxu0
    %v1278 = vadd.f32 %v1084, %v1277
    %1279 = vmatprep.mubr.bf16.mxu0 0
    %1280 = vmatmul.mubr.bf16.gmra.mxu0 %v1052
    %v1281 = vpop.f32.mrf.mxu0
    %v1282 = vadd.f32 %v1080, %v1281
    %v1283 = vpop.f32.mrf.mxu0
    %v1284 = vadd.f32 %v1084, %v1283
    %v1285 = vpop.f32.mrf.mxu0
    %v1286 = vadd.f32 %v1080, %v1285
    %v1287 = vpop.f32.mrf.mxu0
    %v1288 = vadd.f32 %v1084, %v1287
    %1289 = vmatprep.mubr.bf16.mxu0 0
    %1290 = vmatmul.mubr.bf16.gmra.mxu0 %v1053
    %v1291 = vpop.f32.mrf.mxu0
    %v1292 = vadd.f32 %v1080, %v1291
    %v1293 = vpop.f32.mrf.mxu0
    %v1294 = vadd.f32 %v1084, %v1293
    %v1295 = vpop.f32.mrf.mxu0
    %v1296 = vadd.f32 %v1080, %v1295
    %v1297 = vpop.f32.mrf.mxu0
    %v1298 = vadd.f32 %v1084, %v1297
    %1299 = vmatprep.mubr.bf16.mxu0 0
    %1300 = vmatmul.mubr.bf16.gmra.mxu0 %v1054
    %v1301 = vpop.f32.mrf.mxu0
    %v1302 = vadd.f32 %v1080, %v1301
    %v1303 = vpop.f32.mrf.mxu0
    %v1304 = vadd.f32 %v1084, %v1303
    %v1305 = vpop.f32.mrf.mxu0
    %v1306 = vadd.f32 %v1080, %v1305
    %v1307 = vpop.f32.mrf.mxu0
    %v1308 = vadd.f32 %v1084, %v1307
    %1309 = vmatprep.mubr.bf16.mxu0 0
    %1310 = vmatmul.mubr.bf16.gmra.mxu0 %v1055
    %v1311 = vpop.f32.mrf.mxu0
    %v1312 = vadd.f32 %v1080, %v1311
    %v1313 = vpop.f32.mrf.mxu0
    %v1314 = vadd.f32 %v1084, %v1313
    %v1315 = vpop.f32.mrf.mxu0
    %v1316 = vadd.f32 %v1080, %v1315
    %v1317 = vpop.f32.mrf.mxu0
    %v1318 = vadd.f32 %v1084, %v1317
    %1319 = vmatprep.mubr.bf16.mxu0 0
    %1320 = vmatmul.mubr.bf16.gmra.mxu0 %v1056
    %v1321 = vpop.f32.mrf.mxu0
    %v1322 = vadd.f32 %v1080, %v1321
    %v1323 = vpop.f32.mrf.mxu0
    %v1324 = vadd.f32 %v1084, %v1323
    %v1325 = vpop.f32.mrf.mxu0
    %v1326 = vadd.f32 %v1080, %v1325
    %v1327 = vpop.f32.mrf.mxu0
    %v1328 = vadd.f32 %v1084, %v1327
    %1329 = vmatprep.mubr.bf16.mxu0 0
    %1330 = vmatmul.mubr.bf16.gmra.mxu0 %v1057
    %v1331 = vpop.f32.mrf.mxu0
    %v1332 = vadd.f32 %v1080, %v1331
    %v1333 = vpop.f32.mrf.mxu0
    %v1334 = vadd.f32 %v1084, %v1333
    %v1335 = vpop.f32.mrf.mxu0
    %v1336 = vadd.f32 %v1080, %v1335
    %v1337 = vpop.f32.mrf.mxu0
    %v1338 = vadd.f32 %v1084, %v1337
    %1339 = vmatprep.mubr.bf16.mxu0 0
    %1340 = vmatmul.mubr.bf16.gmra.mxu0 %v1058
    %v1341 = vpop.f32.mrf.mxu0
    %v1342 = vadd.f32 %v1080, %v1341
    %v1343 = vpop.f32.mrf.mxu0
    %v1344 = vadd.f32 %v1084, %v1343
    %v1345 = vpop.f32.mrf.mxu0
    %v1346 = vadd.f32 %v1080, %v1345
    %v1347 = vpop.f32.mrf.mxu0
    %v1348 = vadd.f32 %v1084, %v1347
    %1349 = vmatprep.mubr.bf16.mxu0 0
    %1350 = vmatmul.mubr.bf16.gmra.mxu0 %v1059
    %v1351 = vpop.f32.mrf.mxu0
    %v1352 = vadd.f32 %v1080, %v1351
    %v1353 = vpop.f32.mrf.mxu0
    %v1354 = vadd.f32 %v1084, %v1353
    %v1355 = vpop.f32.mrf.mxu0
    %v1356 = vadd.f32 %v1080, %v1355
    %v1357 = vpop.f32.mrf.mxu0
    %v1358 = vadd.f32 %v1084, %v1357
    %1359 = vmatprep.mubr.bf16.mxu0 0
    %1360 = vmatmul.mubr.bf16.gmra.mxu0 %v1060
    %v1361 = vpop.f32.mrf.mxu0
    %v1362 = vadd.f32 %v1080, %v1361
    %v1363 = vpop.f32.mrf.mxu0
    %v1364 = vadd.f32 %v1084, %v1363
    %v1365 = vpop.f32.mrf.mxu0
    %v1366 = vadd.f32 %v1080, %v1365
    %v1367 = vpop.f32.mrf.mxu0
    %v1368 = vadd.f32 %v1084, %v1367
    %1369 = vmatprep.mubr.bf16.mxu0 0
    %1370 = vmatmul.mubr.bf16.gmra.mxu0 %v1061
    %v1371 = vpop.f32.mrf.mxu0
    %v1372 = vadd.f32 %v1080, %v1371
    %v1373 = vpop.f32.mrf.mxu0
    %v1374 = vadd.f32 %v1084, %v1373
    %v1375 = vpop.f32.mrf.mxu0
    %v1376 = vadd.f32 %v1080, %v1375
    %v1377 = vpop.f32.mrf.mxu0
    %v1378 = vadd.f32 %v1084, %v1377
    %1379 = vmatprep.mubr.bf16.mxu0 0
    %1380 = vmatmul.mubr.bf16.gmra.mxu0 %v1062
    %v1381 = vpop.f32.mrf.mxu0
    %v1382 = vadd.f32 %v1080, %v1381
    %v1383 = vpop.f32.mrf.mxu0
    %v1384 = vadd.f32 %v1084, %v1383
    %v1385 = vpop.f32.mrf.mxu0
    %v1386 = vadd.f32 %v1080, %v1385
    %v1387 = vpop.f32.mrf.mxu0
    %v1388 = vadd.f32 %v1084, %v1387
    %1389 = vmatprep.mubr.bf16.mxu0 0
    %1390 = vmatmul.mubr.bf16.gmra.mxu0 %v1063
    %v1391 = vpop.f32.mrf.mxu0
    %v1392 = vadd.f32 %v1080, %v1391
    %v1393 = vpop.f32.mrf.mxu0
    %v1394 = vadd.f32 %v1084, %v1393
    %v1395 = vpop.f32.mrf.mxu0
    %v1396 = vadd.f32 %v1080, %v1395
    %v1397 = vpop.f32.mrf.mxu0
    %v1398 = vadd.f32 %v1084, %v1397
    %1399 = vmatprep.mubr.bf16.mxu0 0
    %1400 = vmatmul.mubr.bf16.gmra.mxu0 %v1064
    %v1401 = vpop.f32.mrf.mxu0
    %v1402 = vadd.f32 %v1080, %v1401
    %v1403 = vpop.f32.mrf.mxu0
    %v1404 = vadd.f32 %v1084, %v1403
    %v1405 = vpop.f32.mrf.mxu0
    %v1406 = vadd.f32 %v1080, %v1405
    %v1407 = vpop.f32.mrf.mxu0
    %v1408 = vadd.f32 %v1084, %v1407
    %1409 = vmatprep.mubr.bf16.mxu0 0
    %1410 = vmatmul.mubr.bf16.gmra.mxu0 %v1065
    %v1411 = vpop.f32.mrf.mxu0
    %v1412 = vadd.f32 %v1080, %v1411
    %v1413 = vpop.f32.mrf.mxu0
    %v1414 = vadd.f32 %v1084, %v1413
    %v1415 = vpop.f32.mrf.mxu0
    %v1416 = vadd.f32 %v1080, %v1415
    %v1417 = vpop.f32.mrf.mxu0
    %v1418 = vadd.f32 %v1084, %v1417
    %1419 = vmatprep.mubr.bf16.mxu0 0
    %1420 = vmatmul.mubr.bf16.gmra.mxu0 %v1066
    %v1421 = vpop.f32.mrf.mxu0
    %v1422 = vadd.f32 %v1080, %v1421
    %v1423 = vpop.f32.mrf.mxu0
    %v1424 = vadd.f32 %v1084, %v1423
    %v1425 = vpop.f32.mrf.mxu0
    %v1426 = vadd.f32 %v1080, %v1425
    %v1427 = vpop.f32.mrf.mxu0
    %v1428 = vadd.f32 %v1084, %v1427
    %1429 = vmatprep.mubr.bf16.mxu0 0
    %1430 = vmatmul.mubr.bf16.gmra.mxu0 %v1067
    %v1431 = vpop.f32.mrf.mxu0
    %v1432 = vadd.f32 %v1080, %v1431
    %v1433 = vpop.f32.mrf.mxu0
    %v1434 = vadd.f32 %v1084, %v1433
    %v1435 = vpop.f32.mrf.mxu0
    %v1436 = vadd.f32 %v1080, %v1435
    %v1437 = vpop.f32.mrf.mxu0
    %v1438 = vadd.f32 %v1084, %v1437
    %1439 = vmatprep.mubr.bf16.mxu0 0
    %1440 = vmatmul.mubr.bf16.gmra.mxu0 %v1068
    %v1441 = vpop.f32.mrf.mxu0
    %v1442 = vadd.f32 %v1080, %v1441
    %v1443 = vpop.f32.mrf.mxu0
    %v1444 = vadd.f32 %v1084, %v1443
    %v1445 = vpop.f32.mrf.mxu0
    %v1446 = vadd.f32 %v1080, %v1445
    %v1447 = vpop.f32.mrf.mxu0
    %v1448 = vadd.f32 %v1084, %v1447
    %1449 = vmatprep.mubr.bf16.mxu0 0
    %1450 = vmatmul.mubr.bf16.gmra.mxu0 %v1069
    %v1451 = vpop.f32.mrf.mxu0
    %v1452 = vadd.f32 %v1080, %v1451
    %v1453 = vpop.f32.mrf.mxu0
    %v1454 = vadd.f32 %v1084, %v1453
    %v1455 = vpop.f32.mrf.mxu0
    %v1456 = vadd.f32 %v1080, %v1455
    %v1457 = vpop.f32.mrf.mxu0
    %v1458 = vadd.f32 %v1084, %v1457
    %1459 = vmatprep.mubr.bf16.mxu0 0
    %1460 = vmatmul.mubr.bf16.gmra.mxu0 %v1070
    %v1461 = vpop.f32.mrf.mxu0
    %v1462 = vadd.f32 %v1080, %v1461
    %v1463 = vpop.f32.mrf.mxu0
    %v1464 = vadd.f32 %v1084, %v1463
    %v1465 = vpop.f32.mrf.mxu0
    %v1466 = vadd.f32 %v1080, %v1465
    %v1467 = vpop.f32.mrf.mxu0
    %v1468 = vadd.f32 %v1084, %v1467
    %1469 = vmatprep.mubr.bf16.mxu0 0
    %1470 = vmatmul.mubr.bf16.gmra.mxu0 %v1071
    %v1471 = vpop.f32.mrf.mxu0
    %v1472 = vadd.f32 %v1080, %v1471
    %v1473 = vpop.f32.mrf.mxu0
    %v1474 = vadd.f32 %v1084, %v1473
    %v1475 = vpop.f32.mrf.mxu0
    %v1476 = vadd.f32 %v1080, %v1475
    %v1477 = vpop.f32.mrf.mxu0
    %v1478 = vadd.f32 %v1084, %v1477
    %1479 = vmatprep.mubr.bf16.mxu0 0
    %1480 = vmatmul.mubr.bf16.gmra.mxu0 %v1072
    %v1481 = vpop.f32.mrf.mxu0
    %v1482 = vadd.f32 %v1080, %v1481
    %v1483 = vpop.f32.mrf.mxu0
    %v1484 = vadd.f32 %v1084, %v1483
    %v1485 = vpop.f32.mrf.mxu0
    %v1486 = vadd.f32 %v1080, %v1485
    %v1487 = vpop.f32.mrf.mxu0
    %v1488 = vadd.f32 %v1084, %v1487
    %1489 = vmatprep.mubr.bf16.mxu0 0
    %1490 = vmatmul.mubr.bf16.gmra.mxu0 %v1073
    %v1491 = vpop.f32.mrf.mxu0
    %v1492 = vadd.f32 %v1080, %v1491
    %v1493 = vpop.f32.mrf.mxu0
    %v1494 = vadd.f32 %v1084, %v1493
    %v1495 = vpop.f32.mrf.mxu0
    %v1496 = vadd.f32 %v1080, %v1495
    %v1497 = vpop.f32.mrf.mxu0
    %v1498 = vadd.f32 %v1084, %v1497
    %1499 = vmatprep.mubr.bf16.mxu0 0
    %1500 = vmatmul.mubr.bf16.gmra.mxu0 %v1074
    %v1501 = vpop.f32.mrf.mxu0
    %v1502 = vadd.f32 %v1080, %v1501
    %v1503 = vpop.f32.mrf.mxu0
    %v1504 = vadd.f32 %v1084, %v1503
    %v1505 = vpop.f32.mrf.mxu0
    %v1506 = vadd.f32 %v1080, %v1505
    %v1507 = vpop.f32.mrf.mxu0
    %v1508 = vadd.f32 %v1084, %v1507
    %1509 = vmatprep.mubr.bf16.mxu0 0
    %1510 = vmatmul.mubr.bf16.gmra.mxu0 %v1075
    %v1511 = vpop.f32.mrf.mxu0
    %v1512 = vadd.f32 %v1080, %v1511
    %v1513 = vpop.f32.mrf.mxu0
    %v1514 = vadd.f32 %v1084, %v1513
    %v1515 = vpop.f32.mrf.mxu0
    %v1516 = vadd.f32 %v1080, %v1515
    %v1517 = vpop.f32.mrf.mxu0
    %v1518 = vadd.f32 %v1084, %v1517
    %1519 = vdwg.mxu0
    %v1520 = vmax.f32 %v1202, 0.0
    %v1521 = vmax.f32 %v1204, 0.0
    %v1522 = vmax.f32 %v1206, 0.0
    %v1523 = vmax.f32 %v1208, 0.0
    %v1524 = vmax.f32 %v1212, 0.0
    %v1525 = vmax.f32 %v1214, 0.0
    %v1526 = vmax.f32 %v1216, 0.0
    %v1527 = vmax.f32 %v1218, 0.0
    %v1528 = vmax.f32 %v1222, 0.0
    %v1529 = vmax.f32 %v1224, 0.0
    %v1530 = vmax.f32 %v1226, 0.0
    %v1531 = vmax.f32 %v1228, 0.0
    %v1532 = vmax.f32 %v1232, 0.0
    %v1533 = vmax.f32 %v1234, 0.0
    %v1534 = vmax.f32 %v1236, 0.0
    %v1535 = vmax.f32 %v1238, 0.0
    %v1536 = vmax.f32 %v1242, 0.0
    %v1537 = vmax.f32 %v1244, 0.0
    %v1538 = vmax.f32 %v1246, 0.0
    %v1539 = vmax.f32 %v1248, 0.0
    %v1540 = vmax.f32 %v1252, 0.0
    %v1541 = vmax.f32 %v1254, 0.0
    %v1542 = vmax.f32 %v1256, 0.0
    %v1543 = vmax.f32 %v1258, 0.0
    %v1544 = vmax.f32 %v1262, 0.0
    %v1545 = vmax.f32 %v1264, 0.0
    %v1546 = vmax.f32 %v1266, 0.0
    %v1547 = vmax.f32 %v1268, 0.0
    %v1548 = vmax.f32 %v1272, 0.0
    %v1549 = vmax.f32 %v1274, 0.0
    %v1550 = vmax.f32 %v1276, 0.0
    %v1551 = vmax.f32 %v1278, 0.0
    %v1552 = vmax.f32 %v1282, 0.0
    %v1553 = vmax.f32 %v1284, 0.0
    %v1554 = vmax.f32 %v1286, 0.0
    %v1555 = vmax.f32 %v1288, 0.0
    %v1556 = vmax.f32 %v1292, 0.0
    %v1557 = vmax.f32 %v1294, 0.0
    %v1558 = vmax.f32 %v1296, 0.0
    %v1559 = vmax.f32 %v1298, 0.0
    %v1560 = vmax.f32 %v1302, 0.0
    %v1561 = vmax.f32 %v1304, 0.0
    %v1562 = vmax.f32 %v1306, 0.0
    %v1563 = vmax.f32 %v1308, 0.0
    %v1564 = vmax.f32 %v1312, 0.0
    %v1565 = vmax.f32 %v1314, 0.0
    %v1566 = vmax.f32 %v1316, 0.0
    %v1567 = vmax.f32 %v1318, 0.0
    %v1568 = vmax.f32 %v1322, 0.0
    %v1569 = vmax.f32 %v1324, 0.0
    %v1570 = vmax.f32 %v1326, 0.0
    %v1571 = vmax.f32 %v1328, 0.0
    %v1572 = vmax.f32 %v1332, 0.0
    %v1573 = vmax.f32 %v1334, 0.0
    %v1574 = vmax.f32 %v1336, 0.0
    %v1575 = vmax.f32 %v1338, 0.0
    %v1576 = vmax.f32 %v1342, 0.0
    %v1577 = vmax.f32 %v1344, 0.0
    %v1578 = vmax.f32 %v1346, 0.0
    %v1579 = vmax.f32 %v1348, 0.0
    %v1580 = vmax.f32 %v1352, 0.0
    %v1581 = vmax.f32 %v1354, 0.0
    %v1582 = vmax.f32 %v1356, 0.0
    %v1583 = vmax.f32 %v1358, 0.0
    %v1584 = vmax.f32 %v1362, 0.0
    %v1585 = vmax.f32 %v1364, 0.0
    %v1586 = vmax.f32 %v1366, 0.0
    %v1587 = vmax.f32 %v1368, 0.0
    %v1588 = vmax.f32 %v1372, 0.0
    %v1589 = vmax.f32 %v1374, 0.0
    %v1590 = vmax.f32 %v1376, 0.0
    %v1591 = vmax.f32 %v1378, 0.0
    %v1592 = vmax.f32 %v1382, 0.0
    %v1593 = vmax.f32 %v1384, 0.0
    %v1594 = vmax.f32 %v1386, 0.0
    %v1595 = vmax.f32 %v1388, 0.0
    %v1596 = vmax.f32 %v1392, 0.0
    %v1597 = vmax.f32 %v1394, 0.0
    %v1598 = vmax.f32 %v1396, 0.0
    %v1599 = vmax.f32 %v1398, 0.0
    %v1600 = vmax.f32 %v1402, 0.0
    %v1601 = vmax.f32 %v1404, 0.0
    %v1602 = vmax.f32 %v1406, 0.0
    %v1603 = vmax.f32 %v1408, 0.0
    %v1604 = vmax.f32 %v1412, 0.0
    %v1605 = vmax.f32 %v1414, 0.0
    %v1606 = vmax.f32 %v1416, 0.0
    %v1607 = vmax.f32 %v1418, 0.0
    %v1608 = vmax.f32 %v1422, 0.0
    %v1609 = vmax.f32 %v1424, 0.0
    %v1610 = vmax.f32 %v1426, 0.0
    %v1611 = vmax.f32 %v1428, 0.0
    %v1612 = vmax.f32 %v1432, 0.0
    %v1613 = vmax.f32 %v1434, 0.0
    %v1614 = vmax.f32 %v1436, 0.0
    %v1615 = vmax.f32 %v1438, 0.0
    %v1616 = vmax.f32 %v1442, 0.0
    %v1617 = vmax.f32 %v1444, 0.0
    %v1618 = vmax.f32 %v1446, 0.0
    %v1619 = vmax.f32 %v1448, 0.0
    %v1620 = vmax.f32 %v1452, 0.0
    %v1621 = vmax.f32 %v1454, 0.0
    %v1622 = vmax.f32 %v1456, 0.0
    %v1623 = vmax.f32 %v1458, 0.0
    %v1624 = vmax.f32 %v1462, 0.0
    %v1625 = vmax.f32 %v1464, 0.0
    %v1626 = vmax.f32 %v1466, 0.0
    %v1627 = vmax.f32 %v1468, 0.0
    %v1628 = vmax.f32 %v1472, 0.0
    %v1629 = vmax.f32 %v1474, 0.0
    %v1630 = vmax.f32 %v1476, 0.0
    %v1631 = vmax.f32 %v1478, 0.0
    %v1632 = vmax.f32 %v1482, 0.0
    %v1633 = vmax.f32 %v1484, 0.0
    %v1634 = vmax.f32 %v1486, 0.0
    %v1635 = vmax.f32 %v1488, 0.0
    %v1636 = vmax.f32 %v1492, 0.0
    %v1637 = vmax.f32 %v1494, 0.0
    %v1638 = vmax.f32 %v1496, 0.0
    %v1639 = vmax.f32 %v1498, 0.0
    %v1640 = vmax.f32 %v1502, 0.0
    %v1641 = vmax.f32 %v1504, 0.0
    %v1642 = vmax.f32 %v1506, 0.0
    %v1643 = vmax.f32 %v1508, 0.0
    %v1644 = vmax.f32 %v1512, 0.0
    %v1645 = vmax.f32 %v1514, 0.0
    %v1646 = vmax.f32 %v1516, 0.0
    %v1647 = vmax.f32 %v1518, 0.0
    %v1648 = vpack.c.bf16 %v1522, %v1520
    %v1649 = vpack.c.bf16 %v1523, %v1521
    %v1650 = vpack.c.bf16 %v1526, %v1524
    %v1651 = vpack.c.bf16 %v1527, %v1525
    %v1652 = vpack.c.bf16 %v1530, %v1528
    %v1653 = vpack.c.bf16 %v1531, %v1529
    %v1654 = vpack.c.bf16 %v1534, %v1532
    %v1655 = vpack.c.bf16 %v1535, %v1533
    %v1656 = vpack.c.bf16 %v1538, %v1536
    %v1657 = vpack.c.bf16 %v1539, %v1537
    %v1658 = vpack.c.bf16 %v1542, %v1540
    %v1659 = vpack.c.bf16 %v1543, %v1541
    %v1660 = vpack.c.bf16 %v1546, %v1544
    %v1661 = vpack.c.bf16 %v1547, %v1545
    %v1662 = vpack.c.bf16 %v1550, %v1548
    %v1663 = vpack.c.bf16 %v1551, %v1549
    %v1664 = vpack.c.bf16 %v1554, %v1552
    %v1665 = vpack.c.bf16 %v1555, %v1553
    %v1666 = vpack.c.bf16 %v1558, %v1556
    %v1667 = vpack.c.bf16 %v1559, %v1557
    %v1668 = vpack.c.bf16 %v1562, %v1560
    %v1669 = vpack.c.bf16 %v1563, %v1561
    %v1670 = vpack.c.bf16 %v1566, %v1564
    %v1671 = vpack.c.bf16 %v1567, %v1565
    %v1672 = vpack.c.bf16 %v1570, %v1568
    %v1673 = vpack.c.bf16 %v1571, %v1569
    %v1674 = vpack.c.bf16 %v1574, %v1572
    %v1675 = vpack.c.bf16 %v1575, %v1573
    %v1676 = vpack.c.bf16 %v1578, %v1576
    %v1677 = vpack.c.bf16 %v1579, %v1577
    %v1678 = vpack.c.bf16 %v1582, %v1580
    %v1679 = vpack.c.bf16 %v1583, %v1581
    %v1680 = vpack.c.bf16 %v1586, %v1584
    %v1681 = vpack.c.bf16 %v1587, %v1585
    %v1682 = vpack.c.bf16 %v1590, %v1588
    %v1683 = vpack.c.bf16 %v1591, %v1589
    %v1684 = vpack.c.bf16 %v1594, %v1592
    %v1685 = vpack.c.bf16 %v1595, %v1593
    %v1686 = vpack.c.bf16 %v1598, %v1596
    %v1687 = vpack.c.bf16 %v1599, %v1597
    %v1688 = vpack.c.bf16 %v1602, %v1600
    %v1689 = vpack.c.bf16 %v1603, %v1601
    %v1690 = vpack.c.bf16 %v1606, %v1604
    %v1691 = vpack.c.bf16 %v1607, %v1605
    %v1692 = vpack.c.bf16 %v1610, %v1608
    %v1693 = vpack.c.bf16 %v1611, %v1609
    %v1694 = vpack.c.bf16 %v1614, %v1612
    %v1695 = vpack.c.bf16 %v1615, %v1613
    %v1696 = vpack.c.bf16 %v1618, %v1616
    %v1697 = vpack.c.bf16 %v1619, %v1617
    %v1698 = vpack.c.bf16 %v1622, %v1620
    %v1699 = vpack.c.bf16 %v1623, %v1621
    %v1700 = vpack.c.bf16 %v1626, %v1624
    %v1701 = vpack.c.bf16 %v1627, %v1625
    %v1702 = vpack.c.bf16 %v1630, %v1628
    %v1703 = vpack.c.bf16 %v1631, %v1629
    %v1704 = vpack.c.bf16 %v1634, %v1632
    %v1705 = vpack.c.bf16 %v1635, %v1633
    %v1706 = vpack.c.bf16 %v1638, %v1636
    %v1707 = vpack.c.bf16 %v1639, %v1637
    %v1708 = vpack.c.bf16 %v1642, %v1640
    %v1709 = vpack.c.bf16 %v1643, %v1641
    %v1710 = vpack.c.bf16 %v1646, %v1644
    %v1711 = vpack.c.bf16 %v1647, %v1645
    %v1744 = vunpack.c.l.b16 %v166
    %v1745 = vunpack.c.l.b16 %v167
    %v1746 = vunpack.c.l.b16 %v168
    %v1747 = vunpack.c.l.b16 %v169
    %v1748 = vunpack.c.l.b16 %v170
    %v1749 = vunpack.c.l.b16 %v171
    %v1750 = vunpack.c.l.b16 %v172
    %v1751 = vunpack.c.l.b16 %v173
    %v1752 = vunpack.c.l.b16 %v174
    %v1753 = vunpack.c.l.b16 %v175
    %v1754 = vunpack.c.l.b16 %v176
    %v1755 = vunpack.c.l.b16 %v177
    %v1756 = vunpack.c.l.b16 %v178
    %v1757 = vunpack.c.l.b16 %v179
    %v1758 = vunpack.c.l.b16 %v180
    %v1759 = vunpack.c.l.b16 %v181
    %v1760 = vunpack.c.l.b16 %v182
    %v1761 = vunpack.c.l.b16 %v183
    %v1762 = vunpack.c.l.b16 %v184
    %v1763 = vunpack.c.l.b16 %v185
    %v1764 = vunpack.c.l.b16 %v186
    %v1765 = vunpack.c.l.b16 %v187
    %v1766 = vunpack.c.l.b16 %v188
    %v1767 = vunpack.c.l.b16 %v189
    %v1768 = vunpack.c.l.b16 %v190
    %v1769 = vunpack.c.l.b16 %v191
    %v1770 = vunpack.c.l.b16 %v192
    %v1771 = vunpack.c.l.b16 %v193
    %v1772 = vunpack.c.l.b16 %v194
    %v1773 = vunpack.c.l.b16 %v195
    %v1774 = vunpack.c.l.b16 %v196
    %v1775 = vunpack.c.l.b16 %v197
    %v1776 = vpack.c.b16 %v1745, %v1744
    %v1777 = vpack.c.b16 %v1747, %v1746
    %v1778 = vpack.c.b16 %v1749, %v1748
    %v1779 = vpack.c.b16 %v1751, %v1750
    %v1780 = vpack.c.b16 %v1753, %v1752
    %v1781 = vpack.c.b16 %v1755, %v1754
    %v1782 = vpack.c.b16 %v1757, %v1756
    %v1783 = vpack.c.b16 %v1759, %v1758
    %v1784 = vpack.c.b16 %v1761, %v1760
    %v1785 = vpack.c.b16 %v1763, %v1762
    %v1786 = vpack.c.b16 %v1765, %v1764
    %v1787 = vpack.c.b16 %v1767, %v1766
    %v1788 = vpack.c.b16 %v1769, %v1768
    %v1789 = vpack.c.b16 %v1771, %v1770
    %v1790 = vpack.c.b16 %v1773, %v1772
    %v1791 = vpack.c.b16 %v1775, %v1774
    %1808 = vmatprep.subr.bf16.mxu0 0
    %1809 = vmatpush1.bf16.msra.mxu0 %v1783
    %1810 = vmatprep.subr.bf16.mxu0 0
    %1811 = vmatpush1.bf16.msra.mxu0 %v1782
    %1812 = vmatprep.subr.bf16.mxu0 0
    %1813 = vmatpush1.bf16.msra.mxu0 %v1781
    %1814 = vmatprep.subr.bf16.mxu0 0
    %1815 = vmatpush1.bf16.msra.mxu0 %v1780
    %1816 = vmatprep.subr.bf16.mxu0 0
    %1817 = vmatpush1.bf16.msra.mxu0 %v1779
    %1818 = vmatprep.subr.bf16.mxu0 0
    %1819 = vmatpush1.bf16.msra.mxu0 %v1778
    %1820 = vmatprep.subr.bf16.mxu0 0
    %1821 = vmatpush1.bf16.msra.mxu0 %v1777
    %1822 = vmatprep.subr.bf16.mxu0 0
    %1823 = vmatpush1.bf16.msra.mxu0 %v1776
    %1824 = vmatprep.subr.bf16.mxu0 0
    %1825 = vmatpush2.bf16.msra.mxu0 %v1791
    %1826 = vmatprep.subr.bf16.mxu0 0
    %1827 = vmatpush2.bf16.msra.mxu0 %v1790
    %1828 = vmatprep.subr.bf16.mxu0 0
    %1829 = vmatpush2.bf16.msra.mxu0 %v1789
    %1830 = vmatprep.subr.bf16.mxu0 0
    %1831 = vmatpush2.bf16.msra.mxu0 %v1788
    %1832 = vmatprep.subr.bf16.mxu0 0
    %1833 = vmatpush2.bf16.msra.mxu0 %v1787
    %1834 = vmatprep.subr.bf16.mxu0 0
    %1835 = vmatpush2.bf16.msra.mxu0 %v1786
    %1836 = vmatprep.subr.bf16.mxu0 0
    %1837 = vmatpush2.bf16.msra.mxu0 %v1785
    %1838 = vmatprep.subr.bf16.mxu0 0
    %1839 = vmatpush2.bf16.msra.mxu0 %v1784
    %1840 = vmatprep.mubr.bf16.mxu0 %v1649
    %1841 = vmatmul.mubr.bf16.gmra.mxu0 %v1648
    %v1842 = vpop.f32.mrf.mxu0
    %v1843 = vadd.f32 0.0, %v1842
    %v1844 = vpop.f32.mrf.mxu0
    %v1845 = vpop.f32.mrf.mxu0
    %v1846 = vadd.f32 0.0, %v1845
    %v1847 = vpop.f32.mrf.mxu0
    %1848 = vmatprep.mubr.bf16.mxu0 %v1651
    %1849 = vmatmul.mubr.bf16.gmra.mxu0 %v1650
    %v1850 = vpop.f32.mrf.mxu0
    %v1851 = vadd.f32 0.0, %v1850
    %v1852 = vpop.f32.mrf.mxu0
    %v1853 = vpop.f32.mrf.mxu0
    %v1854 = vadd.f32 0.0, %v1853
    %v1855 = vpop.f32.mrf.mxu0
    %1856 = vmatprep.mubr.bf16.mxu0 %v1653
    %1857 = vmatmul.mubr.bf16.gmra.mxu0 %v1652
    %v1858 = vpop.f32.mrf.mxu0
    %v1859 = vadd.f32 0.0, %v1858
    %v1860 = vpop.f32.mrf.mxu0
    %v1861 = vpop.f32.mrf.mxu0
    %v1862 = vadd.f32 0.0, %v1861
    %v1863 = vpop.f32.mrf.mxu0
    %1864 = vmatprep.mubr.bf16.mxu0 %v1655
    %1865 = vmatmul.mubr.bf16.gmra.mxu0 %v1654
    %v1866 = vpop.f32.mrf.mxu0
    %v1867 = vadd.f32 0.0, %v1866
    %v1868 = vpop.f32.mrf.mxu0
    %v1869 = vpop.f32.mrf.mxu0
    %v1870 = vadd.f32 0.0, %v1869
    %v1871 = vpop.f32.mrf.mxu0
    %1872 = vmatprep.mubr.bf16.mxu0 %v1657
    %1873 = vmatmul.mubr.bf16.gmra.mxu0 %v1656
    %v1874 = vpop.f32.mrf.mxu0
    %v1875 = vadd.f32 0.0, %v1874
    %v1876 = vpop.f32.mrf.mxu0
    %v1877 = vpop.f32.mrf.mxu0
    %v1878 = vadd.f32 0.0, %v1877
    %v1879 = vpop.f32.mrf.mxu0
    %1880 = vmatprep.mubr.bf16.mxu0 %v1659
    %1881 = vmatmul.mubr.bf16.gmra.mxu0 %v1658
    %v1882 = vpop.f32.mrf.mxu0
    %v1883 = vadd.f32 0.0, %v1882
    %v1884 = vpop.f32.mrf.mxu0
    %v1885 = vpop.f32.mrf.mxu0
    %v1886 = vadd.f32 0.0, %v1885
    %v1887 = vpop.f32.mrf.mxu0
    %1888 = vmatprep.mubr.bf16.mxu0 %v1661
    %1889 = vmatmul.mubr.bf16.gmra.mxu0 %v1660
    %v1890 = vpop.f32.mrf.mxu0
    %v1891 = vadd.f32 0.0, %v1890
    %v1892 = vpop.f32.mrf.mxu0
    %v1893 = vpop.f32.mrf.mxu0
    %v1894 = vadd.f32 0.0, %v1893
    %v1895 = vpop.f32.mrf.mxu0
    %1896 = vmatprep.mubr.bf16.mxu0 %v1663
    %1897 = vmatmul.mubr.bf16.gmra.mxu0 %v1662
    %v1898 = vpop.f32.mrf.mxu0
    %v1899 = vadd.f32 0.0, %v1898
    %v1900 = vpop.f32.mrf.mxu0
    %v1901 = vpop.f32.mrf.mxu0
    %v1902 = vadd.f32 0.0, %v1901
    %v1903 = vpop.f32.mrf.mxu0
    %1904 = vmatprep.mubr.bf16.mxu0 %v1665
    %1905 = vmatmul.mubr.bf16.gmra.mxu0 %v1664
    %v1906 = vpop.f32.mrf.mxu0
    %v1907 = vadd.f32 0.0, %v1906
    %v1908 = vpop.f32.mrf.mxu0
    %v1909 = vpop.f32.mrf.mxu0
    %v1910 = vadd.f32 0.0, %v1909
    %v1911 = vpop.f32.mrf.mxu0
    %1912 = vmatprep.mubr.bf16.mxu0 %v1667
    %1913 = vmatmul.mubr.bf16.gmra.mxu0 %v1666
    %v1914 = vpop.f32.mrf.mxu0
    %v1915 = vadd.f32 0.0, %v1914
    %v1916 = vpop.f32.mrf.mxu0
    %v1917 = vpop.f32.mrf.mxu0
    %v1918 = vadd.f32 0.0, %v1917
    %v1919 = vpop.f32.mrf.mxu0
    %1920 = vmatprep.mubr.bf16.mxu0 %v1669
    %1921 = vmatmul.mubr.bf16.gmra.mxu0 %v1668
    %v1922 = vpop.f32.mrf.mxu0
    %v1923 = vadd.f32 0.0, %v1922
    %v1924 = vpop.f32.mrf.mxu0
    %v1925 = vpop.f32.mrf.mxu0
    %v1926 = vadd.f32 0.0, %v1925
    %v1927 = vpop.f32.mrf.mxu0
    %1928 = vmatprep.mubr.bf16.mxu0 %v1671
    %1929 = vmatmul.mubr.bf16.gmra.mxu0 %v1670
    %v1930 = vpop.f32.mrf.mxu0
    %v1931 = vadd.f32 0.0, %v1930
    %v1932 = vpop.f32.mrf.mxu0
    %v1933 = vpop.f32.mrf.mxu0
    %v1934 = vadd.f32 0.0, %v1933
    %v1935 = vpop.f32.mrf.mxu0
    %1936 = vmatprep.mubr.bf16.mxu0 %v1673
    %1937 = vmatmul.mubr.bf16.gmra.mxu0 %v1672
    %v1938 = vpop.f32.mrf.mxu0
    %v1939 = vadd.f32 0.0, %v1938
    %v1940 = vpop.f32.mrf.mxu0
    %v1941 = vpop.f32.mrf.mxu0
    %v1942 = vadd.f32 0.0, %v1941
    %v1943 = vpop.f32.mrf.mxu0
    %1944 = vmatprep.mubr.bf16.mxu0 %v1675
    %1945 = vmatmul.mubr.bf16.gmra.mxu0 %v1674
    %v1946 = vpop.f32.mrf.mxu0
    %v1947 = vadd.f32 0.0, %v1946
    %v1948 = vpop.f32.mrf.mxu0
    %v1949 = vpop.f32.mrf.mxu0
    %v1950 = vadd.f32 0.0, %v1949
    %v1951 = vpop.f32.mrf.mxu0
    %1952 = vmatprep.mubr.bf16.mxu0 %v1677
    %1953 = vmatmul.mubr.bf16.gmra.mxu0 %v1676
    %v1954 = vpop.f32.mrf.mxu0
    %v1955 = vadd.f32 0.0, %v1954
    %v1956 = vpop.f32.mrf.mxu0
    %v1957 = vpop.f32.mrf.mxu0
    %v1958 = vadd.f32 0.0, %v1957
    %v1959 = vpop.f32.mrf.mxu0
    %1960 = vmatprep.mubr.bf16.mxu0 %v1679
    %1961 = vmatmul.mubr.bf16.gmra.mxu0 %v1678
    %v1962 = vpop.f32.mrf.mxu0
    %v1963 = vadd.f32 0.0, %v1962
    %v1964 = vpop.f32.mrf.mxu0
    %v1965 = vpop.f32.mrf.mxu0
    %v1966 = vadd.f32 0.0, %v1965
    %v1967 = vpop.f32.mrf.mxu0
    %1968 = vmatprep.mubr.bf16.mxu0 %v1681
    %1969 = vmatmul.mubr.bf16.gmra.mxu0 %v1680
    %v1970 = vpop.f32.mrf.mxu0
    %v1971 = vadd.f32 0.0, %v1970
    %v1972 = vpop.f32.mrf.mxu0
    %v1973 = vpop.f32.mrf.mxu0
    %v1974 = vadd.f32 0.0, %v1973
    %v1975 = vpop.f32.mrf.mxu0
    %1976 = vmatprep.mubr.bf16.mxu0 %v1683
    %1977 = vmatmul.mubr.bf16.gmra.mxu0 %v1682
    %v1978 = vpop.f32.mrf.mxu0
    %v1979 = vadd.f32 0.0, %v1978
    %v1980 = vpop.f32.mrf.mxu0
    %v1981 = vpop.f32.mrf.mxu0
    %v1982 = vadd.f32 0.0, %v1981
    %v1983 = vpop.f32.mrf.mxu0
    %1984 = vmatprep.mubr.bf16.mxu0 %v1685
    %1985 = vmatmul.mubr.bf16.gmra.mxu0 %v1684
    %v1986 = vpop.f32.mrf.mxu0
    %v1987 = vadd.f32 0.0, %v1986
    %v1988 = vpop.f32.mrf.mxu0
    %v1989 = vpop.f32.mrf.mxu0
    %v1990 = vadd.f32 0.0, %v1989
    %v1991 = vpop.f32.mrf.mxu0
    %1992 = vmatprep.mubr.bf16.mxu0 %v1687
    %1993 = vmatmul.mubr.bf16.gmra.mxu0 %v1686
    %v1994 = vpop.f32.mrf.mxu0
    %v1995 = vadd.f32 0.0, %v1994
    %v1996 = vpop.f32.mrf.mxu0
    %v1997 = vpop.f32.mrf.mxu0
    %v1998 = vadd.f32 0.0, %v1997
    %v1999 = vpop.f32.mrf.mxu0
    %2000 = vmatprep.mubr.bf16.mxu0 %v1689
    %2001 = vmatmul.mubr.bf16.gmra.mxu0 %v1688
    %v2002 = vpop.f32.mrf.mxu0
    %v2003 = vadd.f32 0.0, %v2002
    %v2004 = vpop.f32.mrf.mxu0
    %v2005 = vpop.f32.mrf.mxu0
    %v2006 = vadd.f32 0.0, %v2005
    %v2007 = vpop.f32.mrf.mxu0
    %2008 = vmatprep.mubr.bf16.mxu0 %v1691
    %2009 = vmatmul.mubr.bf16.gmra.mxu0 %v1690
    %v2010 = vpop.f32.mrf.mxu0
    %v2011 = vadd.f32 0.0, %v2010
    %v2012 = vpop.f32.mrf.mxu0
    %v2013 = vpop.f32.mrf.mxu0
    %v2014 = vadd.f32 0.0, %v2013
    %v2015 = vpop.f32.mrf.mxu0
    %2016 = vmatprep.mubr.bf16.mxu0 %v1693
    %2017 = vmatmul.mubr.bf16.gmra.mxu0 %v1692
    %v2018 = vpop.f32.mrf.mxu0
    %v2019 = vadd.f32 0.0, %v2018
    %v2020 = vpop.f32.mrf.mxu0
    %v2021 = vpop.f32.mrf.mxu0
    %v2022 = vadd.f32 0.0, %v2021
    %v2023 = vpop.f32.mrf.mxu0
    %2024 = vmatprep.mubr.bf16.mxu0 %v1695
    %2025 = vmatmul.mubr.bf16.gmra.mxu0 %v1694
    %v2026 = vpop.f32.mrf.mxu0
    %v2027 = vadd.f32 0.0, %v2026
    %v2028 = vpop.f32.mrf.mxu0
    %v2029 = vpop.f32.mrf.mxu0
    %v2030 = vadd.f32 0.0, %v2029
    %v2031 = vpop.f32.mrf.mxu0
    %2032 = vmatprep.mubr.bf16.mxu0 %v1697
    %2033 = vmatmul.mubr.bf16.gmra.mxu0 %v1696
    %v2034 = vpop.f32.mrf.mxu0
    %v2035 = vadd.f32 0.0, %v2034
    %v2036 = vpop.f32.mrf.mxu0
    %v2037 = vpop.f32.mrf.mxu0
    %v2038 = vadd.f32 0.0, %v2037
    %v2039 = vpop.f32.mrf.mxu0
    %2040 = vmatprep.mubr.bf16.mxu0 %v1699
    %2041 = vmatmul.mubr.bf16.gmra.mxu0 %v1698
    %v2042 = vpop.f32.mrf.mxu0
    %v2043 = vadd.f32 0.0, %v2042
    %v2044 = vpop.f32.mrf.mxu0
    %v2045 = vpop.f32.mrf.mxu0
    %v2046 = vadd.f32 0.0, %v2045
    %v2047 = vpop.f32.mrf.mxu0
    %2048 = vmatprep.mubr.bf16.mxu0 %v1701
    %2049 = vmatmul.mubr.bf16.gmra.mxu0 %v1700
    %v2050 = vpop.f32.mrf.mxu0
    %v2051 = vadd.f32 0.0, %v2050
    %v2052 = vpop.f32.mrf.mxu0
    %v2053 = vpop.f32.mrf.mxu0
    %v2054 = vadd.f32 0.0, %v2053
    %v2055 = vpop.f32.mrf.mxu0
    %2056 = vmatprep.mubr.bf16.mxu0 %v1703
    %2057 = vmatmul.mubr.bf16.gmra.mxu0 %v1702
    %v2058 = vpop.f32.mrf.mxu0
    %v2059 = vadd.f32 0.0, %v2058
    %v2060 = vpop.f32.mrf.mxu0
    %v2061 = vpop.f32.mrf.mxu0
    %v2062 = vadd.f32 0.0, %v2061
    %v2063 = vpop.f32.mrf.mxu0
    %2064 = vmatprep.mubr.bf16.mxu0 %v1705
    %2065 = vmatmul.mubr.bf16.gmra.mxu0 %v1704
    %v2066 = vpop.f32.mrf.mxu0
    %v2067 = vadd.f32 0.0, %v2066
    %v2068 = vpop.f32.mrf.mxu0
    %v2069 = vpop.f32.mrf.mxu0
    %v2070 = vadd.f32 0.0, %v2069
    %v2071 = vpop.f32.mrf.mxu0
    %2072 = vmatprep.mubr.bf16.mxu0 %v1707
    %2073 = vmatmul.mubr.bf16.gmra.mxu0 %v1706
    %v2074 = vpop.f32.mrf.mxu0
    %v2075 = vadd.f32 0.0, %v2074
    %v2076 = vpop.f32.mrf.mxu0
    %v2077 = vpop.f32.mrf.mxu0
    %v2078 = vadd.f32 0.0, %v2077
    %v2079 = vpop.f32.mrf.mxu0
    %2080 = vmatprep.mubr.bf16.mxu0 %v1709
    %2081 = vmatmul.mubr.bf16.gmra.mxu0 %v1708
    %v2082 = vpop.f32.mrf.mxu0
    %v2083 = vadd.f32 0.0, %v2082
    %v2084 = vpop.f32.mrf.mxu0
    %v2085 = vpop.f32.mrf.mxu0
    %v2086 = vadd.f32 0.0, %v2085
    %v2087 = vpop.f32.mrf.mxu0
    %2088 = vmatprep.mubr.bf16.mxu0 %v1711
    %2089 = vmatmul.mubr.bf16.gmra.mxu0 %v1710
    %v2090 = vpop.f32.mrf.mxu0
    %v2091 = vadd.f32 0.0, %v2090
    %v2092 = vpop.f32.mrf.mxu0
    %v2093 = vpop.f32.mrf.mxu0
    %v2094 = vadd.f32 0.0, %v2093
    %v2095 = vpop.f32.mrf.mxu0
    %2096 = vdwg.mxu0
    %v2097 = vadd.f32 %v83, %v1843
    %v2098 = vadd.f32 %v84, %v1846
    %v2099 = vadd.f32 %v85, %v1851
    %v2100 = vadd.f32 %v86, %v1854
    %v2101 = vadd.f32 %v87, %v1859
    %v2102 = vadd.f32 %v88, %v1862
    %v2103 = vadd.f32 %v89, %v1867
    %v2104 = vadd.f32 %v90, %v1870
    %v2105 = vadd.f32 %v91, %v1875
    %v2106 = vadd.f32 %v92, %v1878
    %v2107 = vadd.f32 %v93, %v1883
    %v2108 = vadd.f32 %v94, %v1886
    %v2109 = vadd.f32 %v95, %v1891
    %v2110 = vadd.f32 %v96, %v1894
    %v2111 = vadd.f32 %v97, %v1899
    %v2112 = vadd.f32 %v98, %v1902
    %v2113 = vadd.f32 %v99, %v1907
    %v2114 = vadd.f32 %v100, %v1910
    %v2115 = vadd.f32 %v101, %v1915
    %v2116 = vadd.f32 %v102, %v1918
    %v2117 = vadd.f32 %v103, %v1923
    %v2118 = vadd.f32 %v104, %v1926
    %v2119 = vadd.f32 %v105, %v1931
    %v2120 = vadd.f32 %v106, %v1934
    %v2121 = vadd.f32 %v107, %v1939
    %v2122 = vadd.f32 %v108, %v1942
    %v2123 = vadd.f32 %v109, %v1947
    %v2124 = vadd.f32 %v110, %v1950
    %v2125 = vadd.f32 %v111, %v1955
    %v2126 = vadd.f32 %v112, %v1958
    %v2127 = vadd.f32 %v113, %v1963
    %v2128 = vadd.f32 %v114, %v1966
    %v2129 = vadd.f32 %v115, %v1971
    %v2130 = vadd.f32 %v116, %v1974
    %v2131 = vadd.f32 %v117, %v1979
    %v2132 = vadd.f32 %v118, %v1982
    %v2133 = vadd.f32 %v119, %v1987
    %v2134 = vadd.f32 %v120, %v1990
    %v2135 = vadd.f32 %v121, %v1995
    %v2136 = vadd.f32 %v122, %v1998
    %v2137 = vadd.f32 %v123, %v2003
    %v2138 = vadd.f32 %v124, %v2006
    %v2139 = vadd.f32 %v125, %v2011
    %v2140 = vadd.f32 %v126, %v2014
    %v2141 = vadd.f32 %v127, %v2019
    %v2142 = vadd.f32 %v128, %v2022
    %v2143 = vadd.f32 %v129, %v2027
    %v2144 = vadd.f32 %v130, %v2030
    %v2145 = vadd.f32 %v131, %v2035
    %v2146 = vadd.f32 %v132, %v2038
    %v2147 = vadd.f32 %v133, %v2043
    %v2148 = vadd.f32 %v134, %v2046
    %v2149 = vadd.f32 %v135, %v2051
    %v2150 = vadd.f32 %v136, %v2054
    %v2151 = vadd.f32 %v137, %v2059
    %v2152 = vadd.f32 %v138, %v2062
    %v2153 = vadd.f32 %v139, %v2067
    %v2154 = vadd.f32 %v140, %v2070
    %v2155 = vadd.f32 %v141, %v2075
    %v2156 = vadd.f32 %v142, %v2078
    %v2157 = vadd.f32 %v143, %v2083
    %v2158 = vadd.f32 %v144, %v2086
    %v2159 = vadd.f32 %v145, %v2091
    %v2160 = vadd.f32 %v146, %v2094
    %v2162 = vlaneseq
    %v2163 = vshrl.u32 %v2162, 7
    %v2164 = vsub.s32 0, %v2163
    %v2165 = vrot.slane %v198, %v2164
    %v2167 = vadd.f32 %v2097, %v2165
    %v2168 = vadd.f32 %v2098, %v2165
    %v2169 = vadd.f32 %v2099, %v2165
    %v2170 = vadd.f32 %v2100, %v2165
    %v2171 = vadd.f32 %v2101, %v2165
    %v2172 = vadd.f32 %v2102, %v2165
    %v2173 = vadd.f32 %v2103, %v2165
    %v2174 = vadd.f32 %v2104, %v2165
    %v2175 = vadd.f32 %v2105, %v2165
    %v2176 = vadd.f32 %v2106, %v2165
    %v2177 = vadd.f32 %v2107, %v2165
    %v2178 = vadd.f32 %v2108, %v2165
    %v2179 = vadd.f32 %v2109, %v2165
    %v2180 = vadd.f32 %v2110, %v2165
    %v2181 = vadd.f32 %v2111, %v2165
    %v2182 = vadd.f32 %v2112, %v2165
    %v2183 = vadd.f32 %v2113, %v2165
    %v2184 = vadd.f32 %v2114, %v2165
    %v2185 = vadd.f32 %v2115, %v2165
    %v2186 = vadd.f32 %v2116, %v2165
    %v2187 = vadd.f32 %v2117, %v2165
    %v2188 = vadd.f32 %v2118, %v2165
    %v2189 = vadd.f32 %v2119, %v2165
    %v2190 = vadd.f32 %v2120, %v2165
    %v2191 = vadd.f32 %v2121, %v2165
    %v2192 = vadd.f32 %v2122, %v2165
    %v2193 = vadd.f32 %v2123, %v2165
    %v2194 = vadd.f32 %v2124, %v2165
    %v2195 = vadd.f32 %v2125, %v2165
    %v2196 = vadd.f32 %v2126, %v2165
    %v2197 = vadd.f32 %v2127, %v2165
    %v2198 = vadd.f32 %v2128, %v2165
    %v2199 = vadd.f32 %v2129, %v2165
    %v2200 = vadd.f32 %v2130, %v2165
    %v2201 = vadd.f32 %v2131, %v2165
    %v2202 = vadd.f32 %v2132, %v2165
    %v2203 = vadd.f32 %v2133, %v2165
    %v2204 = vadd.f32 %v2134, %v2165
    %v2205 = vadd.f32 %v2135, %v2165
    %v2206 = vadd.f32 %v2136, %v2165
    %v2207 = vadd.f32 %v2137, %v2165
    %v2208 = vadd.f32 %v2138, %v2165
    %v2209 = vadd.f32 %v2139, %v2165
    %v2210 = vadd.f32 %v2140, %v2165
    %v2211 = vadd.f32 %v2141, %v2165
    %v2212 = vadd.f32 %v2142, %v2165
    %v2213 = vadd.f32 %v2143, %v2165
    %v2214 = vadd.f32 %v2144, %v2165
    %v2215 = vadd.f32 %v2145, %v2165
    %v2216 = vadd.f32 %v2146, %v2165
    %v2217 = vadd.f32 %v2147, %v2165
    %v2218 = vadd.f32 %v2148, %v2165
    %v2219 = vadd.f32 %v2149, %v2165
    %v2220 = vadd.f32 %v2150, %v2165
    %v2221 = vadd.f32 %v2151, %v2165
    %v2222 = vadd.f32 %v2152, %v2165
    %v2223 = vadd.f32 %v2153, %v2165
    %v2224 = vadd.f32 %v2154, %v2165
    %v2225 = vadd.f32 %v2155, %v2165
    %v2226 = vadd.f32 %v2156, %v2165
    %v2227 = vadd.f32 %v2157, %v2165
    %v2228 = vadd.f32 %v2158, %v2165
    %v2229 = vadd.f32 %v2159, %v2165
    %v2230 = vadd.f32 %v2160, %v2165
    %s2231 = scalar_lea.vmem [#allocation5], 1
    %v2232 = vld [vmem:[%s2231] sm:$0x1]
    %s2233 = scalar_lea.vmem %s2, 1
    %v2234 = vld [vmem:[%s2233] sm:$0x1]
    %s2235 = scalar_lea.vmem [#allocation7], 128
    %v2236 = vld [vmem:[%s2235] sm:$0xff]
    %v2237 = vld [vmem:[%s2235 + $0x8] sm:$0xff]
    %v2238 = vld [vmem:[%s2235 + $0x10] sm:$0xff]
    %v2239 = vld [vmem:[%s2235 + $0x18] sm:$0xff]
    %v2240 = vld [vmem:[%s2235 + $0x20] sm:$0xff]
    %v2241 = vld [vmem:[%s2235 + $0x28] sm:$0xff]
    %v2242 = vld [vmem:[%s2235 + $0x30] sm:$0xff]
    %v2243 = vld [vmem:[%s2235 + $0x38] sm:$0xff]
    %v2244 = vld [vmem:[%s2235 + $0x40] sm:$0xff]
    %v2245 = vld [vmem:[%s2235 + $0x48] sm:$0xff]
    %v2246 = vld [vmem:[%s2235 + $0x50] sm:$0xff]
    %v2247 = vld [vmem:[%s2235 + $0x58] sm:$0xff]
    %v2248 = vld [vmem:[%s2235 + $0x60] sm:$0xff]
    %v2249 = vld [vmem:[%s2235 + $0x68] sm:$0xff]
    %v2250 = vld [vmem:[%s2235 + $0x70] sm:$0xff]
    %v2251 = vld [vmem:[%s2235 + $0x78] sm:$0xff]
    %s2252 = scalar_lea.vmem %s4, 2
    %v2253 = vld [vmem:[%s2252] sm:$0x3]
    %s2254 = scalar_lea.vmem [#allocation8], 128
    %v2255 = vld [vmem:[%s2254] sm:$0xf]
    %v2256 = vld [vmem:[%s2254 + $0x4] sm:$0xf]
    %v2257 = vld [vmem:[%s2254 + $0x8] sm:$0xf]
    %v2258 = vld [vmem:[%s2254 + $0xc] sm:$0xf]
    %v2259 = vld [vmem:[%s2254 + $0x10] sm:$0xf]
    %v2260 = vld [vmem:[%s2254 + $0x14] sm:$0xf]
    %v2261 = vld [vmem:[%s2254 + $0x18] sm:$0xf]
    %v2262 = vld [vmem:[%s2254 + $0x1c] sm:$0xf]
    %v2263 = vld [vmem:[%s2254 + $0x20] sm:$0xf]
    %v2264 = vld [vmem:[%s2254 + $0x24] sm:$0xf]
    %v2265 = vld [vmem:[%s2254 + $0x28] sm:$0xf]
    %v2266 = vld [vmem:[%s2254 + $0x2c] sm:$0xf]
    %v2267 = vld [vmem:[%s2254 + $0x30] sm:$0xf]
    %v2268 = vld [vmem:[%s2254 + $0x34] sm:$0xf]
    %v2269 = vld [vmem:[%s2254 + $0x38] sm:$0xf]
    %v2270 = vld [vmem:[%s2254 + $0x3c] sm:$0xf]
    %v2271 = vld [vmem:[%s2254 + $0x40] sm:$0xf]
    %v2272 = vld [vmem:[%s2254 + $0x44] sm:$0xf]
    %v2273 = vld [vmem:[%s2254 + $0x48] sm:$0xf]
    %v2274 = vld [vmem:[%s2254 + $0x4c] sm:$0xf]
    %v2275 = vld [vmem:[%s2254 + $0x50] sm:$0xf]
    %v2276 = vld [vmem:[%s2254 + $0x54] sm:$0xf]
    %v2277 = vld [vmem:[%s2254 + $0x58] sm:$0xf]
    %v2278 = vld [vmem:[%s2254 + $0x5c] sm:$0xf]
    %v2279 = vld [vmem:[%s2254 + $0x60] sm:$0xf]
    %v2280 = vld [vmem:[%s2254 + $0x64] sm:$0xf]
    %v2281 = vld [vmem:[%s2254 + $0x68] sm:$0xf]
    %v2282 = vld [vmem:[%s2254 + $0x6c] sm:$0xf]
    %v2283 = vld [vmem:[%s2254 + $0x70] sm:$0xf]
    %v2284 = vld [vmem:[%s2254 + $0x74] sm:$0xf]
    %v2285 = vld [vmem:[%s2254 + $0x78] sm:$0xf]
    %v2286 = vld [vmem:[%s2254 + $0x7c] sm:$0xf]
    %s2287 = scalar_lea.vmem %s6, 1
    %v2288 = vld [vmem:[%s2287] sm:$0x1]
    %2289 = vadd.xlane.f32.xlu0 %v2167
    %v2290 = vpop.xlane.xlu0 %2289
    %2291 = vadd.xlane.f32.xlu0 %v2168
    %v2292 = vpop.xlane.xlu0 %2291
    %2293 = vadd.xlane.f32.xlu0 %v2169
    %v2294 = vpop.xlane.xlu0 %2293
    %2295 = vadd.xlane.f32.xlu0 %v2170
    %v2296 = vpop.xlane.xlu0 %2295
    %2297 = vadd.xlane.f32.xlu0 %v2171
    %v2298 = vpop.xlane.xlu0 %2297
    %2299 = vadd.xlane.f32.xlu0 %v2172
    %v2300 = vpop.xlane.xlu0 %2299
    %2301 = vadd.xlane.f32.xlu0 %v2173
    %v2302 = vpop.xlane.xlu0 %2301
    %2303 = vadd.xlane.f32.xlu0 %v2174
    %v2304 = vpop.xlane.xlu0 %2303
    %2305 = vadd.xlane.f32.xlu0 %v2175
    %v2306 = vpop.xlane.xlu0 %2305
    %2307 = vadd.xlane.f32.xlu0 %v2176
    %v2308 = vpop.xlane.xlu0 %2307
    %2309 = vadd.xlane.f32.xlu0 %v2177
    %v2310 = vpop.xlane.xlu0 %2309
    %2311 = vadd.xlane.f32.xlu0 %v2178
    %v2312 = vpop.xlane.xlu0 %2311
    %2313 = vadd.xlane.f32.xlu0 %v2179
    %v2314 = vpop.xlane.xlu0 %2313
    %2315 = vadd.xlane.f32.xlu0 %v2180
    %v2316 = vpop.xlane.xlu0 %2315
    %2317 = vadd.xlane.f32.xlu0 %v2181
    %v2318 = vpop.xlane.xlu0 %2317
    %2319 = vadd.xlane.f32.xlu0 %v2182
    %v2320 = vpop.xlane.xlu0 %2319
    %2321 = vadd.xlane.f32.xlu0 %v2183
    %v2322 = vpop.xlane.xlu0 %2321
    %2323 = vadd.xlane.f32.xlu0 %v2184
    %v2324 = vpop.xlane.xlu0 %2323
    %2325 = vadd.xlane.f32.xlu0 %v2185
    %v2326 = vpop.xlane.xlu0 %2325
    %2327 = vadd.xlane.f32.xlu0 %v2186
    %v2328 = vpop.xlane.xlu0 %2327
    %2329 = vadd.xlane.f32.xlu0 %v2187
    %v2330 = vpop.xlane.xlu0 %2329
    %2331 = vadd.xlane.f32.xlu0 %v2188
    %v2332 = vpop.xlane.xlu0 %2331
    %2333 = vadd.xlane.f32.xlu0 %v2189
    %v2334 = vpop.xlane.xlu0 %2333
    %2335 = vadd.xlane.f32.xlu0 %v2190
    %v2336 = vpop.xlane.xlu0 %2335
    %2337 = vadd.xlane.f32.xlu0 %v2191
    %v2338 = vpop.xlane.xlu0 %2337
    %2339 = vadd.xlane.f32.xlu0 %v2192
    %v2340 = vpop.xlane.xlu0 %2339
    %2341 = vadd.xlane.f32.xlu0 %v2193
    %v2342 = vpop.xlane.xlu0 %2341
    %2343 = vadd.xlane.f32.xlu0 %v2194
    %v2344 = vpop.xlane.xlu0 %2343
    %2345 = vadd.xlane.f32.xlu0 %v2195
    %v2346 = vpop.xlane.xlu0 %2345
    %2347 = vadd.xlane.f32.xlu0 %v2196
    %v2348 = vpop.xlane.xlu0 %2347
    %2349 = vadd.xlane.f32.xlu0 %v2197
    %v2350 = vpop.xlane.xlu0 %2349
    %2351 = vadd.xlane.f32.xlu0 %v2198
    %v2352 = vpop.xlane.xlu0 %2351
    %2353 = vadd.xlane.f32.xlu0 %v2199
    %v2354 = vpop.xlane.xlu0 %2353
    %2355 = vadd.xlane.f32.xlu0 %v2200
    %v2356 = vpop.xlane.xlu0 %2355
    %2357 = vadd.xlane.f32.xlu0 %v2201
    %v2358 = vpop.xlane.xlu0 %2357
    %2359 = vadd.xlane.f32.xlu0 %v2202
    %v2360 = vpop.xlane.xlu0 %2359
    %2361 = vadd.xlane.f32.xlu0 %v2203
    %v2362 = vpop.xlane.xlu0 %2361
    %2363 = vadd.xlane.f32.xlu0 %v2204
    %v2364 = vpop.xlane.xlu0 %2363
    %2365 = vadd.xlane.f32.xlu0 %v2205
    %v2366 = vpop.xlane.xlu0 %2365
    %2367 = vadd.xlane.f32.xlu0 %v2206
    %v2368 = vpop.xlane.xlu0 %2367
    %2369 = vadd.xlane.f32.xlu0 %v2207
    %v2370 = vpop.xlane.xlu0 %2369
    %2371 = vadd.xlane.f32.xlu0 %v2208
    %v2372 = vpop.xlane.xlu0 %2371
    %2373 = vadd.xlane.f32.xlu0 %v2209
    %v2374 = vpop.xlane.xlu0 %2373
    %2375 = vadd.xlane.f32.xlu0 %v2210
    %v2376 = vpop.xlane.xlu0 %2375
    %2377 = vadd.xlane.f32.xlu0 %v2211
    %v2378 = vpop.xlane.xlu0 %2377
    %2379 = vadd.xlane.f32.xlu0 %v2212
    %v2380 = vpop.xlane.xlu0 %2379
    %2381 = vadd.xlane.f32.xlu0 %v2213
    %v2382 = vpop.xlane.xlu0 %2381
    %2383 = vadd.xlane.f32.xlu0 %v2214
    %v2384 = vpop.xlane.xlu0 %2383
    %2385 = vadd.xlane.f32.xlu0 %v2215
    %v2386 = vpop.xlane.xlu0 %2385
    %2387 = vadd.xlane.f32.xlu0 %v2216
    %v2388 = vpop.xlane.xlu0 %2387
    %2389 = vadd.xlane.f32.xlu0 %v2217
    %v2390 = vpop.xlane.xlu0 %2389
    %2391 = vadd.xlane.f32.xlu0 %v2218
    %v2392 = vpop.xlane.xlu0 %2391
    %2393 = vadd.xlane.f32.xlu0 %v2219
    %v2394 = vpop.xlane.xlu0 %2393
    %2395 = vadd.xlane.f32.xlu0 %v2220
    %v2396 = vpop.xlane.xlu0 %2395
    %2397 = vadd.xlane.f32.xlu0 %v2221
    %v2398 = vpop.xlane.xlu0 %2397
    %2399 = vadd.xlane.f32.xlu0 %v2222
    %v2400 = vpop.xlane.xlu0 %2399
    %2401 = vadd.xlane.f32.xlu0 %v2223
    %v2402 = vpop.xlane.xlu0 %2401
    %2403 = vadd.xlane.f32.xlu0 %v2224
    %v2404 = vpop.xlane.xlu0 %2403
    %2405 = vadd.xlane.f32.xlu0 %v2225
    %v2406 = vpop.xlane.xlu0 %2405
    %2407 = vadd.xlane.f32.xlu0 %v2226
    %v2408 = vpop.xlane.xlu0 %2407
    %2409 = vadd.xlane.f32.xlu0 %v2227
    %v2410 = vpop.xlane.xlu0 %2409
    %2411 = vadd.xlane.f32.xlu0 %v2228
    %v2412 = vpop.xlane.xlu0 %2411
    %2413 = vadd.xlane.f32.xlu0 %v2229
    %v2414 = vpop.xlane.xlu0 %2413
    %2415 = vadd.xlane.f32.xlu0 %v2230
    %v2416 = vpop.xlane.xlu0 %2415
    %v2417 = vmul.f32 %v2290, %v327
    %v2418 = vmul.f32 %v2292, %v327
    %v2419 = vmul.f32 %v2294, %v327
    %v2420 = vmul.f32 %v2296, %v327
    %v2421 = vmul.f32 %v2298, %v327
    %v2422 = vmul.f32 %v2300, %v327
    %v2423 = vmul.f32 %v2302, %v327
    %v2424 = vmul.f32 %v2304, %v327
    %v2425 = vmul.f32 %v2306, %v327
    %v2426 = vmul.f32 %v2308, %v327
    %v2427 = vmul.f32 %v2310, %v327
    %v2428 = vmul.f32 %v2312, %v327
    %v2429 = vmul.f32 %v2314, %v327
    %v2430 = vmul.f32 %v2316, %v327
    %v2431 = vmul.f32 %v2318, %v327
    %v2432 = vmul.f32 %v2320, %v327
    %v2433 = vmul.f32 %v2322, %v327
    %v2434 = vmul.f32 %v2324, %v327
    %v2435 = vmul.f32 %v2326, %v327
    %v2436 = vmul.f32 %v2328, %v327
    %v2437 = vmul.f32 %v2330, %v327
    %v2438 = vmul.f32 %v2332, %v327
    %v2439 = vmul.f32 %v2334, %v327
    %v2440 = vmul.f32 %v2336, %v327
    %v2441 = vmul.f32 %v2338, %v327
    %v2442 = vmul.f32 %v2340, %v327
    %v2443 = vmul.f32 %v2342, %v327
    %v2444 = vmul.f32 %v2344, %v327
    %v2445 = vmul.f32 %v2346, %v327
    %v2446 = vmul.f32 %v2348, %v327
    %v2447 = vmul.f32 %v2350, %v327
    %v2448 = vmul.f32 %v2352, %v327
    %v2449 = vmul.f32 %v2354, %v327
    %v2450 = vmul.f32 %v2356, %v327
    %v2451 = vmul.f32 %v2358, %v327
    %v2452 = vmul.f32 %v2360, %v327
    %v2453 = vmul.f32 %v2362, %v327
    %v2454 = vmul.f32 %v2364, %v327
    %v2455 = vmul.f32 %v2366, %v327
    %v2456 = vmul.f32 %v2368, %v327
    %v2457 = vmul.f32 %v2370, %v327
    %v2458 = vmul.f32 %v2372, %v327
    %v2459 = vmul.f32 %v2374, %v327
    %v2460 = vmul.f32 %v2376, %v327
    %v2461 = vmul.f32 %v2378, %v327
    %v2462 = vmul.f32 %v2380, %v327
    %v2463 = vmul.f32 %v2382, %v327
    %v2464 = vmul.f32 %v2384, %v327
    %v2465 = vmul.f32 %v2386, %v327
    %v2466 = vmul.f32 %v2388, %v327
    %v2467 = vmul.f32 %v2390, %v327
    %v2468 = vmul.f32 %v2392, %v327
    %v2469 = vmul.f32 %v2394, %v327
    %v2470 = vmul.f32 %v2396, %v327
    %v2471 = vmul.f32 %v2398, %v327
    %v2472 = vmul.f32 %v2400, %v327
    %v2473 = vmul.f32 %v2402, %v327
    %v2474 = vmul.f32 %v2404, %v327
    %v2475 = vmul.f32 %v2406, %v327
    %v2476 = vmul.f32 %v2408, %v327
    %v2477 = vmul.f32 %v2410, %v327
    %v2478 = vmul.f32 %v2412, %v327
    %v2479 = vmul.f32 %v2414, %v327
    %v2480 = vmul.f32 %v2416, %v327
    %v2481 = vsub.f32 %v2167, %v2417
    %v2482 = vsub.f32 %v2168, %v2418
    %v2483 = vsub.f32 %v2169, %v2419
    %v2484 = vsub.f32 %v2170, %v2420
    %v2485 = vsub.f32 %v2171, %v2421
    %v2486 = vsub.f32 %v2172, %v2422
    %v2487 = vsub.f32 %v2173, %v2423
    %v2488 = vsub.f32 %v2174, %v2424
    %v2489 = vsub.f32 %v2175, %v2425
    %v2490 = vsub.f32 %v2176, %v2426
    %v2491 = vsub.f32 %v2177, %v2427
    %v2492 = vsub.f32 %v2178, %v2428
    %v2493 = vsub.f32 %v2179, %v2429
    %v2494 = vsub.f32 %v2180, %v2430
    %v2495 = vsub.f32 %v2181, %v2431
    %v2496 = vsub.f32 %v2182, %v2432
    %v2497 = vsub.f32 %v2183, %v2433
    %v2498 = vsub.f32 %v2184, %v2434
    %v2499 = vsub.f32 %v2185, %v2435
    %v2500 = vsub.f32 %v2186, %v2436
    %v2501 = vsub.f32 %v2187, %v2437
    %v2502 = vsub.f32 %v2188, %v2438
    %v2503 = vsub.f32 %v2189, %v2439
    %v2504 = vsub.f32 %v2190, %v2440
    %v2505 = vsub.f32 %v2191, %v2441
    %v2506 = vsub.f32 %v2192, %v2442
    %v2507 = vsub.f32 %v2193, %v2443
    %v2508 = vsub.f32 %v2194, %v2444
    %v2509 = vsub.f32 %v2195, %v2445
    %v2510 = vsub.f32 %v2196, %v2446
    %v2511 = vsub.f32 %v2197, %v2447
    %v2512 = vsub.f32 %v2198, %v2448
    %v2513 = vsub.f32 %v2199, %v2449
    %v2514 = vsub.f32 %v2200, %v2450
    %v2515 = vsub.f32 %v2201, %v2451
    %v2516 = vsub.f32 %v2202, %v2452
    %v2517 = vsub.f32 %v2203, %v2453
    %v2518 = vsub.f32 %v2204, %v2454
    %v2519 = vsub.f32 %v2205, %v2455
    %v2520 = vsub.f32 %v2206, %v2456
    %v2521 = vsub.f32 %v2207, %v2457
    %v2522 = vsub.f32 %v2208, %v2458
    %v2523 = vsub.f32 %v2209, %v2459
    %v2524 = vsub.f32 %v2210, %v2460
    %v2525 = vsub.f32 %v2211, %v2461
    %v2526 = vsub.f32 %v2212, %v2462
    %v2527 = vsub.f32 %v2213, %v2463
    %v2528 = vsub.f32 %v2214, %v2464
    %v2529 = vsub.f32 %v2215, %v2465
    %v2530 = vsub.f32 %v2216, %v2466
    %v2531 = vsub.f32 %v2217, %v2467
    %v2532 = vsub.f32 %v2218, %v2468
    %v2533 = vsub.f32 %v2219, %v2469
    %v2534 = vsub.f32 %v2220, %v2470
    %v2535 = vsub.f32 %v2221, %v2471
    %v2536 = vsub.f32 %v2222, %v2472
    %v2537 = vsub.f32 %v2223, %v2473
    %v2538 = vsub.f32 %v2224, %v2474
    %v2539 = vsub.f32 %v2225, %v2475
    %v2540 = vsub.f32 %v2226, %v2476
    %v2541 = vsub.f32 %v2227, %v2477
    %v2542 = vsub.f32 %v2228, %v2478
    %v2543 = vsub.f32 %v2229, %v2479
    %v2544 = vsub.f32 %v2230, %v2480
    %v2545 = vmul.f32 %v2481, %v2481
    %v2546 = vmul.f32 %v2482, %v2482
    %v2547 = vmul.f32 %v2483, %v2483
    %v2548 = vmul.f32 %v2484, %v2484
    %v2549 = vmul.f32 %v2485, %v2485
    %v2550 = vmul.f32 %v2486, %v2486
    %v2551 = vmul.f32 %v2487, %v2487
    %v2552 = vmul.f32 %v2488, %v2488
    %v2553 = vmul.f32 %v2489, %v2489
    %v2554 = vmul.f32 %v2490, %v2490
    %v2555 = vmul.f32 %v2491, %v2491
    %v2556 = vmul.f32 %v2492, %v2492
    %v2557 = vmul.f32 %v2493, %v2493
    %v2558 = vmul.f32 %v2494, %v2494
    %v2559 = vmul.f32 %v2495, %v2495
    %v2560 = vmul.f32 %v2496, %v2496
    %v2561 = vmul.f32 %v2497, %v2497
    %v2562 = vmul.f32 %v2498, %v2498
    %v2563 = vmul.f32 %v2499, %v2499
    %v2564 = vmul.f32 %v2500, %v2500
    %v2565 = vmul.f32 %v2501, %v2501
    %v2566 = vmul.f32 %v2502, %v2502
    %v2567 = vmul.f32 %v2503, %v2503
    %v2568 = vmul.f32 %v2504, %v2504
    %v2569 = vmul.f32 %v2505, %v2505
    %v2570 = vmul.f32 %v2506, %v2506
    %v2571 = vmul.f32 %v2507, %v2507
    %v2572 = vmul.f32 %v2508, %v2508
    %v2573 = vmul.f32 %v2509, %v2509
    %v2574 = vmul.f32 %v2510, %v2510
    %v2575 = vmul.f32 %v2511, %v2511
    %v2576 = vmul.f32 %v2512, %v2512
    %v2577 = vmul.f32 %v2513, %v2513
    %v2578 = vmul.f32 %v2514, %v2514
    %v2579 = vmul.f32 %v2515, %v2515
    %v2580 = vmul.f32 %v2516, %v2516
    %v2581 = vmul.f32 %v2517, %v2517
    %v2582 = vmul.f32 %v2518, %v2518
    %v2583 = vmul.f32 %v2519, %v2519
    %v2584 = vmul.f32 %v2520, %v2520
    %v2585 = vmul.f32 %v2521, %v2521
    %v2586 = vmul.f32 %v2522, %v2522
    %v2587 = vmul.f32 %v2523, %v2523
    %v2588 = vmul.f32 %v2524, %v2524
    %v2589 = vmul.f32 %v2525, %v2525
    %v2590 = vmul.f32 %v2526, %v2526
    %v2591 = vmul.f32 %v2527, %v2527
    %v2592 = vmul.f32 %v2528, %v2528
    %v2593 = vmul.f32 %v2529, %v2529
    %v2594 = vmul.f32 %v2530, %v2530
    %v2595 = vmul.f32 %v2531, %v2531
    %v2596 = vmul.f32 %v2532, %v2532
    %v2597 = vmul.f32 %v2533, %v2533
    %v2598 = vmul.f32 %v2534, %v2534
    %v2599 = vmul.f32 %v2535, %v2535
    %v2600 = vmul.f32 %v2536, %v2536
    %v2601 = vmul.f32 %v2537, %v2537
    %v2602 = vmul.f32 %v2538, %v2538
    %v2603 = vmul.f32 %v2539, %v2539
    %v2604 = vmul.f32 %v2540, %v2540
    %v2605 = vmul.f32 %v2541, %v2541
    %v2606 = vmul.f32 %v2542, %v2542
    %v2607 = vmul.f32 %v2543, %v2543
    %v2608 = vmul.f32 %v2544, %v2544
    %2609 = vadd.xlane.f32.xlu0 %v2545
    %v2610 = vpop.xlane.xlu0 %2609
    %2611 = vadd.xlane.f32.xlu0 %v2546
    %v2612 = vpop.xlane.xlu0 %2611
    %2613 = vadd.xlane.f32.xlu0 %v2547
    %v2614 = vpop.xlane.xlu0 %2613
    %2615 = vadd.xlane.f32.xlu0 %v2548
    %v2616 = vpop.xlane.xlu0 %2615
    %2617 = vadd.xlane.f32.xlu0 %v2549
    %v2618 = vpop.xlane.xlu0 %2617
    %2619 = vadd.xlane.f32.xlu0 %v2550
    %v2620 = vpop.xlane.xlu0 %2619
    %2621 = vadd.xlane.f32.xlu0 %v2551
    %v2622 = vpop.xlane.xlu0 %2621
    %2623 = vadd.xlane.f32.xlu0 %v2552
    %v2624 = vpop.xlane.xlu0 %2623
    %2625 = vadd.xlane.f32.xlu0 %v2553
    %v2626 = vpop.xlane.xlu0 %2625
    %2627 = vadd.xlane.f32.xlu0 %v2554
    %v2628 = vpop.xlane.xlu0 %2627
    %2629 = vadd.xlane.f32.xlu0 %v2555
    %v2630 = vpop.xlane.xlu0 %2629
    %2631 = vadd.xlane.f32.xlu0 %v2556
    %v2632 = vpop.xlane.xlu0 %2631
    %2633 = vadd.xlane.f32.xlu0 %v2557
    %v2634 = vpop.xlane.xlu0 %2633
    %2635 = vadd.xlane.f32.xlu0 %v2558
    %v2636 = vpop.xlane.xlu0 %2635
    %2637 = vadd.xlane.f32.xlu0 %v2559
    %v2638 = vpop.xlane.xlu0 %2637
    %2639 = vadd.xlane.f32.xlu0 %v2560
    %v2640 = vpop.xlane.xlu0 %2639
    %2641 = vadd.xlane.f32.xlu0 %v2561
    %v2642 = vpop.xlane.xlu0 %2641
    %2643 = vadd.xlane.f32.xlu0 %v2562
    %v2644 = vpop.xlane.xlu0 %2643
    %2645 = vadd.xlane.f32.xlu0 %v2563
    %v2646 = vpop.xlane.xlu0 %2645
    %2647 = vadd.xlane.f32.xlu0 %v2564
    %v2648 = vpop.xlane.xlu0 %2647
    %2649 = vadd.xlane.f32.xlu0 %v2565
    %v2650 = vpop.xlane.xlu0 %2649
    %2651 = vadd.xlane.f32.xlu0 %v2566
    %v2652 = vpop.xlane.xlu0 %2651
    %2653 = vadd.xlane.f32.xlu0 %v2567
    %v2654 = vpop.xlane.xlu0 %2653
    %2655 = vadd.xlane.f32.xlu0 %v2568
    %v2656 = vpop.xlane.xlu0 %2655
    %2657 = vadd.xlane.f32.xlu0 %v2569
    %v2658 = vpop.xlane.xlu0 %2657
    %2659 = vadd.xlane.f32.xlu0 %v2570
    %v2660 = vpop.xlane.xlu0 %2659
    %2661 = vadd.xlane.f32.xlu0 %v2571
    %v2662 = vpop.xlane.xlu0 %2661
    %2663 = vadd.xlane.f32.xlu0 %v2572
    %v2664 = vpop.xlane.xlu0 %2663
    %2665 = vadd.xlane.f32.xlu0 %v2573
    %v2666 = vpop.xlane.xlu0 %2665
    %2667 = vadd.xlane.f32.xlu0 %v2574
    %v2668 = vpop.xlane.xlu0 %2667
    %2669 = vadd.xlane.f32.xlu0 %v2575
    %v2670 = vpop.xlane.xlu0 %2669
    %2671 = vadd.xlane.f32.xlu0 %v2576
    %v2672 = vpop.xlane.xlu0 %2671
    %2673 = vadd.xlane.f32.xlu0 %v2577
    %v2674 = vpop.xlane.xlu0 %2673
    %2675 = vadd.xlane.f32.xlu0 %v2578
    %v2676 = vpop.xlane.xlu0 %2675
    %2677 = vadd.xlane.f32.xlu0 %v2579
    %v2678 = vpop.xlane.xlu0 %2677
    %2679 = vadd.xlane.f32.xlu0 %v2580
    %v2680 = vpop.xlane.xlu0 %2679
    %2681 = vadd.xlane.f32.xlu0 %v2581
    %v2682 = vpop.xlane.xlu0 %2681
    %2683 = vadd.xlane.f32.xlu0 %v2582
    %v2684 = vpop.xlane.xlu0 %2683
    %2685 = vadd.xlane.f32.xlu0 %v2583
    %v2686 = vpop.xlane.xlu0 %2685
    %2687 = vadd.xlane.f32.xlu0 %v2584
    %v2688 = vpop.xlane.xlu0 %2687
    %2689 = vadd.xlane.f32.xlu0 %v2585
    %v2690 = vpop.xlane.xlu0 %2689
    %2691 = vadd.xlane.f32.xlu0 %v2586
    %v2692 = vpop.xlane.xlu0 %2691
    %2693 = vadd.xlane.f32.xlu0 %v2587
    %v2694 = vpop.xlane.xlu0 %2693
    %2695 = vadd.xlane.f32.xlu0 %v2588
    %v2696 = vpop.xlane.xlu0 %2695
    %2697 = vadd.xlane.f32.xlu0 %v2589
    %v2698 = vpop.xlane.xlu0 %2697
    %2699 = vadd.xlane.f32.xlu0 %v2590
    %v2700 = vpop.xlane.xlu0 %2699
    %2701 = vadd.xlane.f32.xlu0 %v2591
    %v2702 = vpop.xlane.xlu0 %2701
    %2703 = vadd.xlane.f32.xlu0 %v2592
    %v2704 = vpop.xlane.xlu0 %2703
    %2705 = vadd.xlane.f32.xlu0 %v2593
    %v2706 = vpop.xlane.xlu0 %2705
    %2707 = vadd.xlane.f32.xlu0 %v2594
    %v2708 = vpop.xlane.xlu0 %2707
    %2709 = vadd.xlane.f32.xlu0 %v2595
    %v2710 = vpop.xlane.xlu0 %2709
    %2711 = vadd.xlane.f32.xlu0 %v2596
    %v2712 = vpop.xlane.xlu0 %2711
    %2713 = vadd.xlane.f32.xlu0 %v2597
    %v2714 = vpop.xlane.xlu0 %2713
    %2715 = vadd.xlane.f32.xlu0 %v2598
    %v2716 = vpop.xlane.xlu0 %2715
    %2717 = vadd.xlane.f32.xlu0 %v2599
    %v2718 = vpop.xlane.xlu0 %2717
    %2719 = vadd.xlane.f32.xlu0 %v2600
    %v2720 = vpop.xlane.xlu0 %2719
    %2721 = vadd.xlane.f32.xlu0 %v2601
    %v2722 = vpop.xlane.xlu0 %2721
    %2723 = vadd.xlane.f32.xlu0 %v2602
    %v2724 = vpop.xlane.xlu0 %2723
    %2725 = vadd.xlane.f32.xlu0 %v2603
    %v2726 = vpop.xlane.xlu0 %2725
    %2727 = vadd.xlane.f32.xlu0 %v2604
    %v2728 = vpop.xlane.xlu0 %2727
    %2729 = vadd.xlane.f32.xlu0 %v2605
    %v2730 = vpop.xlane.xlu0 %2729
    %2731 = vadd.xlane.f32.xlu0 %v2606
    %v2732 = vpop.xlane.xlu0 %2731
    %2733 = vadd.xlane.f32.xlu0 %v2607
    %v2734 = vpop.xlane.xlu0 %2733
    %2735 = vadd.xlane.f32.xlu0 %v2608
    %v2736 = vpop.xlane.xlu0 %2735
    %v2737 = vmul.f32 %v2610, %v327
    %v2738 = vmul.f32 %v2612, %v327
    %v2739 = vmul.f32 %v2614, %v327
    %v2740 = vmul.f32 %v2616, %v327
    %v2741 = vmul.f32 %v2618, %v327
    %v2742 = vmul.f32 %v2620, %v327
    %v2743 = vmul.f32 %v2622, %v327
    %v2744 = vmul.f32 %v2624, %v327
    %v2745 = vmul.f32 %v2626, %v327
    %v2746 = vmul.f32 %v2628, %v327
    %v2747 = vmul.f32 %v2630, %v327
    %v2748 = vmul.f32 %v2632, %v327
    %v2749 = vmul.f32 %v2634, %v327
    %v2750 = vmul.f32 %v2636, %v327
    %v2751 = vmul.f32 %v2638, %v327
    %v2752 = vmul.f32 %v2640, %v327
    %v2753 = vmul.f32 %v2642, %v327
    %v2754 = vmul.f32 %v2644, %v327
    %v2755 = vmul.f32 %v2646, %v327
    %v2756 = vmul.f32 %v2648, %v327
    %v2757 = vmul.f32 %v2650, %v327
    %v2758 = vmul.f32 %v2652, %v327
    %v2759 = vmul.f32 %v2654, %v327
    %v2760 = vmul.f32 %v2656, %v327
    %v2761 = vmul.f32 %v2658, %v327
    %v2762 = vmul.f32 %v2660, %v327
    %v2763 = vmul.f32 %v2662, %v327
    %v2764 = vmul.f32 %v2664, %v327
    %v2765 = vmul.f32 %v2666, %v327
    %v2766 = vmul.f32 %v2668, %v327
    %v2767 = vmul.f32 %v2670, %v327
    %v2768 = vmul.f32 %v2672, %v327
    %v2769 = vmul.f32 %v2674, %v327
    %v2770 = vmul.f32 %v2676, %v327
    %v2771 = vmul.f32 %v2678, %v327
    %v2772 = vmul.f32 %v2680, %v327
    %v2773 = vmul.f32 %v2682, %v327
    %v2774 = vmul.f32 %v2684, %v327
    %v2775 = vmul.f32 %v2686, %v327
    %v2776 = vmul.f32 %v2688, %v327
    %v2777 = vmul.f32 %v2690, %v327
    %v2778 = vmul.f32 %v2692, %v327
    %v2779 = vmul.f32 %v2694, %v327
    %v2780 = vmul.f32 %v2696, %v327
    %v2781 = vmul.f32 %v2698, %v327
    %v2782 = vmul.f32 %v2700, %v327
    %v2783 = vmul.f32 %v2702, %v327
    %v2784 = vmul.f32 %v2704, %v327
    %v2785 = vmul.f32 %v2706, %v327
    %v2786 = vmul.f32 %v2708, %v327
    %v2787 = vmul.f32 %v2710, %v327
    %v2788 = vmul.f32 %v2712, %v327
    %v2789 = vmul.f32 %v2714, %v327
    %v2790 = vmul.f32 %v2716, %v327
    %v2791 = vmul.f32 %v2718, %v327
    %v2792 = vmul.f32 %v2720, %v327
    %v2793 = vmul.f32 %v2722, %v327
    %v2794 = vmul.f32 %v2724, %v327
    %v2795 = vmul.f32 %v2726, %v327
    %v2796 = vmul.f32 %v2728, %v327
    %v2797 = vmul.f32 %v2730, %v327
    %v2798 = vmul.f32 %v2732, %v327
    %v2799 = vmul.f32 %v2734, %v327
    %v2800 = vmul.f32 %v2736, %v327
    %v2801 = vadd.f32 %v2737, 1e-05
    %v2802 = vadd.f32 %v2738, 1e-05
    %v2803 = vadd.f32 %v2739, 1e-05
    %v2804 = vadd.f32 %v2740, 1e-05
    %v2805 = vadd.f32 %v2741, 1e-05
    %v2806 = vadd.f32 %v2742, 1e-05
    %v2807 = vadd.f32 %v2743, 1e-05
    %v2808 = vadd.f32 %v2744, 1e-05
    %v2809 = vadd.f32 %v2745, 1e-05
    %v2810 = vadd.f32 %v2746, 1e-05
    %v2811 = vadd.f32 %v2747, 1e-05
    %v2812 = vadd.f32 %v2748, 1e-05
    %v2813 = vadd.f32 %v2749, 1e-05
    %v2814 = vadd.f32 %v2750, 1e-05
    %v2815 = vadd.f32 %v2751, 1e-05
    %v2816 = vadd.f32 %v2752, 1e-05
    %v2817 = vadd.f32 %v2753, 1e-05
    %v2818 = vadd.f32 %v2754, 1e-05
    %v2819 = vadd.f32 %v2755, 1e-05
    %v2820 = vadd.f32 %v2756, 1e-05
    %v2821 = vadd.f32 %v2757, 1e-05
    %v2822 = vadd.f32 %v2758, 1e-05
    %v2823 = vadd.f32 %v2759, 1e-05
    %v2824 = vadd.f32 %v2760, 1e-05
    %v2825 = vadd.f32 %v2761, 1e-05
    %v2826 = vadd.f32 %v2762, 1e-05
    %v2827 = vadd.f32 %v2763, 1e-05
    %v2828 = vadd.f32 %v2764, 1e-05
    %v2829 = vadd.f32 %v2765, 1e-05
    %v2830 = vadd.f32 %v2766, 1e-05
    %v2831 = vadd.f32 %v2767, 1e-05
    %v2832 = vadd.f32 %v2768, 1e-05
    %v2833 = vadd.f32 %v2769, 1e-05
    %v2834 = vadd.f32 %v2770, 1e-05
    %v2835 = vadd.f32 %v2771, 1e-05
    %v2836 = vadd.f32 %v2772, 1e-05
    %v2837 = vadd.f32 %v2773, 1e-05
    %v2838 = vadd.f32 %v2774, 1e-05
    %v2839 = vadd.f32 %v2775, 1e-05
    %v2840 = vadd.f32 %v2776, 1e-05
    %v2841 = vadd.f32 %v2777, 1e-05
    %v2842 = vadd.f32 %v2778, 1e-05
    %v2843 = vadd.f32 %v2779, 1e-05
    %v2844 = vadd.f32 %v2780, 1e-05
    %v2845 = vadd.f32 %v2781, 1e-05
    %v2846 = vadd.f32 %v2782, 1e-05
    %v2847 = vadd.f32 %v2783, 1e-05
    %v2848 = vadd.f32 %v2784, 1e-05
    %v2849 = vadd.f32 %v2785, 1e-05
    %v2850 = vadd.f32 %v2786, 1e-05
    %v2851 = vadd.f32 %v2787, 1e-05
    %v2852 = vadd.f32 %v2788, 1e-05
    %v2853 = vadd.f32 %v2789, 1e-05
    %v2854 = vadd.f32 %v2790, 1e-05
    %v2855 = vadd.f32 %v2791, 1e-05
    %v2856 = vadd.f32 %v2792, 1e-05
    %v2857 = vadd.f32 %v2793, 1e-05
    %v2858 = vadd.f32 %v2794, 1e-05
    %v2859 = vadd.f32 %v2795, 1e-05
    %v2860 = vadd.f32 %v2796, 1e-05
    %v2861 = vadd.f32 %v2797, 1e-05
    %v2862 = vadd.f32 %v2798, 1e-05
    %v2863 = vadd.f32 %v2799, 1e-05
    %v2864 = vadd.f32 %v2800, 1e-05
    %v2865 = vrsqrt.pop %v2801
    %v2866 = vrsqrt.pop %v2802
    %v2867 = vrsqrt.pop %v2803
    %v2868 = vrsqrt.pop %v2804
    %v2869 = vrsqrt.pop %v2805
    %v2870 = vrsqrt.pop %v2806
    %v2871 = vrsqrt.pop %v2807
    %v2872 = vrsqrt.pop %v2808
    %v2873 = vrsqrt.pop %v2809
    %v2874 = vrsqrt.pop %v2810
    %v2875 = vrsqrt.pop %v2811
    %v2876 = vrsqrt.pop %v2812
    %v2877 = vrsqrt.pop %v2813
    %v2878 = vrsqrt.pop %v2814
    %v2879 = vrsqrt.pop %v2815
    %v2880 = vrsqrt.pop %v2816
    %v2881 = vrsqrt.pop %v2817
    %v2882 = vrsqrt.pop %v2818
    %v2883 = vrsqrt.pop %v2819
    %v2884 = vrsqrt.pop %v2820
    %v2885 = vrsqrt.pop %v2821
    %v2886 = vrsqrt.pop %v2822
    %v2887 = vrsqrt.pop %v2823
    %v2888 = vrsqrt.pop %v2824
    %v2889 = vrsqrt.pop %v2825
    %v2890 = vrsqrt.pop %v2826
    %v2891 = vrsqrt.pop %v2827
    %v2892 = vrsqrt.pop %v2828
    %v2893 = vrsqrt.pop %v2829
    %v2894 = vrsqrt.pop %v2830
    %v2895 = vrsqrt.pop %v2831
    %v2896 = vrsqrt.pop %v2832
    %v2897 = vrsqrt.pop %v2833
    %v2898 = vrsqrt.pop %v2834
    %v2899 = vrsqrt.pop %v2835
    %v2900 = vrsqrt.pop %v2836
    %v2901 = vrsqrt.pop %v2837
    %v2902 = vrsqrt.pop %v2838
    %v2903 = vrsqrt.pop %v2839
    %v2904 = vrsqrt.pop %v2840
    %v2905 = vrsqrt.pop %v2841
    %v2906 = vrsqrt.pop %v2842
    %v2907 = vrsqrt.pop %v2843
    %v2908 = vrsqrt.pop %v2844
    %v2909 = vrsqrt.pop %v2845
    %v2910 = vrsqrt.pop %v2846
    %v2911 = vrsqrt.pop %v2847
    %v2912 = vrsqrt.pop %v2848
    %v2913 = vrsqrt.pop %v2849
    %v2914 = vrsqrt.pop %v2850
    %v2915 = vrsqrt.pop %v2851
    %v2916 = vrsqrt.pop %v2852
    %v2917 = vrsqrt.pop %v2853
    %v2918 = vrsqrt.pop %v2854
    %v2919 = vrsqrt.pop %v2855
    %v2920 = vrsqrt.pop %v2856
    %v2921 = vrsqrt.pop %v2857
    %v2922 = vrsqrt.pop %v2858
    %v2923 = vrsqrt.pop %v2859
    %v2924 = vrsqrt.pop %v2860
    %v2925 = vrsqrt.pop %v2861
    %v2926 = vrsqrt.pop %v2862
    %v2927 = vrsqrt.pop %v2863
    %v2928 = vrsqrt.pop %v2864
    %v2929 = vmul.f32 %v2481, %v2865
    %v2930 = vmul.f32 %v2482, %v2866
    %v2931 = vmul.f32 %v2483, %v2867
    %v2932 = vmul.f32 %v2484, %v2868
    %v2933 = vmul.f32 %v2485, %v2869
    %v2934 = vmul.f32 %v2486, %v2870
    %v2935 = vmul.f32 %v2487, %v2871
    %v2936 = vmul.f32 %v2488, %v2872
    %v2937 = vmul.f32 %v2489, %v2873
    %v2938 = vmul.f32 %v2490, %v2874
    %v2939 = vmul.f32 %v2491, %v2875
    %v2940 = vmul.f32 %v2492, %v2876
    %v2941 = vmul.f32 %v2493, %v2877
    %v2942 = vmul.f32 %v2494, %v2878
    %v2943 = vmul.f32 %v2495, %v2879
    %v2944 = vmul.f32 %v2496, %v2880
    %v2945 = vmul.f32 %v2497, %v2881
    %v2946 = vmul.f32 %v2498, %v2882
    %v2947 = vmul.f32 %v2499, %v2883
    %v2948 = vmul.f32 %v2500, %v2884
    %v2949 = vmul.f32 %v2501, %v2885
    %v2950 = vmul.f32 %v2502, %v2886
    %v2951 = vmul.f32 %v2503, %v2887
    %v2952 = vmul.f32 %v2504, %v2888
    %v2953 = vmul.f32 %v2505, %v2889
    %v2954 = vmul.f32 %v2506, %v2890
    %v2955 = vmul.f32 %v2507, %v2891
    %v2956 = vmul.f32 %v2508, %v2892
    %v2957 = vmul.f32 %v2509, %v2893
    %v2958 = vmul.f32 %v2510, %v2894
    %v2959 = vmul.f32 %v2511, %v2895
    %v2960 = vmul.f32 %v2512, %v2896
    %v2961 = vmul.f32 %v2513, %v2897
    %v2962 = vmul.f32 %v2514, %v2898
    %v2963 = vmul.f32 %v2515, %v2899
    %v2964 = vmul.f32 %v2516, %v2900
    %v2965 = vmul.f32 %v2517, %v2901
    %v2966 = vmul.f32 %v2518, %v2902
    %v2967 = vmul.f32 %v2519, %v2903
    %v2968 = vmul.f32 %v2520, %v2904
    %v2969 = vmul.f32 %v2521, %v2905
    %v2970 = vmul.f32 %v2522, %v2906
    %v2971 = vmul.f32 %v2523, %v2907
    %v2972 = vmul.f32 %v2524, %v2908
    %v2973 = vmul.f32 %v2525, %v2909
    %v2974 = vmul.f32 %v2526, %v2910
    %v2975 = vmul.f32 %v2527, %v2911
    %v2976 = vmul.f32 %v2528, %v2912
    %v2977 = vmul.f32 %v2529, %v2913
    %v2978 = vmul.f32 %v2530, %v2914
    %v2979 = vmul.f32 %v2531, %v2915
    %v2980 = vmul.f32 %v2532, %v2916
    %v2981 = vmul.f32 %v2533, %v2917
    %v2982 = vmul.f32 %v2534, %v2918
    %v2983 = vmul.f32 %v2535, %v2919
    %v2984 = vmul.f32 %v2536, %v2920
    %v2985 = vmul.f32 %v2537, %v2921
    %v2986 = vmul.f32 %v2538, %v2922
    %v2987 = vmul.f32 %v2539, %v2923
    %v2988 = vmul.f32 %v2540, %v2924
    %v2989 = vmul.f32 %v2541, %v2925
    %v2990 = vmul.f32 %v2542, %v2926
    %v2991 = vmul.f32 %v2543, %v2927
    %v2992 = vmul.f32 %v2544, %v2928
    %v2994 = vlaneseq
    %v2995 = vshrl.u32 %v2994, 7
    %v2996 = vsub.s32 0, %v2995
    %v2997 = vrot.slane %v2232, %v2996
    %v2999 = vmul.f32 %v2929, %v2997
    %v3000 = vmul.f32 %v2930, %v2997
    %v3001 = vmul.f32 %v2931, %v2997
    %v3002 = vmul.f32 %v2932, %v2997
    %v3003 = vmul.f32 %v2933, %v2997
    %v3004 = vmul.f32 %v2934, %v2997
    %v3005 = vmul.f32 %v2935, %v2997
    %v3006 = vmul.f32 %v2936, %v2997
    %v3007 = vmul.f32 %v2937, %v2997
    %v3008 = vmul.f32 %v2938, %v2997
    %v3009 = vmul.f32 %v2939, %v2997
    %v3010 = vmul.f32 %v2940, %v2997
    %v3011 = vmul.f32 %v2941, %v2997
    %v3012 = vmul.f32 %v2942, %v2997
    %v3013 = vmul.f32 %v2943, %v2997
    %v3014 = vmul.f32 %v2944, %v2997
    %v3015 = vmul.f32 %v2945, %v2997
    %v3016 = vmul.f32 %v2946, %v2997
    %v3017 = vmul.f32 %v2947, %v2997
    %v3018 = vmul.f32 %v2948, %v2997
    %v3019 = vmul.f32 %v2949, %v2997
    %v3020 = vmul.f32 %v2950, %v2997
    %v3021 = vmul.f32 %v2951, %v2997
    %v3022 = vmul.f32 %v2952, %v2997
    %v3023 = vmul.f32 %v2953, %v2997
    %v3024 = vmul.f32 %v2954, %v2997
    %v3025 = vmul.f32 %v2955, %v2997
    %v3026 = vmul.f32 %v2956, %v2997
    %v3027 = vmul.f32 %v2957, %v2997
    %v3028 = vmul.f32 %v2958, %v2997
    %v3029 = vmul.f32 %v2959, %v2997
    %v3030 = vmul.f32 %v2960, %v2997
    %v3031 = vmul.f32 %v2961, %v2997
    %v3032 = vmul.f32 %v2962, %v2997
    %v3033 = vmul.f32 %v2963, %v2997
    %v3034 = vmul.f32 %v2964, %v2997
    %v3035 = vmul.f32 %v2965, %v2997
    %v3036 = vmul.f32 %v2966, %v2997
    %v3037 = vmul.f32 %v2967, %v2997
    %v3038 = vmul.f32 %v2968, %v2997
    %v3039 = vmul.f32 %v2969, %v2997
    %v3040 = vmul.f32 %v2970, %v2997
    %v3041 = vmul.f32 %v2971, %v2997
    %v3042 = vmul.f32 %v2972, %v2997
    %v3043 = vmul.f32 %v2973, %v2997
    %v3044 = vmul.f32 %v2974, %v2997
    %v3045 = vmul.f32 %v2975, %v2997
    %v3046 = vmul.f32 %v2976, %v2997
    %v3047 = vmul.f32 %v2977, %v2997
    %v3048 = vmul.f32 %v2978, %v2997
    %v3049 = vmul.f32 %v2979, %v2997
    %v3050 = vmul.f32 %v2980, %v2997
    %v3051 = vmul.f32 %v2981, %v2997
    %v3052 = vmul.f32 %v2982, %v2997
    %v3053 = vmul.f32 %v2983, %v2997
    %v3054 = vmul.f32 %v2984, %v2997
    %v3055 = vmul.f32 %v2985, %v2997
    %v3056 = vmul.f32 %v2986, %v2997
    %v3057 = vmul.f32 %v2987, %v2997
    %v3058 = vmul.f32 %v2988, %v2997
    %v3059 = vmul.f32 %v2989, %v2997
    %v3060 = vmul.f32 %v2990, %v2997
    %v3061 = vmul.f32 %v2991, %v2997
    %v3062 = vmul.f32 %v2992, %v2997
    %v3064 = vlaneseq
    %v3065 = vshrl.u32 %v3064, 7
    %v3066 = vsub.s32 0, %v3065
    %v3067 = vrot.slane %v2234, %v3066
    %v3069 = vadd.f32 %v2999, %v3067
    %v3070 = vadd.f32 %v3000, %v3067
    %v3071 = vadd.f32 %v3001, %v3067
    %v3072 = vadd.f32 %v3002, %v3067
    %v3073 = vadd.f32 %v3003, %v3067
    %v3074 = vadd.f32 %v3004, %v3067
    %v3075 = vadd.f32 %v3005, %v3067
    %v3076 = vadd.f32 %v3006, %v3067
    %v3077 = vadd.f32 %v3007, %v3067
    %v3078 = vadd.f32 %v3008, %v3067
    %v3079 = vadd.f32 %v3009, %v3067
    %v3080 = vadd.f32 %v3010, %v3067
    %v3081 = vadd.f32 %v3011, %v3067
    %v3082 = vadd.f32 %v3012, %v3067
    %v3083 = vadd.f32 %v3013, %v3067
    %v3084 = vadd.f32 %v3014, %v3067
    %v3085 = vadd.f32 %v3015, %v3067
    %v3086 = vadd.f32 %v3016, %v3067
    %v3087 = vadd.f32 %v3017, %v3067
    %v3088 = vadd.f32 %v3018, %v3067
    %v3089 = vadd.f32 %v3019, %v3067
    %v3090 = vadd.f32 %v3020, %v3067
    %v3091 = vadd.f32 %v3021, %v3067
    %v3092 = vadd.f32 %v3022, %v3067
    %v3093 = vadd.f32 %v3023, %v3067
    %v3094 = vadd.f32 %v3024, %v3067
    %v3095 = vadd.f32 %v3025, %v3067
    %v3096 = vadd.f32 %v3026, %v3067
    %v3097 = vadd.f32 %v3027, %v3067
    %v3098 = vadd.f32 %v3028, %v3067
    %v3099 = vadd.f32 %v3029, %v3067
    %v3100 = vadd.f32 %v3030, %v3067
    %v3101 = vadd.f32 %v3031, %v3067
    %v3102 = vadd.f32 %v3032, %v3067
    %v3103 = vadd.f32 %v3033, %v3067
    %v3104 = vadd.f32 %v3034, %v3067
    %v3105 = vadd.f32 %v3035, %v3067
    %v3106 = vadd.f32 %v3036, %v3067
    %v3107 = vadd.f32 %v3037, %v3067
    %v3108 = vadd.f32 %v3038, %v3067
    %v3109 = vadd.f32 %v3039, %v3067
    %v3110 = vadd.f32 %v3040, %v3067
    %v3111 = vadd.f32 %v3041, %v3067
    %v3112 = vadd.f32 %v3042, %v3067
    %v3113 = vadd.f32 %v3043, %v3067
    %v3114 = vadd.f32 %v3044, %v3067
    %v3115 = vadd.f32 %v3045, %v3067
    %v3116 = vadd.f32 %v3046, %v3067
    %v3117 = vadd.f32 %v3047, %v3067
    %v3118 = vadd.f32 %v3048, %v3067
    %v3119 = vadd.f32 %v3049, %v3067
    %v3120 = vadd.f32 %v3050, %v3067
    %v3121 = vadd.f32 %v3051, %v3067
    %v3122 = vadd.f32 %v3052, %v3067
    %v3123 = vadd.f32 %v3053, %v3067
    %v3124 = vadd.f32 %v3054, %v3067
    %v3125 = vadd.f32 %v3055, %v3067
    %v3126 = vadd.f32 %v3056, %v3067
    %v3127 = vadd.f32 %v3057, %v3067
    %v3128 = vadd.f32 %v3058, %v3067
    %v3129 = vadd.f32 %v3059, %v3067
    %v3130 = vadd.f32 %v3060, %v3067
    %v3131 = vadd.f32 %v3061, %v3067
    %v3132 = vadd.f32 %v3062, %v3067
    %v3133 = vpack.c.bf16 %v3070, %v3069
    %v3134 = vpack.c.bf16 %v3072, %v3071
    %v3135 = vpack.c.bf16 %v3074, %v3073
    %v3136 = vpack.c.bf16 %v3076, %v3075
    %v3137 = vpack.c.bf16 %v3078, %v3077
    %v3138 = vpack.c.bf16 %v3080, %v3079
    %v3139 = vpack.c.bf16 %v3082, %v3081
    %v3140 = vpack.c.bf16 %v3084, %v3083
    %v3141 = vpack.c.bf16 %v3086, %v3085
    %v3142 = vpack.c.bf16 %v3088, %v3087
    %v3143 = vpack.c.bf16 %v3090, %v3089
    %v3144 = vpack.c.bf16 %v3092, %v3091
    %v3145 = vpack.c.bf16 %v3094, %v3093
    %v3146 = vpack.c.bf16 %v3096, %v3095
    %v3147 = vpack.c.bf16 %v3098, %v3097
    %v3148 = vpack.c.bf16 %v3100, %v3099
    %v3149 = vpack.c.bf16 %v3102, %v3101
    %v3150 = vpack.c.bf16 %v3104, %v3103
    %v3151 = vpack.c.bf16 %v3106, %v3105
    %v3152 = vpack.c.bf16 %v3108, %v3107
    %v3153 = vpack.c.bf16 %v3110, %v3109
    %v3154 = vpack.c.bf16 %v3112, %v3111
    %v3155 = vpack.c.bf16 %v3114, %v3113
    %v3156 = vpack.c.bf16 %v3116, %v3115
    %v3157 = vpack.c.bf16 %v3118, %v3117
    %v3158 = vpack.c.bf16 %v3120, %v3119
    %v3159 = vpack.c.bf16 %v3122, %v3121
    %v3160 = vpack.c.bf16 %v3124, %v3123
    %v3161 = vpack.c.bf16 %v3126, %v3125
    %v3162 = vpack.c.bf16 %v3128, %v3127
    %v3163 = vpack.c.bf16 %v3130, %v3129
    %v3164 = vpack.c.bf16 %v3132, %v3131
    %v3166 = vlaneseq
    %v3167 = vshrl.u32 %v3166, 7
    %v3168 = vsub.s32 0, %v3167
    %v3169 = vrot.slane %v2253, %v3168
    %v3170 = vlaneseq
    %v3171 = vshrl.u32 %v3170, 7
    %v3172 = vsub.s32 1, %v3171
    %v3173 = vrot.slane %v2253, %v3172
    %v3192 = vunpack.c.l.b16 %v2236
    %v3193 = vunpack.c.h.b16 %v2236
    %v3194 = vunpack.c.l.b16 %v2237
    %v3195 = vunpack.c.h.b16 %v2237
    %v3196 = vunpack.c.l.b16 %v2238
    %v3197 = vunpack.c.h.b16 %v2238
    %v3198 = vunpack.c.l.b16 %v2239
    %v3199 = vunpack.c.h.b16 %v2239
    %v3200 = vunpack.c.l.b16 %v2240
    %v3201 = vunpack.c.h.b16 %v2240
    %v3202 = vunpack.c.l.b16 %v2241
    %v3203 = vunpack.c.h.b16 %v2241
    %v3204 = vunpack.c.l.b16 %v2242
    %v3205 = vunpack.c.h.b16 %v2242
    %v3206 = vunpack.c.l.b16 %v2243
    %v3207 = vunpack.c.h.b16 %v2243
    %v3208 = vunpack.c.l.b16 %v2244
    %v3209 = vunpack.c.h.b16 %v2244
    %v3210 = vunpack.c.l.b16 %v2245
    %v3211 = vunpack.c.h.b16 %v2245
    %v3212 = vunpack.c.l.b16 %v2246
    %v3213 = vunpack.c.h.b16 %v2246
    %v3214 = vunpack.c.l.b16 %v2247
    %v3215 = vunpack.c.h.b16 %v2247
    %v3216 = vunpack.c.l.b16 %v2248
    %v3217 = vunpack.c.h.b16 %v2248
    %v3218 = vunpack.c.l.b16 %v2249
    %v3219 = vunpack.c.h.b16 %v2249
    %v3220 = vunpack.c.l.b16 %v2250
    %v3221 = vunpack.c.h.b16 %v2250
    %v3222 = vunpack.c.l.b16 %v2251
    %v3223 = vunpack.c.h.b16 %v2251
    %v3224 = vpack.c.b16 %v3194, %v3192
    %v3225 = vpack.c.b16 %v3195, %v3193
    %v3226 = vpack.c.b16 %v3198, %v3196
    %v3227 = vpack.c.b16 %v3199, %v3197
    %v3228 = vpack.c.b16 %v3202, %v3200
    %v3229 = vpack.c.b16 %v3203, %v3201
    %v3230 = vpack.c.b16 %v3206, %v3204
    %v3231 = vpack.c.b16 %v3207, %v3205
    %v3232 = vpack.c.b16 %v3210, %v3208
    %v3233 = vpack.c.b16 %v3211, %v3209
    %v3234 = vpack.c.b16 %v3214, %v3212
    %v3235 = vpack.c.b16 %v3215, %v3213
    %v3236 = vpack.c.b16 %v3218, %v3216
    %v3237 = vpack.c.b16 %v3219, %v3217
    %v3238 = vpack.c.b16 %v3222, %v3220
    %v3239 = vpack.c.b16 %v3223, %v3221
    %3256 = vmatprep.subr.bf16.mxu0 %v3239
    %3257 = vmatpush1.bf16.msra.mxu0 %v3238
    %3258 = vmatprep.subr.bf16.mxu0 %v3237
    %3259 = vmatpush1.bf16.msra.mxu0 %v3236
    %3260 = vmatprep.subr.bf16.mxu0 %v3235
    %3261 = vmatpush1.bf16.msra.mxu0 %v3234
    %3262 = vmatprep.subr.bf16.mxu0 %v3233
    %3263 = vmatpush1.bf16.msra.mxu0 %v3232
    %3264 = vmatprep.subr.bf16.mxu0 %v3231
    %3265 = vmatpush1.bf16.msra.mxu0 %v3230
    %3266 = vmatprep.subr.bf16.mxu0 %v3229
    %3267 = vmatpush1.bf16.msra.mxu0 %v3228
    %3268 = vmatprep.subr.bf16.mxu0 %v3227
    %3269 = vmatpush1.bf16.msra.mxu0 %v3226
    %3270 = vmatprep.subr.bf16.mxu0 %v3225
    %3271 = vmatpush1.bf16.msra.mxu0 %v3224
    %3272 = vmatprep.subr.bf16.mxu0 0
    %3273 = vmatpush2.bf16.msra.mxu0 0
    %3274 = vmatprep.subr.bf16.mxu0 0
    %3275 = vmatpush2.bf16.msra.mxu0 0
    %3276 = vmatprep.subr.bf16.mxu0 0
    %3277 = vmatpush2.bf16.msra.mxu0 0
    %3278 = vmatprep.subr.bf16.mxu0 0
    %3279 = vmatpush2.bf16.msra.mxu0 0
    %3280 = vmatprep.subr.bf16.mxu0 0
    %3281 = vmatpush2.bf16.msra.mxu0 0
    %3282 = vmatprep.subr.bf16.mxu0 0
    %3283 = vmatpush2.bf16.msra.mxu0 0
    %3284 = vmatprep.subr.bf16.mxu0 0
    %3285 = vmatpush2.bf16.msra.mxu0 0
    %3286 = vmatprep.subr.bf16.mxu0 0
    %3287 = vmatpush2.bf16.msra.mxu0 0
    %3288 = vmatprep.mubr.bf16.mxu0 0
    %3289 = vmatmul.mubr.bf16.gmra.mxu0 %v3133
    %v3290 = vpop.f32.mrf.mxu0
    %v3291 = vadd.f32 %v3169, %v3290
    %v3292 = vpop.f32.mrf.mxu0
    %v3293 = vadd.f32 %v3173, %v3292
    %v3294 = vpop.f32.mrf.mxu0
    %v3295 = vadd.f32 %v3169, %v3294
    %v3296 = vpop.f32.mrf.mxu0
    %v3297 = vadd.f32 %v3173, %v3296
    %3298 = vmatprep.mubr.bf16.mxu0 0
    %3299 = vmatmul.mubr.bf16.gmra.mxu0 %v3134
    %v3300 = vpop.f32.mrf.mxu0
    %v3301 = vadd.f32 %v3169, %v3300
    %v3302 = vpop.f32.mrf.mxu0
    %v3303 = vadd.f32 %v3173, %v3302
    %v3304 = vpop.f32.mrf.mxu0
    %v3305 = vadd.f32 %v3169, %v3304
    %v3306 = vpop.f32.mrf.mxu0
    %v3307 = vadd.f32 %v3173, %v3306
    %3308 = vmatprep.mubr.bf16.mxu0 0
    %3309 = vmatmul.mubr.bf16.gmra.mxu0 %v3135
    %v3310 = vpop.f32.mrf.mxu0
    %v3311 = vadd.f32 %v3169, %v3310
    %v3312 = vpop.f32.mrf.mxu0
    %v3313 = vadd.f32 %v3173, %v3312
    %v3314 = vpop.f32.mrf.mxu0
    %v3315 = vadd.f32 %v3169, %v3314
    %v3316 = vpop.f32.mrf.mxu0
    %v3317 = vadd.f32 %v3173, %v3316
    %3318 = vmatprep.mubr.bf16.mxu0 0
    %3319 = vmatmul.mubr.bf16.gmra.mxu0 %v3136
    %v3320 = vpop.f32.mrf.mxu0
    %v3321 = vadd.f32 %v3169, %v3320
    %v3322 = vpop.f32.mrf.mxu0
    %v3323 = vadd.f32 %v3173, %v3322
    %v3324 = vpop.f32.mrf.mxu0
    %v3325 = vadd.f32 %v3169, %v3324
    %v3326 = vpop.f32.mrf.mxu0
    %v3327 = vadd.f32 %v3173, %v3326
    %3328 = vmatprep.mubr.bf16.mxu0 0
    %3329 = vmatmul.mubr.bf16.gmra.mxu0 %v3137
    %v3330 = vpop.f32.mrf.mxu0
    %v3331 = vadd.f32 %v3169, %v3330
    %v3332 = vpop.f32.mrf.mxu0
    %v3333 = vadd.f32 %v3173, %v3332
    %v3334 = vpop.f32.mrf.mxu0
    %v3335 = vadd.f32 %v3169, %v3334
    %v3336 = vpop.f32.mrf.mxu0
    %v3337 = vadd.f32 %v3173, %v3336
    %3338 = vmatprep.mubr.bf16.mxu0 0
    %3339 = vmatmul.mubr.bf16.gmra.mxu0 %v3138
    %v3340 = vpop.f32.mrf.mxu0
    %v3341 = vadd.f32 %v3169, %v3340
    %v3342 = vpop.f32.mrf.mxu0
    %v3343 = vadd.f32 %v3173, %v3342
    %v3344 = vpop.f32.mrf.mxu0
    %v3345 = vadd.f32 %v3169, %v3344
    %v3346 = vpop.f32.mrf.mxu0
    %v3347 = vadd.f32 %v3173, %v3346
    %3348 = vmatprep.mubr.bf16.mxu0 0
    %3349 = vmatmul.mubr.bf16.gmra.mxu0 %v3139
    %v3350 = vpop.f32.mrf.mxu0
    %v3351 = vadd.f32 %v3169, %v3350
    %v3352 = vpop.f32.mrf.mxu0
    %v3353 = vadd.f32 %v3173, %v3352
    %v3354 = vpop.f32.mrf.mxu0
    %v3355 = vadd.f32 %v3169, %v3354
    %v3356 = vpop.f32.mrf.mxu0
    %v3357 = vadd.f32 %v3173, %v3356
    %3358 = vmatprep.mubr.bf16.mxu0 0
    %3359 = vmatmul.mubr.bf16.gmra.mxu0 %v3140
    %v3360 = vpop.f32.mrf.mxu0
    %v3361 = vadd.f32 %v3169, %v3360
    %v3362 = vpop.f32.mrf.mxu0
    %v3363 = vadd.f32 %v3173, %v3362
    %v3364 = vpop.f32.mrf.mxu0
    %v3365 = vadd.f32 %v3169, %v3364
    %v3366 = vpop.f32.mrf.mxu0
    %v3367 = vadd.f32 %v3173, %v3366
    %3368 = vmatprep.mubr.bf16.mxu0 0
    %3369 = vmatmul.mubr.bf16.gmra.mxu0 %v3141
    %v3370 = vpop.f32.mrf.mxu0
    %v3371 = vadd.f32 %v3169, %v3370
    %v3372 = vpop.f32.mrf.mxu0
    %v3373 = vadd.f32 %v3173, %v3372
    %v3374 = vpop.f32.mrf.mxu0
    %v3375 = vadd.f32 %v3169, %v3374
    %v3376 = vpop.f32.mrf.mxu0
    %v3377 = vadd.f32 %v3173, %v3376
    %3378 = vmatprep.mubr.bf16.mxu0 0
    %3379 = vmatmul.mubr.bf16.gmra.mxu0 %v3142
    %v3380 = vpop.f32.mrf.mxu0
    %v3381 = vadd.f32 %v3169, %v3380
    %v3382 = vpop.f32.mrf.mxu0
    %v3383 = vadd.f32 %v3173, %v3382
    %v3384 = vpop.f32.mrf.mxu0
    %v3385 = vadd.f32 %v3169, %v3384
    %v3386 = vpop.f32.mrf.mxu0
    %v3387 = vadd.f32 %v3173, %v3386
    %3388 = vmatprep.mubr.bf16.mxu0 0
    %3389 = vmatmul.mubr.bf16.gmra.mxu0 %v3143
    %v3390 = vpop.f32.mrf.mxu0
    %v3391 = vadd.f32 %v3169, %v3390
    %v3392 = vpop.f32.mrf.mxu0
    %v3393 = vadd.f32 %v3173, %v3392
    %v3394 = vpop.f32.mrf.mxu0
    %v3395 = vadd.f32 %v3169, %v3394
    %v3396 = vpop.f32.mrf.mxu0
    %v3397 = vadd.f32 %v3173, %v3396
    %3398 = vmatprep.mubr.bf16.mxu0 0
    %3399 = vmatmul.mubr.bf16.gmra.mxu0 %v3144
    %v3400 = vpop.f32.mrf.mxu0
    %v3401 = vadd.f32 %v3169, %v3400
    %v3402 = vpop.f32.mrf.mxu0
    %v3403 = vadd.f32 %v3173, %v3402
    %v3404 = vpop.f32.mrf.mxu0
    %v3405 = vadd.f32 %v3169, %v3404
    %v3406 = vpop.f32.mrf.mxu0
    %v3407 = vadd.f32 %v3173, %v3406
    %3408 = vmatprep.mubr.bf16.mxu0 0
    %3409 = vmatmul.mubr.bf16.gmra.mxu0 %v3145
    %v3410 = vpop.f32.mrf.mxu0
    %v3411 = vadd.f32 %v3169, %v3410
    %v3412 = vpop.f32.mrf.mxu0
    %v3413 = vadd.f32 %v3173, %v3412
    %v3414 = vpop.f32.mrf.mxu0
    %v3415 = vadd.f32 %v3169, %v3414
    %v3416 = vpop.f32.mrf.mxu0
    %v3417 = vadd.f32 %v3173, %v3416
    %3418 = vmatprep.mubr.bf16.mxu0 0
    %3419 = vmatmul.mubr.bf16.gmra.mxu0 %v3146
    %v3420 = vpop.f32.mrf.mxu0
    %v3421 = vadd.f32 %v3169, %v3420
    %v3422 = vpop.f32.mrf.mxu0
    %v3423 = vadd.f32 %v3173, %v3422
    %v3424 = vpop.f32.mrf.mxu0
    %v3425 = vadd.f32 %v3169, %v3424
    %v3426 = vpop.f32.mrf.mxu0
    %v3427 = vadd.f32 %v3173, %v3426
    %3428 = vmatprep.mubr.bf16.mxu0 0
    %3429 = vmatmul.mubr.bf16.gmra.mxu0 %v3147
    %v3430 = vpop.f32.mrf.mxu0
    %v3431 = vadd.f32 %v3169, %v3430
    %v3432 = vpop.f32.mrf.mxu0
    %v3433 = vadd.f32 %v3173, %v3432
    %v3434 = vpop.f32.mrf.mxu0
    %v3435 = vadd.f32 %v3169, %v3434
    %v3436 = vpop.f32.mrf.mxu0
    %v3437 = vadd.f32 %v3173, %v3436
    %3438 = vmatprep.mubr.bf16.mxu0 0
    %3439 = vmatmul.mubr.bf16.gmra.mxu0 %v3148
    %v3440 = vpop.f32.mrf.mxu0
    %v3441 = vadd.f32 %v3169, %v3440
    %v3442 = vpop.f32.mrf.mxu0
    %v3443 = vadd.f32 %v3173, %v3442
    %v3444 = vpop.f32.mrf.mxu0
    %v3445 = vadd.f32 %v3169, %v3444
    %v3446 = vpop.f32.mrf.mxu0
    %v3447 = vadd.f32 %v3173, %v3446
    %3448 = vmatprep.mubr.bf16.mxu0 0
    %3449 = vmatmul.mubr.bf16.gmra.mxu0 %v3149
    %v3450 = vpop.f32.mrf.mxu0
    %v3451 = vadd.f32 %v3169, %v3450
    %v3452 = vpop.f32.mrf.mxu0
    %v3453 = vadd.f32 %v3173, %v3452
    %v3454 = vpop.f32.mrf.mxu0
    %v3455 = vadd.f32 %v3169, %v3454
    %v3456 = vpop.f32.mrf.mxu0
    %v3457 = vadd.f32 %v3173, %v3456
    %3458 = vmatprep.mubr.bf16.mxu0 0
    %3459 = vmatmul.mubr.bf16.gmra.mxu0 %v3150
    %v3460 = vpop.f32.mrf.mxu0
    %v3461 = vadd.f32 %v3169, %v3460
    %v3462 = vpop.f32.mrf.mxu0
    %v3463 = vadd.f32 %v3173, %v3462
    %v3464 = vpop.f32.mrf.mxu0
    %v3465 = vadd.f32 %v3169, %v3464
    %v3466 = vpop.f32.mrf.mxu0
    %v3467 = vadd.f32 %v3173, %v3466
    %3468 = vmatprep.mubr.bf16.mxu0 0
    %3469 = vmatmul.mubr.bf16.gmra.mxu0 %v3151
    %v3470 = vpop.f32.mrf.mxu0
    %v3471 = vadd.f32 %v3169, %v3470
    %v3472 = vpop.f32.mrf.mxu0
    %v3473 = vadd.f32 %v3173, %v3472
    %v3474 = vpop.f32.mrf.mxu0
    %v3475 = vadd.f32 %v3169, %v3474
    %v3476 = vpop.f32.mrf.mxu0
    %v3477 = vadd.f32 %v3173, %v3476
    %3478 = vmatprep.mubr.bf16.mxu0 0
    %3479 = vmatmul.mubr.bf16.gmra.mxu0 %v3152
    %v3480 = vpop.f32.mrf.mxu0
    %v3481 = vadd.f32 %v3169, %v3480
    %v3482 = vpop.f32.mrf.mxu0
    %v3483 = vadd.f32 %v3173, %v3482
    %v3484 = vpop.f32.mrf.mxu0
    %v3485 = vadd.f32 %v3169, %v3484
    %v3486 = vpop.f32.mrf.mxu0
    %v3487 = vadd.f32 %v3173, %v3486
    %3488 = vmatprep.mubr.bf16.mxu0 0
    %3489 = vmatmul.mubr.bf16.gmra.mxu0 %v3153
    %v3490 = vpop.f32.mrf.mxu0
    %v3491 = vadd.f32 %v3169, %v3490
    %v3492 = vpop.f32.mrf.mxu0
    %v3493 = vadd.f32 %v3173, %v3492
    %v3494 = vpop.f32.mrf.mxu0
    %v3495 = vadd.f32 %v3169, %v3494
    %v3496 = vpop.f32.mrf.mxu0
    %v3497 = vadd.f32 %v3173, %v3496
    %3498 = vmatprep.mubr.bf16.mxu0 0
    %3499 = vmatmul.mubr.bf16.gmra.mxu0 %v3154
    %v3500 = vpop.f32.mrf.mxu0
    %v3501 = vadd.f32 %v3169, %v3500
    %v3502 = vpop.f32.mrf.mxu0
    %v3503 = vadd.f32 %v3173, %v3502
    %v3504 = vpop.f32.mrf.mxu0
    %v3505 = vadd.f32 %v3169, %v3504
    %v3506 = vpop.f32.mrf.mxu0
    %v3507 = vadd.f32 %v3173, %v3506
    %3508 = vmatprep.mubr.bf16.mxu0 0
    %3509 = vmatmul.mubr.bf16.gmra.mxu0 %v3155
    %v3510 = vpop.f32.mrf.mxu0
    %v3511 = vadd.f32 %v3169, %v3510
    %v3512 = vpop.f32.mrf.mxu0
    %v3513 = vadd.f32 %v3173, %v3512
    %v3514 = vpop.f32.mrf.mxu0
    %v3515 = vadd.f32 %v3169, %v3514
    %v3516 = vpop.f32.mrf.mxu0
    %v3517 = vadd.f32 %v3173, %v3516
    %3518 = vmatprep.mubr.bf16.mxu0 0
    %3519 = vmatmul.mubr.bf16.gmra.mxu0 %v3156
    %v3520 = vpop.f32.mrf.mxu0
    %v3521 = vadd.f32 %v3169, %v3520
    %v3522 = vpop.f32.mrf.mxu0
    %v3523 = vadd.f32 %v3173, %v3522
    %v3524 = vpop.f32.mrf.mxu0
    %v3525 = vadd.f32 %v3169, %v3524
    %v3526 = vpop.f32.mrf.mxu0
    %v3527 = vadd.f32 %v3173, %v3526
    %3528 = vmatprep.mubr.bf16.mxu0 0
    %3529 = vmatmul.mubr.bf16.gmra.mxu0 %v3157
    %v3530 = vpop.f32.mrf.mxu0
    %v3531 = vadd.f32 %v3169, %v3530
    %v3532 = vpop.f32.mrf.mxu0
    %v3533 = vadd.f32 %v3173, %v3532
    %v3534 = vpop.f32.mrf.mxu0
    %v3535 = vadd.f32 %v3169, %v3534
    %v3536 = vpop.f32.mrf.mxu0
    %v3537 = vadd.f32 %v3173, %v3536
    %3538 = vmatprep.mubr.bf16.mxu0 0
    %3539 = vmatmul.mubr.bf16.gmra.mxu0 %v3158
    %v3540 = vpop.f32.mrf.mxu0
    %v3541 = vadd.f32 %v3169, %v3540
    %v3542 = vpop.f32.mrf.mxu0
    %v3543 = vadd.f32 %v3173, %v3542
    %v3544 = vpop.f32.mrf.mxu0
    %v3545 = vadd.f32 %v3169, %v3544
    %v3546 = vpop.f32.mrf.mxu0
    %v3547 = vadd.f32 %v3173, %v3546
    %3548 = vmatprep.mubr.bf16.mxu0 0
    %3549 = vmatmul.mubr.bf16.gmra.mxu0 %v3159
    %v3550 = vpop.f32.mrf.mxu0
    %v3551 = vadd.f32 %v3169, %v3550
    %v3552 = vpop.f32.mrf.mxu0
    %v3553 = vadd.f32 %v3173, %v3552
    %v3554 = vpop.f32.mrf.mxu0
    %v3555 = vadd.f32 %v3169, %v3554
    %v3556 = vpop.f32.mrf.mxu0
    %v3557 = vadd.f32 %v3173, %v3556
    %3558 = vmatprep.mubr.bf16.mxu0 0
    %3559 = vmatmul.mubr.bf16.gmra.mxu0 %v3160
    %v3560 = vpop.f32.mrf.mxu0
    %v3561 = vadd.f32 %v3169, %v3560
    %v3562 = vpop.f32.mrf.mxu0
    %v3563 = vadd.f32 %v3173, %v3562
    %v3564 = vpop.f32.mrf.mxu0
    %v3565 = vadd.f32 %v3169, %v3564
    %v3566 = vpop.f32.mrf.mxu0
    %v3567 = vadd.f32 %v3173, %v3566
    %3568 = vmatprep.mubr.bf16.mxu0 0
    %3569 = vmatmul.mubr.bf16.gmra.mxu0 %v3161
    %v3570 = vpop.f32.mrf.mxu0
    %v3571 = vadd.f32 %v3169, %v3570
    %v3572 = vpop.f32.mrf.mxu0
    %v3573 = vadd.f32 %v3173, %v3572
    %v3574 = vpop.f32.mrf.mxu0
    %v3575 = vadd.f32 %v3169, %v3574
    %v3576 = vpop.f32.mrf.mxu0
    %v3577 = vadd.f32 %v3173, %v3576
    %3578 = vmatprep.mubr.bf16.mxu0 0
    %3579 = vmatmul.mubr.bf16.gmra.mxu0 %v3162
    %v3580 = vpop.f32.mrf.mxu0
    %v3581 = vadd.f32 %v3169, %v3580
    %v3582 = vpop.f32.mrf.mxu0
    %v3583 = vadd.f32 %v3173, %v3582
    %v3584 = vpop.f32.mrf.mxu0
    %v3585 = vadd.f32 %v3169, %v3584
    %v3586 = vpop.f32.mrf.mxu0
    %v3587 = vadd.f32 %v3173, %v3586
    %3588 = vmatprep.mubr.bf16.mxu0 0
    %3589 = vmatmul.mubr.bf16.gmra.mxu0 %v3163
    %v3590 = vpop.f32.mrf.mxu0
    %v3591 = vadd.f32 %v3169, %v3590
    %v3592 = vpop.f32.mrf.mxu0
    %v3593 = vadd.f32 %v3173, %v3592
    %v3594 = vpop.f32.mrf.mxu0
    %v3595 = vadd.f32 %v3169, %v3594
    %v3596 = vpop.f32.mrf.mxu0
    %v3597 = vadd.f32 %v3173, %v3596
    %3598 = vmatprep.mubr.bf16.mxu0 0
    %3599 = vmatmul.mubr.bf16.gmra.mxu0 %v3164
    %v3600 = vpop.f32.mrf.mxu0
    %v3601 = vadd.f32 %v3169, %v3600
    %v3602 = vpop.f32.mrf.mxu0
    %v3603 = vadd.f32 %v3173, %v3602
    %v3604 = vpop.f32.mrf.mxu0
    %v3605 = vadd.f32 %v3169, %v3604
    %v3606 = vpop.f32.mrf.mxu0
    %v3607 = vadd.f32 %v3173, %v3606
    %3608 = vdwg.mxu0
    %v3609 = vmax.f32 %v3291, 0.0
    %v3610 = vmax.f32 %v3293, 0.0
    %v3611 = vmax.f32 %v3295, 0.0
    %v3612 = vmax.f32 %v3297, 0.0
    %v3613 = vmax.f32 %v3301, 0.0
    %v3614 = vmax.f32 %v3303, 0.0
    %v3615 = vmax.f32 %v3305, 0.0
    %v3616 = vmax.f32 %v3307, 0.0
    %v3617 = vmax.f32 %v3311, 0.0
    %v3618 = vmax.f32 %v3313, 0.0
    %v3619 = vmax.f32 %v3315, 0.0
    %v3620 = vmax.f32 %v3317, 0.0
    %v3621 = vmax.f32 %v3321, 0.0
    %v3622 = vmax.f32 %v3323, 0.0
    %v3623 = vmax.f32 %v3325, 0.0
    %v3624 = vmax.f32 %v3327, 0.0
    %v3625 = vmax.f32 %v3331, 0.0
    %v3626 = vmax.f32 %v3333, 0.0
    %v3627 = vmax.f32 %v3335, 0.0
    %v3628 = vmax.f32 %v3337, 0.0
    %v3629 = vmax.f32 %v3341, 0.0
    %v3630 = vmax.f32 %v3343, 0.0
    %v3631 = vmax.f32 %v3345, 0.0
    %v3632 = vmax.f32 %v3347, 0.0
    %v3633 = vmax.f32 %v3351, 0.0
    %v3634 = vmax.f32 %v3353, 0.0
    %v3635 = vmax.f32 %v3355, 0.0
    %v3636 = vmax.f32 %v3357, 0.0
    %v3637 = vmax.f32 %v3361, 0.0
    %v3638 = vmax.f32 %v3363, 0.0
    %v3639 = vmax.f32 %v3365, 0.0
    %v3640 = vmax.f32 %v3367, 0.0
    %v3641 = vmax.f32 %v3371, 0.0
    %v3642 = vmax.f32 %v3373, 0.0
    %v3643 = vmax.f32 %v3375, 0.0
    %v3644 = vmax.f32 %v3377, 0.0
    %v3645 = vmax.f32 %v3381, 0.0
    %v3646 = vmax.f32 %v3383, 0.0
    %v3647 = vmax.f32 %v3385, 0.0
    %v3648 = vmax.f32 %v3387, 0.0
    %v3649 = vmax.f32 %v3391, 0.0
    %v3650 = vmax.f32 %v3393, 0.0
    %v3651 = vmax.f32 %v3395, 0.0
    %v3652 = vmax.f32 %v3397, 0.0
    %v3653 = vmax.f32 %v3401, 0.0
    %v3654 = vmax.f32 %v3403, 0.0
    %v3655 = vmax.f32 %v3405, 0.0
    %v3656 = vmax.f32 %v3407, 0.0
    %v3657 = vmax.f32 %v3411, 0.0
    %v3658 = vmax.f32 %v3413, 0.0
    %v3659 = vmax.f32 %v3415, 0.0
    %v3660 = vmax.f32 %v3417, 0.0
    %v3661 = vmax.f32 %v3421, 0.0
    %v3662 = vmax.f32 %v3423, 0.0
    %v3663 = vmax.f32 %v3425, 0.0
    %v3664 = vmax.f32 %v3427, 0.0
    %v3665 = vmax.f32 %v3431, 0.0
    %v3666 = vmax.f32 %v3433, 0.0
    %v3667 = vmax.f32 %v3435, 0.0
    %v3668 = vmax.f32 %v3437, 0.0
    %v3669 = vmax.f32 %v3441, 0.0
    %v3670 = vmax.f32 %v3443, 0.0
    %v3671 = vmax.f32 %v3445, 0.0
    %v3672 = vmax.f32 %v3447, 0.0
    %v3673 = vmax.f32 %v3451, 0.0
    %v3674 = vmax.f32 %v3453, 0.0
    %v3675 = vmax.f32 %v3455, 0.0
    %v3676 = vmax.f32 %v3457, 0.0
    %v3677 = vmax.f32 %v3461, 0.0
    %v3678 = vmax.f32 %v3463, 0.0
    %v3679 = vmax.f32 %v3465, 0.0
    %v3680 = vmax.f32 %v3467, 0.0
    %v3681 = vmax.f32 %v3471, 0.0
    %v3682 = vmax.f32 %v3473, 0.0
    %v3683 = vmax.f32 %v3475, 0.0
    %v3684 = vmax.f32 %v3477, 0.0
    %v3685 = vmax.f32 %v3481, 0.0
    %v3686 = vmax.f32 %v3483, 0.0
    %v3687 = vmax.f32 %v3485, 0.0
    %v3688 = vmax.f32 %v3487, 0.0
    %v3689 = vmax.f32 %v3491, 0.0
    %v3690 = vmax.f32 %v3493, 0.0
    %v3691 = vmax.f32 %v3495, 0.0
    %v3692 = vmax.f32 %v3497, 0.0
    %v3693 = vmax.f32 %v3501, 0.0
    %v3694 = vmax.f32 %v3503, 0.0
    %v3695 = vmax.f32 %v3505, 0.0
    %v3696 = vmax.f32 %v3507, 0.0
    %v3697 = vmax.f32 %v3511, 0.0
    %v3698 = vmax.f32 %v3513, 0.0
    %v3699 = vmax.f32 %v3515, 0.0
    %v3700 = vmax.f32 %v3517, 0.0
    %v3701 = vmax.f32 %v3521, 0.0
    %v3702 = vmax.f32 %v3523, 0.0
    %v3703 = vmax.f32 %v3525, 0.0
    %v3704 = vmax.f32 %v3527, 0.0
    %v3705 = vmax.f32 %v3531, 0.0
    %v3706 = vmax.f32 %v3533, 0.0
    %v3707 = vmax.f32 %v3535, 0.0
    %v3708 = vmax.f32 %v3537, 0.0
    %v3709 = vmax.f32 %v3541, 0.0
    %v3710 = vmax.f32 %v3543, 0.0
    %v3711 = vmax.f32 %v3545, 0.0
    %v3712 = vmax.f32 %v3547, 0.0
    %v3713 = vmax.f32 %v3551, 0.0
    %v3714 = vmax.f32 %v3553, 0.0
    %v3715 = vmax.f32 %v3555, 0.0
    %v3716 = vmax.f32 %v3557, 0.0
    %v3717 = vmax.f32 %v3561, 0.0
    %v3718 = vmax.f32 %v3563, 0.0
    %v3719 = vmax.f32 %v3565, 0.0
    %v3720 = vmax.f32 %v3567, 0.0
    %v3721 = vmax.f32 %v3571, 0.0
    %v3722 = vmax.f32 %v3573, 0.0
    %v3723 = vmax.f32 %v3575, 0.0
    %v3724 = vmax.f32 %v3577, 0.0
    %v3725 = vmax.f32 %v3581, 0.0
    %v3726 = vmax.f32 %v3583, 0.0
    %v3727 = vmax.f32 %v3585, 0.0
    %v3728 = vmax.f32 %v3587, 0.0
    %v3729 = vmax.f32 %v3591, 0.0
    %v3730 = vmax.f32 %v3593, 0.0
    %v3731 = vmax.f32 %v3595, 0.0
    %v3732 = vmax.f32 %v3597, 0.0
    %v3733 = vmax.f32 %v3601, 0.0
    %v3734 = vmax.f32 %v3603, 0.0
    %v3735 = vmax.f32 %v3605, 0.0
    %v3736 = vmax.f32 %v3607, 0.0
    %v3737 = vpack.c.bf16 %v3611, %v3609
    %v3738 = vpack.c.bf16 %v3612, %v3610
    %v3739 = vpack.c.bf16 %v3615, %v3613
    %v3740 = vpack.c.bf16 %v3616, %v3614
    %v3741 = vpack.c.bf16 %v3619, %v3617
    %v3742 = vpack.c.bf16 %v3620, %v3618
    %v3743 = vpack.c.bf16 %v3623, %v3621
    %v3744 = vpack.c.bf16 %v3624, %v3622
    %v3745 = vpack.c.bf16 %v3627, %v3625
    %v3746 = vpack.c.bf16 %v3628, %v3626
    %v3747 = vpack.c.bf16 %v3631, %v3629
    %v3748 = vpack.c.bf16 %v3632, %v3630
    %v3749 = vpack.c.bf16 %v3635, %v3633
    %v3750 = vpack.c.bf16 %v3636, %v3634
    %v3751 = vpack.c.bf16 %v3639, %v3637
    %v3752 = vpack.c.bf16 %v3640, %v3638
    %v3753 = vpack.c.bf16 %v3643, %v3641
    %v3754 = vpack.c.bf16 %v3644, %v3642
    %v3755 = vpack.c.bf16 %v3647, %v3645
    %v3756 = vpack.c.bf16 %v3648, %v3646
    %v3757 = vpack.c.bf16 %v3651, %v3649
    %v3758 = vpack.c.bf16 %v3652, %v3650
    %v3759 = vpack.c.bf16 %v3655, %v3653
    %v3760 = vpack.c.bf16 %v3656, %v3654
    %v3761 = vpack.c.bf16 %v3659, %v3657
    %v3762 = vpack.c.bf16 %v3660, %v3658
    %v3763 = vpack.c.bf16 %v3663, %v3661
    %v3764 = vpack.c.bf16 %v3664, %v3662
    %v3765 = vpack.c.bf16 %v3667, %v3665
    %v3766 = vpack.c.bf16 %v3668, %v3666
    %v3767 = vpack.c.bf16 %v3671, %v3669
    %v3768 = vpack.c.bf16 %v3672, %v3670
    %v3769 = vpack.c.bf16 %v3675, %v3673
    %v3770 = vpack.c.bf16 %v3676, %v3674
    %v3771 = vpack.c.bf16 %v3679, %v3677
    %v3772 = vpack.c.bf16 %v3680, %v3678
    %v3773 = vpack.c.bf16 %v3683, %v3681
    %v3774 = vpack.c.bf16 %v3684, %v3682
    %v3775 = vpack.c.bf16 %v3687, %v3685
    %v3776 = vpack.c.bf16 %v3688, %v3686
    %v3777 = vpack.c.bf16 %v3691, %v3689
    %v3778 = vpack.c.bf16 %v3692, %v3690
    %v3779 = vpack.c.bf16 %v3695, %v3693
    %v3780 = vpack.c.bf16 %v3696, %v3694
    %v3781 = vpack.c.bf16 %v3699, %v3697
    %v3782 = vpack.c.bf16 %v3700, %v3698
    %v3783 = vpack.c.bf16 %v3703, %v3701
    %v3784 = vpack.c.bf16 %v3704, %v3702
    %v3785 = vpack.c.bf16 %v3707, %v3705
    %v3786 = vpack.c.bf16 %v3708, %v3706
    %v3787 = vpack.c.bf16 %v3711, %v3709
    %v3788 = vpack.c.bf16 %v3712, %v3710
    %v3789 = vpack.c.bf16 %v3715, %v3713
    %v3790 = vpack.c.bf16 %v3716, %v3714
    %v3791 = vpack.c.bf16 %v3719, %v3717
    %v3792 = vpack.c.bf16 %v3720, %v3718
    %v3793 = vpack.c.bf16 %v3723, %v3721
    %v3794 = vpack.c.bf16 %v3724, %v3722
    %v3795 = vpack.c.bf16 %v3727, %v3725
    %v3796 = vpack.c.bf16 %v3728, %v3726
    %v3797 = vpack.c.bf16 %v3731, %v3729
    %v3798 = vpack.c.bf16 %v3732, %v3730
    %v3799 = vpack.c.bf16 %v3735, %v3733
    %v3800 = vpack.c.bf16 %v3736, %v3734
    %v3833 = vunpack.c.l.b16 %v2255
    %v3834 = vunpack.c.l.b16 %v2256
    %v3835 = vunpack.c.l.b16 %v2257
    %v3836 = vunpack.c.l.b16 %v2258
    %v3837 = vunpack.c.l.b16 %v2259
    %v3838 = vunpack.c.l.b16 %v2260
    %v3839 = vunpack.c.l.b16 %v2261
    %v3840 = vunpack.c.l.b16 %v2262
    %v3841 = vunpack.c.l.b16 %v2263
    %v3842 = vunpack.c.l.b16 %v2264
    %v3843 = vunpack.c.l.b16 %v2265
    %v3844 = vunpack.c.l.b16 %v2266
    %v3845 = vunpack.c.l.b16 %v2267
    %v3846 = vunpack.c.l.b16 %v2268
    %v3847 = vunpack.c.l.b16 %v2269
    %v3848 = vunpack.c.l.b16 %v2270
    %v3849 = vunpack.c.l.b16 %v2271
    %v3850 = vunpack.c.l.b16 %v2272
    %v3851 = vunpack.c.l.b16 %v2273
    %v3852 = vunpack.c.l.b16 %v2274
    %v3853 = vunpack.c.l.b16 %v2275
    %v3854 = vunpack.c.l.b16 %v2276
    %v3855 = vunpack.c.l.b16 %v2277
    %v3856 = vunpack.c.l.b16 %v2278
    %v3857 = vunpack.c.l.b16 %v2279
    %v3858 = vunpack.c.l.b16 %v2280
    %v3859 = vunpack.c.l.b16 %v2281
    %v3860 = vunpack.c.l.b16 %v2282
    %v3861 = vunpack.c.l.b16 %v2283
    %v3862 = vunpack.c.l.b16 %v2284
    %v3863 = vunpack.c.l.b16 %v2285
    %v3864 = vunpack.c.l.b16 %v2286
    %v3865 = vpack.c.b16 %v3834, %v3833
    %v3866 = vpack.c.b16 %v3836, %v3835
    %v3867 = vpack.c.b16 %v3838, %v3837
    %v3868 = vpack.c.b16 %v3840, %v3839
    %v3869 = vpack.c.b16 %v3842, %v3841
    %v3870 = vpack.c.b16 %v3844, %v3843
    %v3871 = vpack.c.b16 %v3846, %v3845
    %v3872 = vpack.c.b16 %v3848, %v3847
    %v3873 = vpack.c.b16 %v3850, %v3849
    %v3874 = vpack.c.b16 %v3852, %v3851
    %v3875 = vpack.c.b16 %v3854, %v3853
    %v3876 = vpack.c.b16 %v3856, %v3855
    %v3877 = vpack.c.b16 %v3858, %v3857
    %v3878 = vpack.c.b16 %v3860, %v3859
    %v3879 = vpack.c.b16 %v3862, %v3861
    %v3880 = vpack.c.b16 %v3864, %v3863
    %3897 = vmatprep.subr.bf16.mxu0 0
    %3898 = vmatpush1.bf16.msra.mxu0 %v3872
    %3899 = vmatprep.subr.bf16.mxu0 0
    %3900 = vmatpush1.bf16.msra.mxu0 %v3871
    %3901 = vmatprep.subr.bf16.mxu0 0
    %3902 = vmatpush1.bf16.msra.mxu0 %v3870
    %3903 = vmatprep.subr.bf16.mxu0 0
    %3904 = vmatpush1.bf16.msra.mxu0 %v3869
    %3905 = vmatprep.subr.bf16.mxu0 0
    %3906 = vmatpush1.bf16.msra.mxu0 %v3868
    %3907 = vmatprep.subr.bf16.mxu0 0
    %3908 = vmatpush1.bf16.msra.mxu0 %v3867
    %3909 = vmatprep.subr.bf16.mxu0 0
    %3910 = vmatpush1.bf16.msra.mxu0 %v3866
    %3911 = vmatprep.subr.bf16.mxu0 0
    %3912 = vmatpush1.bf16.msra.mxu0 %v3865
    %3913 = vmatprep.subr.bf16.mxu0 0
    %3914 = vmatpush2.bf16.msra.mxu0 %v3880
    %3915 = vmatprep.subr.bf16.mxu0 0
    %3916 = vmatpush2.bf16.msra.mxu0 %v3879
    %3917 = vmatprep.subr.bf16.mxu0 0
    %3918 = vmatpush2.bf16.msra.mxu0 %v3878
    %3919 = vmatprep.subr.bf16.mxu0 0
    %3920 = vmatpush2.bf16.msra.mxu0 %v3877
    %3921 = vmatprep.subr.bf16.mxu0 0
    %3922 = vmatpush2.bf16.msra.mxu0 %v3876
    %3923 = vmatprep.subr.bf16.mxu0 0
    %3924 = vmatpush2.bf16.msra.mxu0 %v3875
    %3925 = vmatprep.subr.bf16.mxu0 0
    %3926 = vmatpush2.bf16.msra.mxu0 %v3874
    %3927 = vmatprep.subr.bf16.mxu0 0
    %3928 = vmatpush2.bf16.msra.mxu0 %v3873
    %3929 = vmatprep.mubr.bf16.mxu0 %v3738
    %3930 = vmatmul.mubr.bf16.gmra.mxu0 %v3737
    %v3931 = vpop.f32.mrf.mxu0
    %v3932 = vadd.f32 0.0, %v3931
    %v3933 = vpop.f32.mrf.mxu0
    %v3934 = vpop.f32.mrf.mxu0
    %v3935 = vadd.f32 0.0, %v3934
    %v3936 = vpop.f32.mrf.mxu0
    %3937 = vmatprep.mubr.bf16.mxu0 %v3740
    %3938 = vmatmul.mubr.bf16.gmra.mxu0 %v3739
    %v3939 = vpop.f32.mrf.mxu0
    %v3940 = vadd.f32 0.0, %v3939
    %v3941 = vpop.f32.mrf.mxu0
    %v3942 = vpop.f32.mrf.mxu0
    %v3943 = vadd.f32 0.0, %v3942
    %v3944 = vpop.f32.mrf.mxu0
    %3945 = vmatprep.mubr.bf16.mxu0 %v3742
    %3946 = vmatmul.mubr.bf16.gmra.mxu0 %v3741
    %v3947 = vpop.f32.mrf.mxu0
    %v3948 = vadd.f32 0.0, %v3947
    %v3949 = vpop.f32.mrf.mxu0
    %v3950 = vpop.f32.mrf.mxu0
    %v3951 = vadd.f32 0.0, %v3950
    %v3952 = vpop.f32.mrf.mxu0
    %3953 = vmatprep.mubr.bf16.mxu0 %v3744
    %3954 = vmatmul.mubr.bf16.gmra.mxu0 %v3743
    %v3955 = vpop.f32.mrf.mxu0
    %v3956 = vadd.f32 0.0, %v3955
    %v3957 = vpop.f32.mrf.mxu0
    %v3958 = vpop.f32.mrf.mxu0
    %v3959 = vadd.f32 0.0, %v3958
    %v3960 = vpop.f32.mrf.mxu0
    %3961 = vmatprep.mubr.bf16.mxu0 %v3746
    %3962 = vmatmul.mubr.bf16.gmra.mxu0 %v3745
    %v3963 = vpop.f32.mrf.mxu0
    %v3964 = vadd.f32 0.0, %v3963
    %v3965 = vpop.f32.mrf.mxu0
    %v3966 = vpop.f32.mrf.mxu0
    %v3967 = vadd.f32 0.0, %v3966
    %v3968 = vpop.f32.mrf.mxu0
    %3969 = vmatprep.mubr.bf16.mxu0 %v3748
    %3970 = vmatmul.mubr.bf16.gmra.mxu0 %v3747
    %v3971 = vpop.f32.mrf.mxu0
    %v3972 = vadd.f32 0.0, %v3971
    %v3973 = vpop.f32.mrf.mxu0
    %v3974 = vpop.f32.mrf.mxu0
    %v3975 = vadd.f32 0.0, %v3974
    %v3976 = vpop.f32.mrf.mxu0
    %3977 = vmatprep.mubr.bf16.mxu0 %v3750
    %3978 = vmatmul.mubr.bf16.gmra.mxu0 %v3749
    %v3979 = vpop.f32.mrf.mxu0
    %v3980 = vadd.f32 0.0, %v3979
    %v3981 = vpop.f32.mrf.mxu0
    %v3982 = vpop.f32.mrf.mxu0
    %v3983 = vadd.f32 0.0, %v3982
    %v3984 = vpop.f32.mrf.mxu0
    %3985 = vmatprep.mubr.bf16.mxu0 %v3752
    %3986 = vmatmul.mubr.bf16.gmra.mxu0 %v3751
    %v3987 = vpop.f32.mrf.mxu0
    %v3988 = vadd.f32 0.0, %v3987
    %v3989 = vpop.f32.mrf.mxu0
    %v3990 = vpop.f32.mrf.mxu0
    %v3991 = vadd.f32 0.0, %v3990
    %v3992 = vpop.f32.mrf.mxu0
    %3993 = vmatprep.mubr.bf16.mxu0 %v3754
    %3994 = vmatmul.mubr.bf16.gmra.mxu0 %v3753
    %v3995 = vpop.f32.mrf.mxu0
    %v3996 = vadd.f32 0.0, %v3995
    %v3997 = vpop.f32.mrf.mxu0
    %v3998 = vpop.f32.mrf.mxu0
    %v3999 = vadd.f32 0.0, %v3998
    %v4000 = vpop.f32.mrf.mxu0
    %4001 = vmatprep.mubr.bf16.mxu0 %v3756
    %4002 = vmatmul.mubr.bf16.gmra.mxu0 %v3755
    %v4003 = vpop.f32.mrf.mxu0
    %v4004 = vadd.f32 0.0, %v4003
    %v4005 = vpop.f32.mrf.mxu0
    %v4006 = vpop.f32.mrf.mxu0
    %v4007 = vadd.f32 0.0, %v4006
    %v4008 = vpop.f32.mrf.mxu0
    %4009 = vmatprep.mubr.bf16.mxu0 %v3758
    %4010 = vmatmul.mubr.bf16.gmra.mxu0 %v3757
    %v4011 = vpop.f32.mrf.mxu0
    %v4012 = vadd.f32 0.0, %v4011
    %v4013 = vpop.f32.mrf.mxu0
    %v4014 = vpop.f32.mrf.mxu0
    %v4015 = vadd.f32 0.0, %v4014
    %v4016 = vpop.f32.mrf.mxu0
    %4017 = vmatprep.mubr.bf16.mxu0 %v3760
    %4018 = vmatmul.mubr.bf16.gmra.mxu0 %v3759
    %v4019 = vpop.f32.mrf.mxu0
    %v4020 = vadd.f32 0.0, %v4019
    %v4021 = vpop.f32.mrf.mxu0
    %v4022 = vpop.f32.mrf.mxu0
    %v4023 = vadd.f32 0.0, %v4022
    %v4024 = vpop.f32.mrf.mxu0
    %4025 = vmatprep.mubr.bf16.mxu0 %v3762
    %4026 = vmatmul.mubr.bf16.gmra.mxu0 %v3761
    %v4027 = vpop.f32.mrf.mxu0
    %v4028 = vadd.f32 0.0, %v4027
    %v4029 = vpop.f32.mrf.mxu0
    %v4030 = vpop.f32.mrf.mxu0
    %v4031 = vadd.f32 0.0, %v4030
    %v4032 = vpop.f32.mrf.mxu0
    %4033 = vmatprep.mubr.bf16.mxu0 %v3764
    %4034 = vmatmul.mubr.bf16.gmra.mxu0 %v3763
    %v4035 = vpop.f32.mrf.mxu0
    %v4036 = vadd.f32 0.0, %v4035
    %v4037 = vpop.f32.mrf.mxu0
    %v4038 = vpop.f32.mrf.mxu0
    %v4039 = vadd.f32 0.0, %v4038
    %v4040 = vpop.f32.mrf.mxu0
    %4041 = vmatprep.mubr.bf16.mxu0 %v3766
    %4042 = vmatmul.mubr.bf16.gmra.mxu0 %v3765
    %v4043 = vpop.f32.mrf.mxu0
    %v4044 = vadd.f32 0.0, %v4043
    %v4045 = vpop.f32.mrf.mxu0
    %v4046 = vpop.f32.mrf.mxu0
    %v4047 = vadd.f32 0.0, %v4046
    %v4048 = vpop.f32.mrf.mxu0
    %4049 = vmatprep.mubr.bf16.mxu0 %v3768
    %4050 = vmatmul.mubr.bf16.gmra.mxu0 %v3767
    %v4051 = vpop.f32.mrf.mxu0
    %v4052 = vadd.f32 0.0, %v4051
    %v4053 = vpop.f32.mrf.mxu0
    %v4054 = vpop.f32.mrf.mxu0
    %v4055 = vadd.f32 0.0, %v4054
    %v4056 = vpop.f32.mrf.mxu0
    %4057 = vmatprep.mubr.bf16.mxu0 %v3770
    %4058 = vmatmul.mubr.bf16.gmra.mxu0 %v3769
    %v4059 = vpop.f32.mrf.mxu0
    %v4060 = vadd.f32 0.0, %v4059
    %v4061 = vpop.f32.mrf.mxu0
    %v4062 = vpop.f32.mrf.mxu0
    %v4063 = vadd.f32 0.0, %v4062
    %v4064 = vpop.f32.mrf.mxu0
    %4065 = vmatprep.mubr.bf16.mxu0 %v3772
    %4066 = vmatmul.mubr.bf16.gmra.mxu0 %v3771
    %v4067 = vpop.f32.mrf.mxu0
    %v4068 = vadd.f32 0.0, %v4067
    %v4069 = vpop.f32.mrf.mxu0
    %v4070 = vpop.f32.mrf.mxu0
    %v4071 = vadd.f32 0.0, %v4070
    %v4072 = vpop.f32.mrf.mxu0
    %4073 = vmatprep.mubr.bf16.mxu0 %v3774
    %4074 = vmatmul.mubr.bf16.gmra.mxu0 %v3773
    %v4075 = vpop.f32.mrf.mxu0
    %v4076 = vadd.f32 0.0, %v4075
    %v4077 = vpop.f32.mrf.mxu0
    %v4078 = vpop.f32.mrf.mxu0
    %v4079 = vadd.f32 0.0, %v4078
    %v4080 = vpop.f32.mrf.mxu0
    %4081 = vmatprep.mubr.bf16.mxu0 %v3776
    %4082 = vmatmul.mubr.bf16.gmra.mxu0 %v3775
    %v4083 = vpop.f32.mrf.mxu0
    %v4084 = vadd.f32 0.0, %v4083
    %v4085 = vpop.f32.mrf.mxu0
    %v4086 = vpop.f32.mrf.mxu0
    %v4087 = vadd.f32 0.0, %v4086
    %v4088 = vpop.f32.mrf.mxu0
    %4089 = vmatprep.mubr.bf16.mxu0 %v3778
    %4090 = vmatmul.mubr.bf16.gmra.mxu0 %v3777
    %v4091 = vpop.f32.mrf.mxu0
    %v4092 = vadd.f32 0.0, %v4091
    %v4093 = vpop.f32.mrf.mxu0
    %v4094 = vpop.f32.mrf.mxu0
    %v4095 = vadd.f32 0.0, %v4094
    %v4096 = vpop.f32.mrf.mxu0
    %4097 = vmatprep.mubr.bf16.mxu0 %v3780
    %4098 = vmatmul.mubr.bf16.gmra.mxu0 %v3779
    %v4099 = vpop.f32.mrf.mxu0
    %v4100 = vadd.f32 0.0, %v4099
    %v4101 = vpop.f32.mrf.mxu0
    %v4102 = vpop.f32.mrf.mxu0
    %v4103 = vadd.f32 0.0, %v4102
    %v4104 = vpop.f32.mrf.mxu0
    %4105 = vmatprep.mubr.bf16.mxu0 %v3782
    %4106 = vmatmul.mubr.bf16.gmra.mxu0 %v3781
    %v4107 = vpop.f32.mrf.mxu0
    %v4108 = vadd.f32 0.0, %v4107
    %v4109 = vpop.f32.mrf.mxu0
    %v4110 = vpop.f32.mrf.mxu0
    %v4111 = vadd.f32 0.0, %v4110
    %v4112 = vpop.f32.mrf.mxu0
    %4113 = vmatprep.mubr.bf16.mxu0 %v3784
    %4114 = vmatmul.mubr.bf16.gmra.mxu0 %v3783
    %v4115 = vpop.f32.mrf.mxu0
    %v4116 = vadd.f32 0.0, %v4115
    %v4117 = vpop.f32.mrf.mxu0
    %v4118 = vpop.f32.mrf.mxu0
    %v4119 = vadd.f32 0.0, %v4118
    %v4120 = vpop.f32.mrf.mxu0
    %4121 = vmatprep.mubr.bf16.mxu0 %v3786
    %4122 = vmatmul.mubr.bf16.gmra.mxu0 %v3785
    %v4123 = vpop.f32.mrf.mxu0
    %v4124 = vadd.f32 0.0, %v4123
    %v4125 = vpop.f32.mrf.mxu0
    %v4126 = vpop.f32.mrf.mxu0
    %v4127 = vadd.f32 0.0, %v4126
    %v4128 = vpop.f32.mrf.mxu0
    %4129 = vmatprep.mubr.bf16.mxu0 %v3788
    %4130 = vmatmul.mubr.bf16.gmra.mxu0 %v3787
    %v4131 = vpop.f32.mrf.mxu0
    %v4132 = vadd.f32 0.0, %v4131
    %v4133 = vpop.f32.mrf.mxu0
    %v4134 = vpop.f32.mrf.mxu0
    %v4135 = vadd.f32 0.0, %v4134
    %v4136 = vpop.f32.mrf.mxu0
    %4137 = vmatprep.mubr.bf16.mxu0 %v3790
    %4138 = vmatmul.mubr.bf16.gmra.mxu0 %v3789
    %v4139 = vpop.f32.mrf.mxu0
    %v4140 = vadd.f32 0.0, %v4139
    %v4141 = vpop.f32.mrf.mxu0
    %v4142 = vpop.f32.mrf.mxu0
    %v4143 = vadd.f32 0.0, %v4142
    %v4144 = vpop.f32.mrf.mxu0
    %4145 = vmatprep.mubr.bf16.mxu0 %v3792
    %4146 = vmatmul.mubr.bf16.gmra.mxu0 %v3791
    %v4147 = vpop.f32.mrf.mxu0
    %v4148 = vadd.f32 0.0, %v4147
    %v4149 = vpop.f32.mrf.mxu0
    %v4150 = vpop.f32.mrf.mxu0
    %v4151 = vadd.f32 0.0, %v4150
    %v4152 = vpop.f32.mrf.mxu0
    %4153 = vmatprep.mubr.bf16.mxu0 %v3794
    %4154 = vmatmul.mubr.bf16.gmra.mxu0 %v3793
    %v4155 = vpop.f32.mrf.mxu0
    %v4156 = vadd.f32 0.0, %v4155
    %v4157 = vpop.f32.mrf.mxu0
    %v4158 = vpop.f32.mrf.mxu0
    %v4159 = vadd.f32 0.0, %v4158
    %v4160 = vpop.f32.mrf.mxu0
    %4161 = vmatprep.mubr.bf16.mxu0 %v3796
    %4162 = vmatmul.mubr.bf16.gmra.mxu0 %v3795
    %v4163 = vpop.f32.mrf.mxu0
    %v4164 = vadd.f32 0.0, %v4163
    %v4165 = vpop.f32.mrf.mxu0
    %v4166 = vpop.f32.mrf.mxu0
    %v4167 = vadd.f32 0.0, %v4166
    %v4168 = vpop.f32.mrf.mxu0
    %4169 = vmatprep.mubr.bf16.mxu0 %v3798
    %4170 = vmatmul.mubr.bf16.gmra.mxu0 %v3797
    %v4171 = vpop.f32.mrf.mxu0
    %v4172 = vadd.f32 0.0, %v4171
    %v4173 = vpop.f32.mrf.mxu0
    %v4174 = vpop.f32.mrf.mxu0
    %v4175 = vadd.f32 0.0, %v4174
    %v4176 = vpop.f32.mrf.mxu0
    %4177 = vmatprep.mubr.bf16.mxu0 %v3800
    %4178 = vmatmul.mubr.bf16.gmra.mxu0 %v3799
    %v4179 = vpop.f32.mrf.mxu0
    %v4180 = vadd.f32 0.0, %v4179
    %v4181 = vpop.f32.mrf.mxu0
    %v4182 = vpop.f32.mrf.mxu0
    %v4183 = vadd.f32 0.0, %v4182
    %v4184 = vpop.f32.mrf.mxu0
    %4185 = vdwg.mxu0
    %v4186 = vadd.f32 %v2167, %v3932
    %v4187 = vadd.f32 %v2168, %v3935
    %v4188 = vadd.f32 %v2169, %v3940
    %v4189 = vadd.f32 %v2170, %v3943
    %v4190 = vadd.f32 %v2171, %v3948
    %v4191 = vadd.f32 %v2172, %v3951
    %v4192 = vadd.f32 %v2173, %v3956
    %v4193 = vadd.f32 %v2174, %v3959
    %v4194 = vadd.f32 %v2175, %v3964
    %v4195 = vadd.f32 %v2176, %v3967
    %v4196 = vadd.f32 %v2177, %v3972
    %v4197 = vadd.f32 %v2178, %v3975
    %v4198 = vadd.f32 %v2179, %v3980
    %v4199 = vadd.f32 %v2180, %v3983
    %v4200 = vadd.f32 %v2181, %v3988
    %v4201 = vadd.f32 %v2182, %v3991
    %v4202 = vadd.f32 %v2183, %v3996
    %v4203 = vadd.f32 %v2184, %v3999
    %v4204 = vadd.f32 %v2185, %v4004
    %v4205 = vadd.f32 %v2186, %v4007
    %v4206 = vadd.f32 %v2187, %v4012
    %v4207 = vadd.f32 %v2188, %v4015
    %v4208 = vadd.f32 %v2189, %v4020
    %v4209 = vadd.f32 %v2190, %v4023
    %v4210 = vadd.f32 %v2191, %v4028
    %v4211 = vadd.f32 %v2192, %v4031
    %v4212 = vadd.f32 %v2193, %v4036
    %v4213 = vadd.f32 %v2194, %v4039
    %v4214 = vadd.f32 %v2195, %v4044
    %v4215 = vadd.f32 %v2196, %v4047
    %v4216 = vadd.f32 %v2197, %v4052
    %v4217 = vadd.f32 %v2198, %v4055
    %v4218 = vadd.f32 %v2199, %v4060
    %v4219 = vadd.f32 %v2200, %v4063
    %v4220 = vadd.f32 %v2201, %v4068
    %v4221 = vadd.f32 %v2202, %v4071
    %v4222 = vadd.f32 %v2203, %v4076
    %v4223 = vadd.f32 %v2204, %v4079
    %v4224 = vadd.f32 %v2205, %v4084
    %v4225 = vadd.f32 %v2206, %v4087
    %v4226 = vadd.f32 %v2207, %v4092
    %v4227 = vadd.f32 %v2208, %v4095
    %v4228 = vadd.f32 %v2209, %v4100
    %v4229 = vadd.f32 %v2210, %v4103
    %v4230 = vadd.f32 %v2211, %v4108
    %v4231 = vadd.f32 %v2212, %v4111
    %v4232 = vadd.f32 %v2213, %v4116
    %v4233 = vadd.f32 %v2214, %v4119
    %v4234 = vadd.f32 %v2215, %v4124
    %v4235 = vadd.f32 %v2216, %v4127
    %v4236 = vadd.f32 %v2217, %v4132
    %v4237 = vadd.f32 %v2218, %v4135
    %v4238 = vadd.f32 %v2219, %v4140
    %v4239 = vadd.f32 %v2220, %v4143
    %v4240 = vadd.f32 %v2221, %v4148
    %v4241 = vadd.f32 %v2222, %v4151
    %v4242 = vadd.f32 %v2223, %v4156
    %v4243 = vadd.f32 %v2224, %v4159
    %v4244 = vadd.f32 %v2225, %v4164
    %v4245 = vadd.f32 %v2226, %v4167
    %v4246 = vadd.f32 %v2227, %v4172
    %v4247 = vadd.f32 %v2228, %v4175
    %v4248 = vadd.f32 %v2229, %v4180
    %v4249 = vadd.f32 %v2230, %v4183
    %v4251 = vlaneseq
    %v4252 = vshrl.u32 %v4251, 7
    %v4253 = vsub.s32 0, %v4252
    %v4254 = vrot.slane %v2288, %v4253
    %v4256 = vadd.f32 %v4186, %v4254
    %v4257 = vadd.f32 %v4187, %v4254
    %v4258 = vadd.f32 %v4188, %v4254
    %v4259 = vadd.f32 %v4189, %v4254
    %v4260 = vadd.f32 %v4190, %v4254
    %v4261 = vadd.f32 %v4191, %v4254
    %v4262 = vadd.f32 %v4192, %v4254
    %v4263 = vadd.f32 %v4193, %v4254
    %v4264 = vadd.f32 %v4194, %v4254
    %v4265 = vadd.f32 %v4195, %v4254
    %v4266 = vadd.f32 %v4196, %v4254
    %v4267 = vadd.f32 %v4197, %v4254
    %v4268 = vadd.f32 %v4198, %v4254
    %v4269 = vadd.f32 %v4199, %v4254
    %v4270 = vadd.f32 %v4200, %v4254
    %v4271 = vadd.f32 %v4201, %v4254
    %v4272 = vadd.f32 %v4202, %v4254
    %v4273 = vadd.f32 %v4203, %v4254
    %v4274 = vadd.f32 %v4204, %v4254
    %v4275 = vadd.f32 %v4205, %v4254
    %v4276 = vadd.f32 %v4206, %v4254
    %v4277 = vadd.f32 %v4207, %v4254
    %v4278 = vadd.f32 %v4208, %v4254
    %v4279 = vadd.f32 %v4209, %v4254
    %v4280 = vadd.f32 %v4210, %v4254
    %v4281 = vadd.f32 %v4211, %v4254
    %v4282 = vadd.f32 %v4212, %v4254
    %v4283 = vadd.f32 %v4213, %v4254
    %v4284 = vadd.f32 %v4214, %v4254
    %v4285 = vadd.f32 %v4215, %v4254
    %v4286 = vadd.f32 %v4216, %v4254
    %v4287 = vadd.f32 %v4217, %v4254
    %v4288 = vadd.f32 %v4218, %v4254
    %v4289 = vadd.f32 %v4219, %v4254
    %v4290 = vadd.f32 %v4220, %v4254
    %v4291 = vadd.f32 %v4221, %v4254
    %v4292 = vadd.f32 %v4222, %v4254
    %v4293 = vadd.f32 %v4223, %v4254
    %v4294 = vadd.f32 %v4224, %v4254
    %v4295 = vadd.f32 %v4225, %v4254
    %v4296 = vadd.f32 %v4226, %v4254
    %v4297 = vadd.f32 %v4227, %v4254
    %v4298 = vadd.f32 %v4228, %v4254
    %v4299 = vadd.f32 %v4229, %v4254
    %v4300 = vadd.f32 %v4230, %v4254
    %v4301 = vadd.f32 %v4231, %v4254
    %v4302 = vadd.f32 %v4232, %v4254
    %v4303 = vadd.f32 %v4233, %v4254
    %v4304 = vadd.f32 %v4234, %v4254
    %v4305 = vadd.f32 %v4235, %v4254
    %v4306 = vadd.f32 %v4236, %v4254
    %v4307 = vadd.f32 %v4237, %v4254
    %v4308 = vadd.f32 %v4238, %v4254
    %v4309 = vadd.f32 %v4239, %v4254
    %v4310 = vadd.f32 %v4240, %v4254
    %v4311 = vadd.f32 %v4241, %v4254
    %v4312 = vadd.f32 %v4242, %v4254
    %v4313 = vadd.f32 %v4243, %v4254
    %v4314 = vadd.f32 %v4244, %v4254
    %v4315 = vadd.f32 %v4245, %v4254
    %v4316 = vadd.f32 %v4246, %v4254
    %v4317 = vadd.f32 %v4247, %v4254
    %v4318 = vadd.f32 %v4248, %v4254
    %v4319 = vadd.f32 %v4249, %v4254
    %4320 = vst [vmem:[#allocation10] sm:$0xff] %v4256
    %4321 = vst [vmem:[#allocation10 + $0x8] sm:$0xff] %v4257
    %4322 = vst [vmem:[#allocation10 + $0x10] sm:$0xff] %v4258
    %4323 = vst [vmem:[#allocation10 + $0x18] sm:$0xff] %v4259
    %4324 = vst [vmem:[#allocation10 + $0x20] sm:$0xff] %v4260
    %4325 = vst [vmem:[#allocation10 + $0x28] sm:$0xff] %v4261
    %4326 = vst [vmem:[#allocation10 + $0x30] sm:$0xff] %v4262
    %4327 = vst [vmem:[#allocation10 + $0x38] sm:$0xff] %v4263
    %4328 = vst [vmem:[#allocation10 + $0x40] sm:$0xff] %v4264
    %4329 = vst [vmem:[#allocation10 + $0x48] sm:$0xff] %v4265
    %4330 = vst [vmem:[#allocation10 + $0x50] sm:$0xff] %v4266
    %4331 = vst [vmem:[#allocation10 + $0x58] sm:$0xff] %v4267
    %4332 = vst [vmem:[#allocation10 + $0x60] sm:$0xff] %v4268
    %4333 = vst [vmem:[#allocation10 + $0x68] sm:$0xff] %v4269
    %4334 = vst [vmem:[#allocation10 + $0x70] sm:$0xff] %v4270
    %4335 = vst [vmem:[#allocation10 + $0x78] sm:$0xff] %v4271
    %4336 = vst [vmem:[#allocation10 + $0x80] sm:$0xff] %v4272
    %4337 = vst [vmem:[#allocation10 + $0x88] sm:$0xff] %v4273
    %4338 = vst [vmem:[#allocation10 + $0x90] sm:$0xff] %v4274
    %4339 = vst [vmem:[#allocation10 + $0x98] sm:$0xff] %v4275
    %4340 = vst [vmem:[#allocation10 + $0xa0] sm:$0xff] %v4276
    %4341 = vst [vmem:[#allocation10 + $0xa8] sm:$0xff] %v4277
    %4342 = vst [vmem:[#allocation10 + $0xb0] sm:$0xff] %v4278
    %4343 = vst [vmem:[#allocation10 + $0xb8] sm:$0xff] %v4279
    %4344 = vst [vmem:[#allocation10 + $0xc0] sm:$0xff] %v4280
    %4345 = vst [vmem:[#allocation10 + $0xc8] sm:$0xff] %v4281
    %4346 = vst [vmem:[#allocation10 + $0xd0] sm:$0xff] %v4282
    %4347 = vst [vmem:[#allocation10 + $0xd8] sm:$0xff] %v4283
    %4348 = vst [vmem:[#allocation10 + $0xe0] sm:$0xff] %v4284
    %4349 = vst [vmem:[#allocation10 + $0xe8] sm:$0xff] %v4285
    %4350 = vst [vmem:[#allocation10 + $0xf0] sm:$0xff] %v4286
    %4351 = vst [vmem:[#allocation10 + $0xf8] sm:$0xff] %v4287
    %4352 = vst [vmem:[#allocation10 + $0x100] sm:$0xff] %v4288
    %4353 = vst [vmem:[#allocation10 + $0x108] sm:$0xff] %v4289
    %4354 = vst [vmem:[#allocation10 + $0x110] sm:$0xff] %v4290
    %4355 = vst [vmem:[#allocation10 + $0x118] sm:$0xff] %v4291
    %4356 = vst [vmem:[#allocation10 + $0x120] sm:$0xff] %v4292
    %4357 = vst [vmem:[#allocation10 + $0x128] sm:$0xff] %v4293
    %4358 = vst [vmem:[#allocation10 + $0x130] sm:$0xff] %v4294
    %4359 = vst [vmem:[#allocation10 + $0x138] sm:$0xff] %v4295
    %4360 = vst [vmem:[#allocation10 + $0x140] sm:$0xff] %v4296
    %4361 = vst [vmem:[#allocation10 + $0x148] sm:$0xff] %v4297
    %4362 = vst [vmem:[#allocation10 + $0x150] sm:$0xff] %v4298
    %4363 = vst [vmem:[#allocation10 + $0x158] sm:$0xff] %v4299
    %4364 = vst [vmem:[#allocation10 + $0x160] sm:$0xff] %v4300
    %4365 = vst [vmem:[#allocation10 + $0x168] sm:$0xff] %v4301
    %4366 = vst [vmem:[#allocation10 + $0x170] sm:$0xff] %v4302
    %4367 = vst [vmem:[#allocation10 + $0x178] sm:$0xff] %v4303
    %4368 = vst [vmem:[#allocation10 + $0x180] sm:$0xff] %v4304
    %4369 = vst [vmem:[#allocation10 + $0x188] sm:$0xff] %v4305
    %4370 = vst [vmem:[#allocation10 + $0x190] sm:$0xff] %v4306
    %4371 = vst [vmem:[#allocation10 + $0x198] sm:$0xff] %v4307
    %4372 = vst [vmem:[#allocation10 + $0x1a0] sm:$0xff] %v4308
    %4373 = vst [vmem:[#allocation10 + $0x1a8] sm:$0xff] %v4309
    %4374 = vst [vmem:[#allocation10 + $0x1b0] sm:$0xff] %v4310
    %4375 = vst [vmem:[#allocation10 + $0x1b8] sm:$0xff] %v4311
    %4376 = vst [vmem:[#allocation10 + $0x1c0] sm:$0xff] %v4312
    %4377 = vst [vmem:[#allocation10 + $0x1c8] sm:$0xff] %v4313
    %4378 = vst [vmem:[#allocation10 + $0x1d0] sm:$0xff] %v4314
    %4379 = vst [vmem:[#allocation10 + $0x1d8] sm:$0xff] %v4315
    %4380 = vst [vmem:[#allocation10 + $0x1e0] sm:$0xff] %v4316
    %4381 = vst [vmem:[#allocation10 + $0x1e8] sm:$0xff] %v4317
    %4382 = vst [vmem:[#allocation10 + $0x1f0] sm:$0xff] %v4318
    %4383 = vst [vmem:[#allocation10 + $0x1f8] sm:$0xff] %v4319
    // Predicated region
    $region46: #{tpu_custom_call.1} parent=1 // pred_check
      _
    $region47: #{tpu_custom_call.1} parent=1 // pred_check_branch
      %4385 = sbr.rel (0) target = $region49
    $region48: #{tpu_custom_call.1} parent=1 // pred_region
      %s4387 = ssub.s32 8192, 8192
      %4388 = vsyncadd [#allocation4], %s4387
      %s4389 = sshll.u32 [#allocation10], 4
      %s4390 = int_to_ptr.vmem [resolvable:$true] %s4389
      %4395 = dma.vmem_to_hbm [thread:$0]  %s4390, 8192, %s7, [#allocation4], 128, 128, 8
    $region49: #{tpu_custom_call.1} parent=1 // pred_fallthru
      _
    // Predicated region
    $region50: #{tpu_custom_call.1} parent=1 // pred_check
      _
    $region51: #{tpu_custom_call.1} parent=1 // pred_check_branch
      %4397 = sbr.rel (0) target = $region53
    $region52: #{tpu_custom_call.1} parent=1 // pred_region
      %4398 = dma.done [#allocation4], 8192
    $region53: #{tpu_custom_call.1} parent=1 // pred_fallthru
      _
    %4399 = vsyncpa [#allocation3], 1
    %4400 = vsyncpa [#allocation6], 1
    %4401 = vsyncpa [#allocation9], 1
    %4402 = vsyncpa [#allocation4], 1

</llo_original>
